<compile_context>
chip_gen: v7x
topology: tpu7x:2x2x1
jax: 0.10.0
libtpu: 0.0.40
codegen_flags: <defaults>
</compile_context>

<pallas_src>
import jax
import jax.numpy as jnp
from jax import lax
from jax.experimental import pallas as pl
from jax.experimental.pallas import tpu as pltpu

BN_EPS = 1e-5


def _vmem_limit_bytes():
    # 32 MiB is ample for the row-tiled working sets below and safe on every
    # generation (v7x has 64 MiB physical VMEM).
    cap = 128 * 1024 * 1024
    try:
        info = pltpu.get_tpu_info()
        cap = getattr(info, "vmem_capacity_bytes", cap) or cap
    except Exception:
        pass
    return min(cap // 2, 32 * 1024 * 1024)


_VMEM_LIMIT = _vmem_limit_bytes()


def _cp(semantics):
    return pltpu.CompilerParams(dimension_semantics=semantics,
                                vmem_limit_bytes=_VMEM_LIMIT)


def _row_tile(m):
    """Largest row tile (largest-first: fewer grid steps, better HBM roofline)
    that divides m."""
    for t in (2048, 1024, 512, 256, 128, 64, 32, 16, 8):
        if m % t == 0:
            return t
    # Awkward (non-8-divisible) m: single block.  Fine for small shapes; pad M
    # upstream for large odd shapes.
    return m


def _h_tile(h):
    """Largest divisor of H that is <= 8 rows: bounds K2's per-step im2col
    working set and gives many grid steps for DMA/compute overlap."""
    for t in (8, 7, 6, 5, 4, 3, 2, 1):
        if h % t == 0:
            return t
    return 1


def _pad_lanes(c):
    """Pad a channel count below 128 up to 128 (lane-dense stores, filled MXU
    N dimension).  Counts >= 128 are left alone (full-dim blocks stay legal)."""
    return 128 if c < 128 else c


# ---------------------------------------------------------------------------
# Kernels
# ---------------------------------------------------------------------------

def conv1x1_stats_kernel(x_ref, w_ref, o_ref, stats_ref):
    """Row tile: 1x1 conv (channel matmul) + per-step partial sum/sumsq."""
    x = x_ref[...].astype(jnp.bfloat16)
    y = jnp.dot(x, w_ref[...], preferred_element_type=jnp.float32)
    o_ref[...] = y.astype(o_ref.dtype)                 # bf16 intermediate
    stats_ref[...] = jnp.concatenate(
        [jnp.sum(y, axis=0, keepdims=True),
         jnp.sum(y * y, axis=0, keepdims=True)], axis=0)


def bn_relu_conv3x3_stats_kernel(h_ref, top_ref, bot_ref, s_ref, t_ref, w_ref,
                                 o_ref, stats_ref):
    """Row tile of one image: folded BN + ReLU, then 3x3 conv (pad=1) as three
    accumulated K=3C im2col dots (one per dy).  dx shifts use pltpu.roll (XLU)
    + boundary masks.  Emits per-step partial sum/sumsq of the conv output."""
    th, w, c = h_ref.shape
    r = th * w
    j = pl.program_id(1)
    last_j = pl.num_programs(1) - 1

    s = s_ref[...]                                      # (1, c) folded BN scale
    t = t_ref[...]                                      # (1, c) folded BN bias

    def bn_relu(v):                                     # bf16 -> f32 BN + ReLU
        return jnp.maximum(v.astype(jnp.float32) * s + t, 0.0)

    hc = bn_relu(h_ref[...].reshape(r, c))              # (r, c)
    # Halo rows: index_map clamps at the image border; zero them there
    # (zero padding of the 3x3 conv).
    top = bn_relu(top_ref[...]) * (j > 0).astype(jnp.float32)
    bot = bn_relu(bot_ref[...]) * (j < last_j).astype(jnp.float32)
    hext = jnp.concatenate([top, hc, bot], axis=0)      # (r + 2w, c) f32

    # Column masks along W on the flattened row index (conv zero padding in x).
    col = lax.broadcasted_iota(jnp.int32, (r, 1), 0) % w
    has_left = (col != 0).astype(jnp.float32)           # x-1 exists
    has_right = (col != w - 1).astype(jnp.float32)      # x+1 exists

    acc = jnp.zeros((r, c), jnp.float32)
    for dy in range(3):                                 # unrolled, 3 iterations
        f = hext[dy * w:dy * w + r]                     # rows for this dy tap
        # Value at x-1 / x+1 via XLU rotate; the wrap-around only lands on
        # positions that are masked to zero anyway.
        fl = pltpu.roll(f, 1, 0) * has_left
        fr = pltpu.roll(f, r - 1, 0) * has_right
        xcat = jnp.concatenate([fl.astype(jnp.bfloat16),
                                f.astype(jnp.bfloat16),
                                fr.astype(jnp.bfloat16)], axis=-1)  # (r, 3c)
        acc += jnp.dot(xcat, w_ref[dy], preferred_element_type=jnp.float32)

    o_ref[...] = acc.reshape(th, w, c).astype(o_ref.dtype)   # bf16 intermediate
    stats_ref[...] = jnp.concatenate(
        [jnp.sum(acc, axis=0, keepdims=True),
         jnp.sum(acc * acc, axis=0, keepdims=True)], axis=0)


def bn_relu_conv1x1_stats_kernel(h_ref, s_ref, t_ref, w_ref, o_ref, stats_ref):
    """Row tile: folded BN + ReLU then 1x1 conv + per-step partial stats."""
    h = jnp.maximum(h_ref[...].astype(jnp.float32) * s_ref[...] + t_ref[...],
                    0.0)
    y = jnp.dot(h.astype(jnp.bfloat16), w_ref[...],
                preferred_element_type=jnp.float32)
    o_ref[...] = y.astype(o_ref.dtype)                  # bf16 intermediate
    stats_ref[...] = jnp.concatenate(
        [jnp.sum(y, axis=0, keepdims=True),
         jnp.sum(y * y, axis=0, keepdims=True)], axis=0)


def bn_residual_relu_kernel(h_ref, x_ref, s_ref, t_ref, o_ref):
    """Row tile, lane-dense packed view: final BN + residual add + ReLU."""
    o_ref[...] = jnp.maximum(
        h_ref[...].astype(jnp.float32) * s_ref[...] + t_ref[...] + x_ref[...],
        0.0)


# ---------------------------------------------------------------------------
# Wrapper
# ---------------------------------------------------------------------------

def _fold_bn(partial_stats, gamma, beta, m):
    """partial_stats: (..., 2, C) per-grid-step (sum, sumsq).  Returns
    per-channel (scale, bias) so that train-mode BN(x) == x*scale + bias."""
    c = partial_stats.shape[-1]
    st = jnp.sum(partial_stats.reshape(-1, 2, c), axis=0)
    mean = st[0] / m
    var = jnp.maximum(st[1] / m - mean * mean, 0.0)     # biased batch variance
    scale = gamma * lax.rsqrt(var + BN_EPS)
    bias = beta - mean * scale
    return (scale.reshape(1, -1).astype(jnp.float32),
            bias.reshape(1, -1).astype(jnp.float32))


@jax.jit
def bottleneck_forward_nhwc(x, w1, w2, w3, g1, b1, g2, b2, g3, b3):
    """x: (N,H,W,Cin) f32; w1:(Cin,Cmid); w2:(3,3,Cmid,Cmid) HWIO;
    w3:(Cmid,Cout); gamma/beta 1-D per channel.  Returns (N,H,W,Cout) f32."""
    N, H, W, Cin = x.shape
    Cmid = w1.shape[1]
    Cout = w3.shape[1]
    assert Cin == Cout, "downsample=None requires inplanes == expansion*planes"
    M = N * H * W
    fM = float(M)

    # Lane-dense padding of the bottleneck (mid) channels.  Padded channels are
    # identically zero all the way through (gamma_pad=1, beta_pad=0 keeps them
    # zero after BN) and the padded w3 rows contribute nothing.
    Cp = _pad_lanes(Cmid)
    pad = Cp - Cmid
    w1p = jnp.pad(w1, ((0, 0), (0, pad))).astype(jnp.bfloat16)           # (Cin, Cp)
    w2p = jnp.pad(w2, ((0, 0), (0, 0), (0, pad), (0, pad)))              # (3,3,Cp,Cp)
    w2f = w2p.reshape(3, 3 * Cp, Cp).astype(jnp.bfloat16)                # [dy, dx*Cp+ci, co]
    w3p = jnp.pad(w3, ((0, pad), (0, 0))).astype(jnp.bfloat16)           # (Cp, Cout)
    g1p = jnp.pad(g1, (0, pad), constant_values=1.0)
    b1p = jnp.pad(b1, (0, pad))
    g2p = jnp.pad(g2, (0, pad), constant_values=1.0)
    b2p = jnp.pad(b2, (0, pad))

    x2d = x.reshape(M, Cin)
    tm = _row_tile(M)
    g1d = M // tm

    # --- K1: conv1 (1x1) + BN1 partial stats --------------------------------
    h1, st1 = pl.pallas_call(
        conv1x1_stats_kernel,
        grid=(g1d,),
        in_specs=[
            pl.BlockSpec((tm, Cin), lambda i: (i, 0)),
            pl.BlockSpec((Cin, Cp), lambda i: (0, 0)),
        ],
        out_specs=(
            pl.BlockSpec((tm, Cp), lambda i: (i, 0)),
            pl.BlockSpec((None, 2, Cp), lambda i: (i, 0, 0)),
        ),
        out_shape=(
            jax.ShapeDtypeStruct((M, Cp), jnp.bfloat16),
            jax.ShapeDtypeStruct((g1d, 2, Cp), jnp.float32),
        ),
        compiler_params=_cp(("parallel",)),
    )(x2d, w1p)
    s1, t1 = _fold_bn(st1, g1p, b1p, fM)

    # --- K2: BN1+ReLU -> conv2 (3x3, pad=1) + BN2 partial stats -------------
    th = _h_tile(H)
    hb = H // th
    h1_4d = h1.reshape(N, H, W, Cp)
    # (If needed on v6e with big row tiles, the center spec below could take
    #  pipeline_mode=pl.Buffered(3); with bf16 intermediates depth 2 is enough.)
    h2, st2 = pl.pallas_call(
        bn_relu_conv3x3_stats_kernel,
        grid=(N, hb),
        in_specs=[
            pl.BlockSpec((None, th, W, Cp), lambda n, j: (n, j, 0, 0)),
            # 1-row halos; index_map clamps at the border, kernel masks them.
            pl.BlockSpec((None, None, W, Cp),
                         lambda n, j: (n, jnp.maximum(j * th - 1, 0), 0, 0)),
            pl.BlockSpec((None, None, W, Cp),
                         lambda n, j: (n, jnp.minimum((j + 1) * th, H - 1), 0, 0)),
            pl.BlockSpec((1, Cp), lambda n, j: (0, 0)),
            pl.BlockSpec((1, Cp), lambda n, j: (0, 0)),
            pl.BlockSpec((3, 3 * Cp, Cp), lambda n, j: (0, 0, 0)),
        ],
        out_specs=(
            pl.BlockSpec((None, th, W, Cp), lambda n, j: (n, j, 0, 0)),
            pl.BlockSpec((None, None, 2, Cp), lambda n, j: (n, j, 0, 0)),
        ),
        out_shape=(
            jax.ShapeDtypeStruct((N, H, W, Cp), jnp.bfloat16),
            jax.ShapeDtypeStruct((N, hb, 2, Cp), jnp.float32),
        ),
        compiler_params=_cp(("parallel", "parallel")),
    )(h1_4d, h1_4d, h1_4d, s1, t1, w2f)
    s2, t2 = _fold_bn(st2, g2p, b2p, fM)

    # --- K3: BN2+ReLU -> conv3 (1x1) + BN3 partial stats --------------------
    h2_2d = h2.reshape(M, Cp)
    g3d = M // tm
    h3, st3 = pl.pallas_call(
        bn_relu_conv1x1_stats_kernel,
        grid=(g3d,),
        in_specs=[
            pl.BlockSpec((tm, Cp), lambda i: (i, 0)),
            pl.BlockSpec((1, Cp), lambda i: (0, 0)),
            pl.BlockSpec((1, Cp), lambda i: (0, 0)),
            pl.BlockSpec((Cp, Cout), lambda i: (0, 0)),
        ],
        out_specs=(
            pl.BlockSpec((tm, Cout), lambda i: (i, 0)),
            pl.BlockSpec((None, 2, Cout), lambda i: (i, 0, 0)),
        ),
        out_shape=(
            jax.ShapeDtypeStruct((M, Cout), jnp.bfloat16),
            jax.ShapeDtypeStruct((g3d, 2, Cout), jnp.float32),
        ),
        compiler_params=_cp(("parallel",)),
    )(h2_2d, s2, t2, w3p)
    s3, t3 = _fold_bn(st3, g3, b3, fM)

    # --- K4: BN3 + residual + ReLU on a row-packed lane-dense view ----------
    if Cout < 128 and 128 % Cout == 0 and M % (128 // Cout) == 0:
        pack = 128 // Cout               # pack consecutive rows -> 128 lanes
    else:
        pack = 1
    m4, c4 = M // pack, Cout * pack
    tm4 = _row_tile(m4)

    out2d = pl.pallas_call(
        bn_residual_relu_kernel,
        grid=(m4 // tm4,),
        in_specs=[
            pl.BlockSpec((tm4, c4), lambda i: (i, 0)),
            pl.BlockSpec((tm4, c4), lambda i: (i, 0)),
            pl.BlockSpec((1, c4), lambda i: (0, 0)),
            pl.BlockSpec((1, c4), lambda i: (0, 0)),
        ],
        out_specs=pl.BlockSpec((tm4, c4), lambda i: (i, 0)),
        out_shape=jax.ShapeDtypeStruct((m4, c4), jnp.float32),
        compiler_params=_cp(("parallel",)),
    )(h3.reshape(m4, c4), x2d.reshape(m4, c4),
      jnp.tile(s3, (1, pack)), jnp.tile(t3, (1, pack)))

    return out2d.reshape(N, H, W, Cout)


@jax.jit
def bottleneck_forward_nchw(x_nchw, w1, w2, w3, g1, b1, g2, b2, g3, b3):
    """Convenience wrapper for PyTorch-layout callers (prefer staying NHWC)."""
    x = jnp.transpose(x_nchw, (0, 2, 3, 1))
    out = bottleneck_forward_nhwc(x, w1, w2, w3, g1, b1, g2, b2, g3, b3)
    return jnp.transpose(out, (0, 3, 1, 2))


# ---------------------------------------------------------------------------
# Pure-JAX reference (same bf16 rounding points as the kernels)
# ---------------------------------------------------------------------------

def reference_forward_nhwc(x, w1, w2, w3, g1, b1, g2, b2, g3, b3):
    N, H, W, Cin = x.shape
    Cmid = w1.shape[1]
    Cout = w3.shape[1]
    M = N * H * W
    bf16 = jnp.bfloat16

    def bn(y, g, b, relu):
        # Stats from f32, normalization applied to the bf16-stored activations
        # (matches the kernel pipeline).
        mean = jnp.mean(y, axis=(0, 1, 2), keepdims=True)
        var = jnp.mean(jnp.square(y - mean), axis=(0, 1, 2), keepdims=True)
        yq = y.astype(bf16).astype(jnp.float32)
        o = (yq - mean) * lax.rsqrt(var + BN_EPS) * g.reshape(1, 1, 1, -1) \
            + b.reshape(1, 1, 1, -1)
        return jnp.maximum(o, 0.0) if relu else o

    h = jnp.dot(x.reshape(M, Cin).astype(bf16), w1.astype(bf16),
                preferred_element_type=jnp.float32).reshape(N, H, W, Cmid)
    h = bn(h, g1, b1, relu=True)
    h = lax.conv_general_dilated(h.astype(bf16), w2.astype(bf16), (1, 1), 'SAME',
                                 dimension_numbers=('NHWC', 'HWIO', 'NHWC'),
                                 preferred_element_type=jnp.float32)
    h = bn(h, g2, b2, relu=True)
    h = jnp.dot(h.reshape(M, Cmid).astype(bf16), w3.astype(bf16),
                preferred_element_type=jnp.float32).reshape(N, H, W, Cout)
    h = bn(h, g3, b3, relu=False)
    return jnp.maximum(h + x, 0.0)


# ---------------------------------------------------------------------------
# Demo / correctness check
# ---------------------------------------------------------------------------

if __name__ == "__main__":
    # Bottleneck(inplanes=32, planes=8): expansion=4 -> output channels = 32,
    # so the identity residual is well-defined (downsample=None, stride=1).
    N, H, W = 2, 16, 16
    planes = 8
    inplanes = 4 * planes      # 32
    outplanes = 4 * planes     # 32

    key = jax.random.PRNGKey(0)
    kx, k1, k2, k3, kg = jax.random.split(key, 5)

    x = jax.random.normal(kx, (N, H, W, inplanes), jnp.float32)   # NHWC

    # conv weights: 1x1 convs as (Cin, Cout) matrices, 3x3 conv as HWIO.
    w1 = jax.random.normal(k1, (inplanes, planes), jnp.float32) * 0.1
    w2 = jax.random.normal(k2, (3, 3, planes, planes), jnp.float32) * 0.1
    w3 = jax.random.normal(k3, (planes, outplanes), jnp.float32) * 0.1

    # BatchNorm affine params (gamma != 1, beta != 0 to exercise the path).
    kg1, kg2, kg3 = jax.random.split(kg, 3)
    g1 = 1.0 + 0.1 * jax.random.normal(kg1, (planes,), jnp.float32)
    b1 = 0.05 * jnp.arange(planes, dtype=jnp.float32)
    g2 = 1.0 + 0.1 * jax.random.normal(kg2, (planes,), jnp.float32)
    b2 = -0.03 * jnp.arange(planes, dtype=jnp.float32)
    g3 = 1.0 + 0.1 * jax.random.normal(kg3, (outplanes,), jnp.float32)
    b3 = 0.02 * jnp.arange(outplanes, dtype=jnp.float32)

    out = bottleneck_forward_nhwc(x, w1, w2, w3, g1, b1, g2, b2, g3, b3)
    out = jax.block_until_ready(out)

    ref = reference_forward_nhwc(x, w1, w2, w3, g1, b1, g2, b2, g3, b3)
    assert out.shape == (N, H, W, outplanes)
    max_err = float(jnp.max(jnp.abs(out - ref)))
    assert max_err < 1e-2, f"max abs diff {max_err}"

    print("KERNEL_OK")
</pallas_src>

<mosaic_0001>
module attributes {stable_mosaic.version = 11 : i64} {
  func.func @conv1x1_stats_kernel(%arg0: i32, %arg1: memref<512x32xf32, #tpu.memory_space<vmem>>, %arg2: memref<32x128xbf16, #tpu.memory_space<vmem>>, %arg3: memref<512x128xbf16, #tpu.memory_space<vmem>>, %arg4: memref<1x2x128xf32, #tpu.memory_space<vmem>>) attributes {dimension_semantics = [#tpu.dimension_semantics<parallel>], iteration_bounds = array<i64: 1>, scalar_prefetch = 0 : i64, scratch_operands = 0 : i64, tpu.core_type = #tpu.core_type<tc>, window_params = [{transform_indices = @transform_0, window_bounds = array<i64: 512, 32>}, {pipeline_mode = #tpu.pipeline_mode<synchronous>, transform_indices = @transform_1, window_bounds = array<i64: 32, 128>}, {transform_indices = @transform_2, window_bounds = array<i64: 512, 128>}, {transform_indices = @transform_3, window_bounds = array<i64: 1, 2, 128>}]} {
    %c0 = arith.constant 0 : index
    %c0_0 = arith.constant 0 : index
    %0 = vector.load %arg1[%c0, %c0_0] : memref<512x32xf32, #tpu.memory_space<vmem>>, vector<512x32xf32>
    %1 = arith.truncf %0 : vector<512x32xf32> to vector<512x32xbf16>
    %c0_1 = arith.constant 0 : index
    %c0_2 = arith.constant 0 : index
    %2 = vector.load %arg2[%c0_1, %c0_2] : memref<32x128xbf16, #tpu.memory_space<vmem>>, vector<32x128xbf16>
    %cst = arith.constant dense<0.000000e+00> : vector<512x128xf32>
    %3 = tpu.matmul %1, %2, %cst {dimension_numbers = #tpu.dot_dimension_numbers<[1], [0], [0], [1], [0, 0, 1, 1], [], []>} : vector<512x32xbf16>, vector<32x128xbf16>, vector<512x128xf32> -> vector<512x128xf32>
    %4 = arith.truncf %3 : vector<512x128xf32> to vector<512x128xbf16>
    %c0_3 = arith.constant 0 : index
    %c0_4 = arith.constant 0 : index
    %5 = vector.load %arg3[%c0_3, %c0_4] : memref<512x128xbf16, #tpu.memory_space<vmem>>, vector<512x128xbf16>
    tpu.vector_store %arg3[%c0_3, %c0_4], %4 {strides = array<i32>} : memref<512x128xbf16, #tpu.memory_space<vmem>>, vector<512x128xbf16>,
    %cst_5 = arith.constant dense<0.000000e+00> : vector<128xf32>
    %6 = vector.multi_reduction <add>, %3, %cst_5 [0] : vector<512x128xf32> to vector<128xf32>
    %7 = vector.shape_cast %6 : vector<128xf32> to vector<1x128xf32>
    %8 = arith.mulf %3, %3 : vector<512x128xf32>
    %cst_6 = arith.constant dense<0.000000e+00> : vector<128xf32>
    %9 = vector.multi_reduction <add>, %8, %cst_6 [0] : vector<512x128xf32> to vector<128xf32>
    %10 = vector.shape_cast %9 : vector<128xf32> to vector<1x128xf32>
    %11 = tpu.concatenate %7, %10 in 0 : vector<1x128xf32>, vector<1x128xf32> -> vector<2x128xf32>
    %c0_7 = arith.constant 0 : index
    %c0_8 = arith.constant 0 : index
    %c0_9 = arith.constant 0 : index
    %12 = vector.load %arg4[%c0_7, %c0_8, %c0_9] : memref<1x2x128xf32, #tpu.memory_space<vmem>>, vector<1x2x128xf32>
    %13 = vector.shape_cast %12 : vector<1x2x128xf32> to vector<2x128xf32>
    %14 = vector.shape_cast %11 : vector<2x128xf32> to vector<1x2x128xf32>
    tpu.vector_store %arg4[%c0_7, %c0_8, %c0_9], %14 {strides = array<i32>} : memref<1x2x128xf32, #tpu.memory_space<vmem>>, vector<1x2x128xf32>,
    return
  }
  func.func @transform_0(%arg0: i32) -> (i32, i32) {
    %c0_i32 = arith.constant 0 : i32
    %c0_i32_0 = arith.constant 0 : i32
    return %arg0, %c0_i32 : i32, i32
  }
  func.func @transform_1(%arg0: i32) -> (i32, i32) {
    %c0_i32 = arith.constant 0 : i32
    %c0_i32_0 = arith.constant 0 : i32
    %c0_i32_1 = arith.constant 0 : i32
    return %c0_i32, %c0_i32_0 : i32, i32
  }
  func.func @transform_2(%arg0: i32) -> (i32, i32) {
    %c0_i32 = arith.constant 0 : i32
    %c0_i32_0 = arith.constant 0 : i32
    return %arg0, %c0_i32 : i32, i32
  }
  func.func @transform_3(%arg0: i32) -> (i32, i32, i32) {
    %c0_i32 = arith.constant 0 : i32
    %c0_i32_0 = arith.constant 0 : i32
    %c0_i32_1 = arith.constant 0 : i32
    return %arg0, %c0_i32, %c0_i32_0 : i32, i32, i32
  }
}

module attributes {stable_mosaic.version = 11 : i64} {
  func.func @bn_relu_conv3x3_stats_kernel(%arg0: i32, %arg1: i32, %arg2: memref<1x8x16x128xbf16, #tpu.memory_space<vmem>>, %arg3: memref<1x1x16x128xbf16, #tpu.memory_space<vmem>>, %arg4: memref<1x1x16x128xbf16, #tpu.memory_space<vmem>>, %arg5: memref<1x128xf32, #tpu.memory_space<vmem>>, %arg6: memref<1x128xf32, #tpu.memory_space<vmem>>, %arg7: memref<3x384x128xbf16, #tpu.memory_space<vmem>>, %arg8: memref<1x8x16x128xbf16, #tpu.memory_space<vmem>>, %arg9: memref<1x1x2x128xf32, #tpu.memory_space<vmem>>) attributes {dimension_semantics = [#tpu.dimension_semantics<parallel>, #tpu.dimension_semantics<parallel>], iteration_bounds = array<i64: 2, 2>, scalar_prefetch = 0 : i64, scratch_operands = 0 : i64, tpu.core_type = #tpu.core_type<tc>, window_params = [{transform_indices = @transform_0, window_bounds = array<i64: 1, 8, 16, 128>}, {transform_indices = @transform_1, window_bounds = array<i64: 1, 1, 16, 128>}, {transform_indices = @transform_2, window_bounds = array<i64: 1, 1, 16, 128>}, {pipeline_mode = #tpu.pipeline_mode<synchronous>, transform_indices = @transform_3, window_bounds = array<i64: 1, 128>}, {pipeline_mode = #tpu.pipeline_mode<synchronous>, transform_indices = @transform_4, window_bounds = array<i64: 1, 128>}, {pipeline_mode = #tpu.pipeline_mode<synchronous>, transform_indices = @transform_5, window_bounds = array<i64: 3, 384, 128>}, {transform_indices = @transform_6, window_bounds = array<i64: 1, 8, 16, 128>}, {transform_indices = @transform_7, window_bounds = array<i64: 1, 1, 2, 128>}]} {
    %c0 = arith.constant 0 : index
    %c0_0 = arith.constant 0 : index
    %0 = vector.load %arg5[%c0, %c0_0] : memref<1x128xf32, #tpu.memory_space<vmem>>, vector<1x128xf32>
    %c0_1 = arith.constant 0 : index
    %c0_2 = arith.constant 0 : index
    %1 = vector.load %arg6[%c0_1, %c0_2] : memref<1x128xf32, #tpu.memory_space<vmem>>, vector<1x128xf32>
    %c0_3 = arith.constant 0 : index
    %c0_4 = arith.constant 0 : index
    %c0_5 = arith.constant 0 : index
    %c0_6 = arith.constant 0 : index
    %2 = vector.load %arg2[%c0_3, %c0_4, %c0_5, %c0_6] : memref<1x8x16x128xbf16, #tpu.memory_space<vmem>>, vector<1x8x16x128xbf16>
    %3 = vector.shape_cast %2 : vector<1x8x16x128xbf16> to vector<8x16x128xbf16>
    %4 = vector.shape_cast %3 : vector<8x16x128xbf16> to vector<128x128xbf16>
    %5 = arith.extf %4 : vector<128x128xbf16> to vector<128x128xf32>
    %6 = vector.broadcast %0 : vector<1x128xf32> to vector<128x128xf32>
    %7 = arith.mulf %5, %6 : vector<128x128xf32>
    %8 = vector.broadcast %1 : vector<1x128xf32> to vector<128x128xf32>
    %9 = arith.addf %7, %8 : vector<128x128xf32>
    %cst = arith.constant 0.000000e+00 : f32
    %10 = vector.broadcast %cst : f32 to vector<128x128xf32>
    %11 = arith.maximumf %9, %10 : vector<128x128xf32>
    %c0_7 = arith.constant 0 : index
    %c0_8 = arith.constant 0 : index
    %c0_9 = arith.constant 0 : index
    %c0_10 = arith.constant 0 : index
    %12 = vector.load %arg3[%c0_7, %c0_8, %c0_9, %c0_10] : memref<1x1x16x128xbf16, #tpu.memory_space<vmem>>, vector<1x1x16x128xbf16>
    %13 = vector.shape_cast %12 : vector<1x1x16x128xbf16> to vector<16x128xbf16>
    %14 = arith.extf %13 : vector<16x128xbf16> to vector<16x128xf32>
    %15 = vector.broadcast %0 : vector<1x128xf32> to vector<16x128xf32>
    %16 = arith.mulf %14, %15 : vector<16x128xf32>
    %17 = vector.broadcast %1 : vector<1x128xf32> to vector<16x128xf32>
    %18 = arith.addf %16, %17 : vector<16x128xf32>
    %cst_11 = arith.constant 0.000000e+00 : f32
    %19 = vector.broadcast %cst_11 : f32 to vector<16x128xf32>
    %20 = arith.maximumf %18, %19 : vector<16x128xf32>
    %c0_i32 = arith.constant 0 : i32
    %21 = arith.cmpi sgt, %arg1, %c0_i32 : i32
    %22 = arith.extui %21 : i1 to i32
    %23 = arith.sitofp %22 : i32 to f32
    %24 = vector.broadcast %23 : f32 to vector<16x128xf32>
    %25 = arith.mulf %20, %24 : vector<16x128xf32>
    %c0_12 = arith.constant 0 : index
    %c0_13 = arith.constant 0 : index
    %c0_14 = arith.constant 0 : index
    %c0_15 = arith.constant 0 : index
    %26 = vector.load %arg4[%c0_12, %c0_13, %c0_14, %c0_15] : memref<1x1x16x128xbf16, #tpu.memory_space<vmem>>, vector<1x1x16x128xbf16>
    %27 = vector.shape_cast %26 : vector<1x1x16x128xbf16> to vector<16x128xbf16>
    %28 = arith.extf %27 : vector<16x128xbf16> to vector<16x128xf32>
    %29 = vector.broadcast %0 : vector<1x128xf32> to vector<16x128xf32>
    %30 = arith.mulf %28, %29 : vector<16x128xf32>
    %31 = vector.broadcast %1 : vector<1x128xf32> to vector<16x128xf32>
    %32 = arith.addf %30, %31 : vector<16x128xf32>
    %cst_16 = arith.constant 0.000000e+00 : f32
    %33 = vector.broadcast %cst_16 : f32 to vector<16x128xf32>
    %34 = arith.maximumf %32, %33 : vector<16x128xf32>
    %c1_i32 = arith.constant 1 : i32
    %35 = arith.cmpi slt, %arg1, %c1_i32 : i32
    %36 = arith.extui %35 : i1 to i32
    %37 = arith.sitofp %36 : i32 to f32
    %38 = vector.broadcast %37 : f32 to vector<16x128xf32>
    %39 = arith.mulf %34, %38 : vector<16x128xf32>
    %40 = tpu.concatenate %25, %11, %39 in 0 : vector<16x128xf32>, vector<128x128xf32>, vector<16x128xf32> -> vector<160x128xf32>
    %41 = tpu.iota {dimensions = array<i32: 0>} : vector<128x1xi32>
    %c16_i32 = arith.constant 16 : i32
    %c0_i32_17 = arith.constant 0 : i32
    %42 = arith.cmpi eq, %c16_i32, %c0_i32_17 : i32
    %c1_i32_18 = arith.constant 1 : i32
    %43 = arith.select %42, %c1_i32_18, %c16_i32 : i32
    %44 = vector.broadcast %43 : i32 to vector<128x1xi32>
    %45 = arith.remsi %41, %44 : vector<128x1xi32>
    %c0_i32_19 = arith.constant 0 : i32
    %46 = vector.broadcast %c0_i32_19 : i32 to vector<128x1xi32>
    %47 = arith.cmpi ne, %45, %46 : vector<128x1xi32>
    %c0_i32_20 = arith.constant 0 : i32
    %48 = vector.broadcast %c0_i32_20 : i32 to vector<128x1xi32>
    %49 = arith.cmpi slt, %45, %48 : vector<128x1xi32>
    %c0_i32_21 = arith.constant 0 : i32
    %50 = arith.cmpi slt, %43, %c0_i32_21 : i32
    %51 = vector.broadcast %50 : i1 to vector<128x1xi1>
    %52 = vector.broadcast %51 : vector<128x1xi1> to vector<128x1xi1>
    %53 = arith.xori %49, %52 : vector<128x1xi1>
    %54 = arith.andi %53, %47 : vector<128x1xi1>
    %55 = vector.broadcast %43 : i32 to vector<128x1xi32>
    %56 = arith.addi %45, %55 : vector<128x1xi32>
    %57 = arith.select %54, %56, %45 : vector<128x1xi1>, vector<128x1xi32>
    %c0_i32_22 = arith.constant 0 : i32
    %58 = vector.broadcast %c0_i32_22 : i32 to vector<128x1xi32>
    %59 = arith.cmpi ne, %57, %58 : vector<128x1xi32>
    %60 = arith.extui %59 : vector<128x1xi1> to vector<128x1xi32>
    %61 = arith.sitofp %60 : vector<128x1xi32> to vector<128x1xf32>
    %c15_i32 = arith.constant 15 : i32
    %62 = vector.broadcast %c15_i32 : i32 to vector<128x1xi32>
    %63 = arith.cmpi ne, %57, %62 : vector<128x1xi32>
    %64 = arith.extui %63 : vector<128x1xi1> to vector<128x1xi32>
    %65 = arith.sitofp %64 : vector<128x1xi32> to vector<128x1xf32>
    %cst_23 = arith.constant 0.000000e+00 : f32
    %66 = vector.broadcast %cst_23 : f32 to vector<128x128xf32>
    %67 = vector.extract_strided_slice %40 {offsets = [0, 0], sizes = [128, 128], strides = [1, 1]} : vector<160x128xf32> to vector<128x128xf32>
    %c1_i32_24 = arith.constant 1 : i32
    %68 = tpu.dynamic_rotate %67 by %c1_i32_24 dim 0 : vector<128x128xf32>, i32 -> vector<128x128xf32>
    %69 = vector.broadcast %61 : vector<128x1xf32> to vector<128x128xf32>
    %70 = arith.mulf %68, %69 : vector<128x128xf32>
    %c127_i32 = arith.constant 127 : i32
    %71 = tpu.dynamic_rotate %67 by %c127_i32 dim 0 : vector<128x128xf32>, i32 -> vector<128x128xf32>
    %72 = vector.broadcast %65 : vector<128x1xf32> to vector<128x128xf32>
    %73 = arith.mulf %71, %72 : vector<128x128xf32>
    %74 = arith.truncf %70 : vector<128x128xf32> to vector<128x128xbf16>
    %75 = arith.truncf %67 : vector<128x128xf32> to vector<128x128xbf16>
    %76 = arith.truncf %73 : vector<128x128xf32> to vector<128x128xbf16>
    %77 = tpu.concatenate %74, %75, %76 in 1 : vector<128x128xbf16>, vector<128x128xbf16>, vector<128x128xbf16> -> vector<128x384xbf16>
    %c0_25 = arith.constant 0 : index
    %c0_26 = arith.constant 0 : index
    %c0_27 = arith.constant 0 : index
    %78 = vector.load %arg7[%c0_25, %c0_26, %c0_27] : memref<3x384x128xbf16, #tpu.memory_space<vmem>>, vector<1x384x128xbf16>
    %79 = vector.shape_cast %78 : vector<1x384x128xbf16> to vector<384x128xbf16>
    %cst_28 = arith.constant dense<0.000000e+00> : vector<128x128xf32>
    %80 = tpu.matmul %77, %79, %cst_28 {dimension_numbers = #tpu.dot_dimension_numbers<[1], [0], [0], [1], [0, 0, 1, 1], [], []>} : vector<128x384xbf16>, vector<384x128xbf16>, vector<128x128xf32> -> vector<128x128xf32>
    %81 = arith.addf %66, %80 : vector<128x128xf32>
    %82 = vector.extract_strided_slice %40 {offsets = [16, 0], sizes = [128, 128], strides = [1, 1]} : vector<160x128xf32> to vector<128x128xf32>
    %c1_i32_29 = arith.constant 1 : i32
    %83 = tpu.dynamic_rotate %82 by %c1_i32_29 dim 0 : vector<128x128xf32>, i32 -> vector<128x128xf32>
    %84 = vector.broadcast %61 : vector<128x1xf32> to vector<128x128xf32>
    %85 = arith.mulf %83, %84 : vector<128x128xf32>
    %c127_i32_30 = arith.constant 127 : i32
    %86 = tpu.dynamic_rotate %82 by %c127_i32_30 dim 0 : vector<128x128xf32>, i32 -> vector<128x128xf32>
    %87 = vector.broadcast %65 : vector<128x1xf32> to vector<128x128xf32>
    %88 = arith.mulf %86, %87 : vector<128x128xf32>
    %89 = arith.truncf %85 : vector<128x128xf32> to vector<128x128xbf16>
    %90 = arith.truncf %82 : vector<128x128xf32> to vector<128x128xbf16>
    %91 = arith.truncf %88 : vector<128x128xf32> to vector<128x128xbf16>
    %92 = tpu.concatenate %89, %90, %91 in 1 : vector<128x128xbf16>, vector<128x128xbf16>, vector<128x128xbf16> -> vector<128x384xbf16>
    %c1 = arith.constant 1 : index
    %c0_31 = arith.constant 0 : index
    %c0_32 = arith.constant 0 : index
    %93 = vector.load %arg7[%c1, %c0_31, %c0_32] : memref<3x384x128xbf16, #tpu.memory_space<vmem>>, vector<1x384x128xbf16>
    %94 = vector.shape_cast %93 : vector<1x384x128xbf16> to vector<384x128xbf16>
    %cst_33 = arith.constant dense<0.000000e+00> : vector<128x128xf32>
    %95 = tpu.matmul %92, %94, %cst_33 {dimension_numbers = #tpu.dot_dimension_numbers<[1], [0], [0], [1], [0, 0, 1, 1], [], []>} : vector<128x384xbf16>, vector<384x128xbf16>, vector<128x128xf32> -> vector<128x128xf32>
    %96 = arith.addf %81, %95 : vector<128x128xf32>
    %97 = vector.extract_strided_slice %40 {offsets = [32, 0], sizes = [128, 128], strides = [1, 1]} : vector<160x128xf32> to vector<128x128xf32>
    %c1_i32_34 = arith.constant 1 : i32
    %98 = tpu.dynamic_rotate %97 by %c1_i32_34 dim 0 : vector<128x128xf32>, i32 -> vector<128x128xf32>
    %99 = vector.broadcast %61 : vector<128x1xf32> to vector<128x128xf32>
    %100 = arith.mulf %98, %99 : vector<128x128xf32>
    %c127_i32_35 = arith.constant 127 : i32
    %101 = tpu.dynamic_rotate %97 by %c127_i32_35 dim 0 : vector<128x128xf32>, i32 -> vector<128x128xf32>
    %102 = vector.broadcast %65 : vector<128x1xf32> to vector<128x128xf32>
    %103 = arith.mulf %101, %102 : vector<128x128xf32>
    %104 = arith.truncf %100 : vector<128x128xf32> to vector<128x128xbf16>
    %105 = arith.truncf %97 : vector<128x128xf32> to vector<128x128xbf16>
    %106 = arith.truncf %103 : vector<128x128xf32> to vector<128x128xbf16>
    %107 = tpu.concatenate %104, %105, %106 in 1 : vector<128x128xbf16>, vector<128x128xbf16>, vector<128x128xbf16> -> vector<128x384xbf16>
    %c2 = arith.constant 2 : index
    %c0_36 = arith.constant 0 : index
    %c0_37 = arith.constant 0 : index
    %108 = vector.load %arg7[%c2, %c0_36, %c0_37] : memref<3x384x128xbf16, #tpu.memory_space<vmem>>, vector<1x384x128xbf16>
    %109 = vector.shape_cast %108 : vector<1x384x128xbf16> to vector<384x128xbf16>
    %cst_38 = arith.constant dense<0.000000e+00> : vector<128x128xf32>
    %110 = tpu.matmul %107, %109, %cst_38 {dimension_numbers = #tpu.dot_dimension_numbers<[1], [0], [0], [1], [0, 0, 1, 1], [], []>} : vector<128x384xbf16>, vector<384x128xbf16>, vector<128x128xf32> -> vector<128x128xf32>
    %111 = arith.addf %96, %110 : vector<128x128xf32>
    %112 = vector.shape_cast %111 : vector<128x128xf32> to vector<8x16x128xf32>
    %113 = arith.truncf %112 : vector<8x16x128xf32> to vector<8x16x128xbf16>
    %c0_39 = arith.constant 0 : index
    %c0_40 = arith.constant 0 : index
    %c0_41 = arith.constant 0 : index
    %c0_42 = arith.constant 0 : index
    %114 = vector.load %arg8[%c0_39, %c0_40, %c0_41, %c0_42] : memref<1x8x16x128xbf16, #tpu.memory_space<vmem>>, vector<1x8x16x128xbf16>
    %115 = vector.shape_cast %114 : vector<1x8x16x128xbf16> to vector<8x16x128xbf16>
    %116 = vector.shape_cast %113 : vector<8x16x128xbf16> to vector<1x8x16x128xbf16>
    tpu.vector_store %arg8[%c0_39, %c0_40, %c0_41, %c0_42], %116 {strides = array<i32>} : memref<1x8x16x128xbf16, #tpu.memory_space<vmem>>, vector<1x8x16x128xbf16>,
    %cst_43 = arith.constant dense<0.000000e+00> : vector<128xf32>
    %117 = vector.multi_reduction <add>, %111, %cst_43 [0] : vector<128x128xf32> to vector<128xf32>
    %118 = vector.shape_cast %117 : vector<128xf32> to vector<1x128xf32>
    %119 = arith.mulf %111, %111 : vector<128x128xf32>
    %cst_44 = arith.constant dense<0.000000e+00> : vector<128xf32>
    %120 = vector.multi_reduction <add>, %119, %cst_44 [0] : vector<128x128xf32> to vector<128xf32>
    %121 = vector.shape_cast %120 : vector<128xf32> to vector<1x128xf32>
    %122 = tpu.concatenate %118, %121 in 0 : vector<1x128xf32>, vector<1x128xf32> -> vector<2x128xf32>
    %c0_45 = arith.constant 0 : index
    %c0_46 = arith.constant 0 : index
    %c0_47 = arith.constant 0 : index
    %c0_48 = arith.constant 0 : index
    %123 = vector.load %arg9[%c0_45, %c0_46, %c0_47, %c0_48] : memref<1x1x2x128xf32, #tpu.memory_space<vmem>>, vector<1x1x2x128xf32>
    %124 = vector.shape_cast %123 : vector<1x1x2x128xf32> to vector<2x128xf32>
    %125 = vector.shape_cast %122 : vector<2x128xf32> to vector<1x1x2x128xf32>
    tpu.vector_store %arg9[%c0_45, %c0_46, %c0_47, %c0_48], %125 {strides = array<i32>} : memref<1x1x2x128xf32, #tpu.memory_space<vmem>>, vector<1x1x2x128xf32>,
    return
  }
  func.func @transform_0(%arg0: i32, %arg1: i32) -> (i32, i32, i32, i32) {
    %c0_i32 = arith.constant 0 : i32
    %c0_i32_0 = arith.constant 0 : i32
    %c0_i32_1 = arith.constant 0 : i32
    return %arg0, %arg1, %c0_i32, %c0_i32_0 : i32, i32, i32, i32
  }
  func.func @transform_1(%arg0: i32, %arg1: i32) -> (i32, i32, i32, i32) {
    %c8_i32 = arith.constant 8 : i32
    %0 = arith.muli %arg1, %c8_i32 : i32
    %c1_i32 = arith.constant 1 : i32
    %1 = arith.subi %0, %c1_i32 : i32
    %c0_i32 = arith.constant 0 : i32
    %2 = arith.maxsi %1, %c0_i32 : i32
    %c0_i32_0 = arith.constant 0 : i32
    %c0_i32_1 = arith.constant 0 : i32
    %c0_i32_2 = arith.constant 0 : i32
    return %arg0, %2, %c0_i32_0, %c0_i32_1 : i32, i32, i32, i32
  }
  func.func @transform_2(%arg0: i32, %arg1: i32) -> (i32, i32, i32, i32) {
    %c1_i32 = arith.constant 1 : i32
    %0 = arith.addi %arg1, %c1_i32 : i32
    %c8_i32 = arith.constant 8 : i32
    %1 = arith.muli %0, %c8_i32 : i32
    %c15_i32 = arith.constant 15 : i32
    %2 = arith.minsi %1, %c15_i32 : i32
    %c0_i32 = arith.constant 0 : i32
    %c0_i32_0 = arith.constant 0 : i32
    %c0_i32_1 = arith.constant 0 : i32
    return %arg0, %2, %c0_i32, %c0_i32_0 : i32, i32, i32, i32
  }
  func.func @transform_3(%arg0: i32, %arg1: i32) -> (i32, i32) {
    %c0_i32 = arith.constant 0 : i32
    %c0_i32_0 = arith.constant 0 : i32
    %c0_i32_1 = arith.constant 0 : i32
    return %c0_i32, %c0_i32_0 : i32, i32
  }
  func.func @transform_4(%arg0: i32, %arg1: i32) -> (i32, i32) {
    %c0_i32 = arith.constant 0 : i32
    %c0_i32_0 = arith.constant 0 : i32
    %c0_i32_1 = arith.constant 0 : i32
    return %c0_i32, %c0_i32_0 : i32, i32
  }
  func.func @transform_5(%arg0: i32, %arg1: i32) -> (i32, i32, i32) {
    %c0_i32 = arith.constant 0 : i32
    %c0_i32_0 = arith.constant 0 : i32
    %c0_i32_1 = arith.constant 0 : i32
    %c0_i32_2 = arith.constant 0 : i32
    return %c0_i32, %c0_i32_0, %c0_i32_1 : i32, i32, i32
  }
  func.func @transform_6(%arg0: i32, %arg1: i32) -> (i32, i32, i32, i32) {
    %c0_i32 = arith.constant 0 : i32
    %c0_i32_0 = arith.constant 0 : i32
    %c0_i32_1 = arith.constant 0 : i32
    return %arg0, %arg1, %c0_i32, %c0_i32_0 : i32, i32, i32, i32
  }
  func.func @transform_7(%arg0: i32, %arg1: i32) -> (i32, i32, i32, i32) {
    %c0_i32 = arith.constant 0 : i32
    %c0_i32_0 = arith.constant 0 : i32
    %c0_i32_1 = arith.constant 0 : i32
    return %arg0, %arg1, %c0_i32, %c0_i32_0 : i32, i32, i32, i32
  }
}

module attributes {stable_mosaic.version = 11 : i64} {
  func.func @bn_relu_conv1x1_stats_kernel(%arg0: i32, %arg1: memref<512x128xbf16, #tpu.memory_space<vmem>>, %arg2: memref<1x128xf32, #tpu.memory_space<vmem>>, %arg3: memref<1x128xf32, #tpu.memory_space<vmem>>, %arg4: memref<128x32xbf16, #tpu.memory_space<vmem>>, %arg5: memref<512x32xbf16, #tpu.memory_space<vmem>>, %arg6: memref<1x2x32xf32, #tpu.memory_space<vmem>>) attributes {dimension_semantics = [#tpu.dimension_semantics<parallel>], iteration_bounds = array<i64: 1>, scalar_prefetch = 0 : i64, scratch_operands = 0 : i64, tpu.core_type = #tpu.core_type<tc>, window_params = [{transform_indices = @transform_0, window_bounds = array<i64: 512, 128>}, {pipeline_mode = #tpu.pipeline_mode<synchronous>, transform_indices = @transform_1, window_bounds = array<i64: 1, 128>}, {pipeline_mode = #tpu.pipeline_mode<synchronous>, transform_indices = @transform_2, window_bounds = array<i64: 1, 128>}, {pipeline_mode = #tpu.pipeline_mode<synchronous>, transform_indices = @transform_3, window_bounds = array<i64: 128, 32>}, {transform_indices = @transform_4, window_bounds = array<i64: 512, 32>}, {transform_indices = @transform_5, window_bounds = array<i64: 1, 2, 32>}]} {
    %c0 = arith.constant 0 : index
    %c0_0 = arith.constant 0 : index
    %0 = vector.load %arg1[%c0, %c0_0] : memref<512x128xbf16, #tpu.memory_space<vmem>>, vector<512x128xbf16>
    %1 = arith.extf %0 : vector<512x128xbf16> to vector<512x128xf32>
    %c0_1 = arith.constant 0 : index
    %c0_2 = arith.constant 0 : index
    %2 = vector.load %arg2[%c0_1, %c0_2] : memref<1x128xf32, #tpu.memory_space<vmem>>, vector<1x128xf32>
    %3 = vector.broadcast %2 : vector<1x128xf32> to vector<512x128xf32>
    %4 = arith.mulf %1, %3 : vector<512x128xf32>
    %c0_3 = arith.constant 0 : index
    %c0_4 = arith.constant 0 : index
    %5 = vector.load %arg3[%c0_3, %c0_4] : memref<1x128xf32, #tpu.memory_space<vmem>>, vector<1x128xf32>
    %6 = vector.broadcast %5 : vector<1x128xf32> to vector<512x128xf32>
    %7 = arith.addf %4, %6 : vector<512x128xf32>
    %cst = arith.constant 0.000000e+00 : f32
    %8 = vector.broadcast %cst : f32 to vector<512x128xf32>
    %9 = arith.maximumf %7, %8 : vector<512x128xf32>
    %10 = arith.truncf %9 : vector<512x128xf32> to vector<512x128xbf16>
    %c0_5 = arith.constant 0 : index
    %c0_6 = arith.constant 0 : index
    %11 = vector.load %arg4[%c0_5, %c0_6] : memref<128x32xbf16, #tpu.memory_space<vmem>>, vector<128x32xbf16>
    %cst_7 = arith.constant dense<0.000000e+00> : vector<512x32xf32>
    %12 = tpu.matmul %10, %11, %cst_7 {dimension_numbers = #tpu.dot_dimension_numbers<[1], [0], [0], [1], [0, 0, 1, 1], [], []>} : vector<512x128xbf16>, vector<128x32xbf16>, vector<512x32xf32> -> vector<512x32xf32>
    %13 = arith.truncf %12 : vector<512x32xf32> to vector<512x32xbf16>
    %c0_8 = arith.constant 0 : index
    %c0_9 = arith.constant 0 : index
    %14 = vector.load %arg5[%c0_8, %c0_9] : memref<512x32xbf16, #tpu.memory_space<vmem>>, vector<512x32xbf16>
    tpu.vector_store %arg5[%c0_8, %c0_9], %13 {strides = array<i32>} : memref<512x32xbf16, #tpu.memory_space<vmem>>, vector<512x32xbf16>,
    %cst_10 = arith.constant dense<0.000000e+00> : vector<32xf32>
    %15 = vector.multi_reduction <add>, %12, %cst_10 [0] : vector<512x32xf32> to vector<32xf32>
    %16 = vector.shape_cast %15 : vector<32xf32> to vector<1x32xf32>
    %17 = arith.mulf %12, %12 : vector<512x32xf32>
    %cst_11 = arith.constant dense<0.000000e+00> : vector<32xf32>
    %18 = vector.multi_reduction <add>, %17, %cst_11 [0] : vector<512x32xf32> to vector<32xf32>
    %19 = vector.shape_cast %18 : vector<32xf32> to vector<1x32xf32>
    %20 = tpu.concatenate %16, %19 in 0 : vector<1x32xf32>, vector<1x32xf32> -> vector<2x32xf32>
    %c0_12 = arith.constant 0 : index
    %c0_13 = arith.constant 0 : index
    %c0_14 = arith.constant 0 : index
    %21 = vector.load %arg6[%c0_12, %c0_13, %c0_14] : memref<1x2x32xf32, #tpu.memory_space<vmem>>, vector<1x2x32xf32>
    %22 = vector.shape_cast %21 : vector<1x2x32xf32> to vector<2x32xf32>
    %23 = vector.shape_cast %20 : vector<2x32xf32> to vector<1x2x32xf32>
    tpu.vector_store %arg6[%c0_12, %c0_13, %c0_14], %23 {strides = array<i32>} : memref<1x2x32xf32, #tpu.memory_space<vmem>>, vector<1x2x32xf32>,
    return
  }
  func.func @transform_0(%arg0: i32) -> (i32, i32) {
    %c0_i32 = arith.constant 0 : i32
    %c0_i32_0 = arith.constant 0 : i32
    return %arg0, %c0_i32 : i32, i32
  }
  func.func @transform_1(%arg0: i32) -> (i32, i32) {
    %c0_i32 = arith.constant 0 : i32
    %c0_i32_0 = arith.constant 0 : i32
    %c0_i32_1 = arith.constant 0 : i32
    return %c0_i32, %c0_i32_0 : i32, i32
  }
  func.func @transform_2(%arg0: i32) -> (i32, i32) {
    %c0_i32 = arith.constant 0 : i32
    %c0_i32_0 = arith.constant 0 : i32
    %c0_i32_1 = arith.constant 0 : i32
    return %c0_i32, %c0_i32_0 : i32, i32
  }
  func.func @transform_3(%arg0: i32) -> (i32, i32) {
    %c0_i32 = arith.constant 0 : i32
    %c0_i32_0 = arith.constant 0 : i32
    %c0_i32_1 = arith.constant 0 : i32
    return %c0_i32, %c0_i32_0 : i32, i32
  }
  func.func @transform_4(%arg0: i32) -> (i32, i32) {
    %c0_i32 = arith.constant 0 : i32
    %c0_i32_0 = arith.constant 0 : i32
    return %arg0, %c0_i32 : i32, i32
  }
  func.func @transform_5(%arg0: i32) -> (i32, i32, i32) {
    %c0_i32 = arith.constant 0 : i32
    %c0_i32_0 = arith.constant 0 : i32
    %c0_i32_1 = arith.constant 0 : i32
    return %arg0, %c0_i32, %c0_i32_0 : i32, i32, i32
  }
}

module attributes {stable_mosaic.version = 11 : i64} {
  func.func @bn_residual_relu_kernel(%arg0: i32, %arg1: memref<128x128xbf16, #tpu.memory_space<vmem>>, %arg2: memref<128x128xf32, #tpu.memory_space<vmem>>, %arg3: memref<1x128xf32, #tpu.memory_space<vmem>>, %arg4: memref<1x128xf32, #tpu.memory_space<vmem>>, %arg5: memref<128x128xf32, #tpu.memory_space<vmem>>) attributes {dimension_semantics = [#tpu.dimension_semantics<parallel>], iteration_bounds = array<i64: 1>, scalar_prefetch = 0 : i64, scratch_operands = 0 : i64, tpu.core_type = #tpu.core_type<tc>, window_params = [{transform_indices = @transform_0, window_bounds = array<i64: 128, 128>}, {transform_indices = @transform_1, window_bounds = array<i64: 128, 128>}, {pipeline_mode = #tpu.pipeline_mode<synchronous>, transform_indices = @transform_2, window_bounds = array<i64: 1, 128>}, {pipeline_mode = #tpu.pipeline_mode<synchronous>, transform_indices = @transform_3, window_bounds = array<i64: 1, 128>}, {transform_indices = @transform_4, window_bounds = array<i64: 128, 128>}]} {
    %c0 = arith.constant 0 : index
    %c0_0 = arith.constant 0 : index
    %0 = vector.load %arg1[%c0, %c0_0] : memref<128x128xbf16, #tpu.memory_space<vmem>>, vector<128x128xbf16>
    %1 = arith.extf %0 : vector<128x128xbf16> to vector<128x128xf32>
    %c0_1 = arith.constant 0 : index
    %c0_2 = arith.constant 0 : index
    %2 = vector.load %arg3[%c0_1, %c0_2] : memref<1x128xf32, #tpu.memory_space<vmem>>, vector<1x128xf32>
    %3 = vector.broadcast %2 : vector<1x128xf32> to vector<128x128xf32>
    %4 = arith.mulf %1, %3 : vector<128x128xf32>
    %c0_3 = arith.constant 0 : index
    %c0_4 = arith.constant 0 : index
    %5 = vector.load %arg4[%c0_3, %c0_4] : memref<1x128xf32, #tpu.memory_space<vmem>>, vector<1x128xf32>
    %6 = vector.broadcast %5 : vector<1x128xf32> to vector<128x128xf32>
    %7 = arith.addf %4, %6 : vector<128x128xf32>
    %c0_5 = arith.constant 0 : index
    %c0_6 = arith.constant 0 : index
    %8 = vector.load %arg2[%c0_5, %c0_6] : memref<128x128xf32, #tpu.memory_space<vmem>>, vector<128x128xf32>
    %9 = arith.addf %7, %8 : vector<128x128xf32>
    %cst = arith.constant 0.000000e+00 : f32
    %10 = vector.broadcast %cst : f32 to vector<128x128xf32>
    %11 = arith.maximumf %9, %10 : vector<128x128xf32>
    %c0_7 = arith.constant 0 : index
    %c0_8 = arith.constant 0 : index
    %12 = vector.load %arg5[%c0_7, %c0_8] : memref<128x128xf32, #tpu.memory_space<vmem>>, vector<128x128xf32>
    tpu.vector_store %arg5[%c0_7, %c0_8], %11 {strides = array<i32>} : memref<128x128xf32, #tpu.memory_space<vmem>>, vector<128x128xf32>,
    return
  }
  func.func @transform_0(%arg0: i32) -> (i32, i32) {
    %c0_i32 = arith.constant 0 : i32
    %c0_i32_0 = arith.constant 0 : i32
    return %arg0, %c0_i32 : i32, i32
  }
  func.func @transform_1(%arg0: i32) -> (i32, i32) {
    %c0_i32 = arith.constant 0 : i32
    %c0_i32_0 = arith.constant 0 : i32
    return %arg0, %c0_i32 : i32, i32
  }
  func.func @transform_2(%arg0: i32) -> (i32, i32) {
    %c0_i32 = arith.constant 0 : i32
    %c0_i32_0 = arith.constant 0 : i32
    %c0_i32_1 = arith.constant 0 : i32
    return %c0_i32, %c0_i32_0 : i32, i32
  }
  func.func @transform_3(%arg0: i32) -> (i32, i32) {
    %c0_i32 = arith.constant 0 : i32
    %c0_i32_0 = arith.constant 0 : i32
    %c0_i32_1 = arith.constant 0 : i32
    return %c0_i32, %c0_i32_0 : i32, i32
  }
  func.func @transform_4(%arg0: i32) -> (i32, i32) {
    %c0_i32 = arith.constant 0 : i32
    %c0_i32_0 = arith.constant 0 : i32
    return %arg0, %c0_i32 : i32, i32
  }
}

</mosaic_0001>

<llo_original>
// kernel: bottleneck_forward_nhwc.4
$region0: #{bottleneck_forward_nhwc.4}
  #allocation0 [shape = 'u32[]', space=smem, size = 0x4, offset = 0x4, fixed_abs, tag = 'smem constant byte address 0x4 - core index']
  #allocation1 [shape = 'u32[144,128]{1,0:T(1,128)}', space=vmem, size = 0x12000, scoped, tag = 'internal scratch']
  %s0 = inlined_call_operand.hbm [shape: f32[512,32], index: 0, kind: input, shape index: {}]
  %s1 = inlined_call_operand.vmem [shape: bf16[32,128], index: 1, kind: input, shape index: {}]
  %s2 = inlined_call_operand.vmem [shape: bf16[512,128], index: 2, kind: output, shape index: {0}]
  %s3 = inlined_call_operand.vmem [shape: f32[1,2,128], index: 3, kind: output, shape index: {1}]
  %4 = xla_tuple %s2, %s3
  %s5 = sld [smem:[#allocation0]]
  $region30: #{bottleneck_forward_nhwc.4} parent=0
    _
  %s7 = ssub.s32 1, %s5
  %s8 = scalar_select 0, %s7, %s5
  $region1: #{bottleneck_forward_nhwc.4} parent=0
    #allocation2 [shape = 'u8[262144]{0}', space=vmem, size = 0x40000, scoped, tag = 'input window, operand 0, single buffered']
    #allocation3 [shape = 's32[1]{0}', space=sflag, size = 0x4, scoped, tag = 'scoped memory for bottleneck_forward_nhwc.4']
    %9 = vsyncpa [#allocation3], 0
    // Predicated region
    $region2: #{bottleneck_forward_nhwc.4} parent=1 // pred_check
      _
    $region3: #{bottleneck_forward_nhwc.4} parent=1 // pred_check_branch
      %11 = sbr.rel (0) target = $region5
    $region4: #{bottleneck_forward_nhwc.4} parent=1 // pred_region
      %s13 = ssub.s32 8192, 8192
      %14 = vsyncadd [#allocation3], %s13
      %s15 = sshll.u32 [#allocation2], 4
      %s16 = int_to_ptr.vmem [resolvable:$true] %s15
      %21 = dma.hbm_to_vmem [thread:$0]  %s0, 8192, %s16, [#allocation3], 128, 128, 8
    $region5: #{bottleneck_forward_nhwc.4} parent=1 // pred_fallthru
      _
    // Predicated region
    $region6: #{bottleneck_forward_nhwc.4} parent=1 // pred_check
      _
    $region7: #{bottleneck_forward_nhwc.4} parent=1 // pred_check_branch
      %23 = sbr.rel (0) target = $region9
    $region8: #{bottleneck_forward_nhwc.4} parent=1 // pred_region
      _
    $region9: #{bottleneck_forward_nhwc.4} parent=1 // pred_fallthru
      _
    // Predicated region
    $region10: #{bottleneck_forward_nhwc.4} parent=1 // pred_check
      _
    $region11: #{bottleneck_forward_nhwc.4} parent=1 // pred_check_branch
      %25 = sbr.rel (0) target = $region13
    $region12: #{bottleneck_forward_nhwc.4} parent=1 // pred_region
      %26 = dma.done [#allocation3], 8192
    $region13: #{bottleneck_forward_nhwc.4} parent=1 // pred_fallthru
      _
    %v28 = vld [vmem:[#allocation2] sm:$0xff]
    %v29 = vld [vmem:[#allocation2 + $0x8] sm:$0xff]
    %v30 = vld [vmem:[#allocation2 + $0x10] sm:$0xff]
    %v31 = vld [vmem:[#allocation2 + $0x18] sm:$0xff]
    %v32 = vld [vmem:[#allocation2 + $0x20] sm:$0xff]
    %v33 = vld [vmem:[#allocation2 + $0x28] sm:$0xff]
    %v34 = vld [vmem:[#allocation2 + $0x30] sm:$0xff]
    %v35 = vld [vmem:[#allocation2 + $0x38] sm:$0xff]
    %v36 = vld [vmem:[#allocation2 + $0x40] sm:$0xff]
    %v37 = vld [vmem:[#allocation2 + $0x48] sm:$0xff]
    %v38 = vld [vmem:[#allocation2 + $0x50] sm:$0xff]
    %v39 = vld [vmem:[#allocation2 + $0x58] sm:$0xff]
    %v40 = vld [vmem:[#allocation2 + $0x60] sm:$0xff]
    %v41 = vld [vmem:[#allocation2 + $0x68] sm:$0xff]
    %v42 = vld [vmem:[#allocation2 + $0x70] sm:$0xff]
    %v43 = vld [vmem:[#allocation2 + $0x78] sm:$0xff]
    %v44 = vld [vmem:[#allocation2 + $0x80] sm:$0xff]
    %v45 = vld [vmem:[#allocation2 + $0x88] sm:$0xff]
    %v46 = vld [vmem:[#allocation2 + $0x90] sm:$0xff]
    %v47 = vld [vmem:[#allocation2 + $0x98] sm:$0xff]
    %v48 = vld [vmem:[#allocation2 + $0xa0] sm:$0xff]
    %v49 = vld [vmem:[#allocation2 + $0xa8] sm:$0xff]
    %v50 = vld [vmem:[#allocation2 + $0xb0] sm:$0xff]
    %v51 = vld [vmem:[#allocation2 + $0xb8] sm:$0xff]
    %v52 = vld [vmem:[#allocation2 + $0xc0] sm:$0xff]
    %v53 = vld [vmem:[#allocation2 + $0xc8] sm:$0xff]
    %v54 = vld [vmem:[#allocation2 + $0xd0] sm:$0xff]
    %v55 = vld [vmem:[#allocation2 + $0xd8] sm:$0xff]
    %v56 = vld [vmem:[#allocation2 + $0xe0] sm:$0xff]
    %v57 = vld [vmem:[#allocation2 + $0xe8] sm:$0xff]
    %v58 = vld [vmem:[#allocation2 + $0xf0] sm:$0xff]
    %v59 = vld [vmem:[#allocation2 + $0xf8] sm:$0xff]
    %v60 = vld [vmem:[#allocation2 + $0x100] sm:$0xff]
    %v61 = vld [vmem:[#allocation2 + $0x108] sm:$0xff]
    %v62 = vld [vmem:[#allocation2 + $0x110] sm:$0xff]
    %v63 = vld [vmem:[#allocation2 + $0x118] sm:$0xff]
    %v64 = vld [vmem:[#allocation2 + $0x120] sm:$0xff]
    %v65 = vld [vmem:[#allocation2 + $0x128] sm:$0xff]
    %v66 = vld [vmem:[#allocation2 + $0x130] sm:$0xff]
    %v67 = vld [vmem:[#allocation2 + $0x138] sm:$0xff]
    %v68 = vld [vmem:[#allocation2 + $0x140] sm:$0xff]
    %v69 = vld [vmem:[#allocation2 + $0x148] sm:$0xff]
    %v70 = vld [vmem:[#allocation2 + $0x150] sm:$0xff]
    %v71 = vld [vmem:[#allocation2 + $0x158] sm:$0xff]
    %v72 = vld [vmem:[#allocation2 + $0x160] sm:$0xff]
    %v73 = vld [vmem:[#allocation2 + $0x168] sm:$0xff]
    %v74 = vld [vmem:[#allocation2 + $0x170] sm:$0xff]
    %v75 = vld [vmem:[#allocation2 + $0x178] sm:$0xff]
    %v76 = vld [vmem:[#allocation2 + $0x180] sm:$0xff]
    %v77 = vld [vmem:[#allocation2 + $0x188] sm:$0xff]
    %v78 = vld [vmem:[#allocation2 + $0x190] sm:$0xff]
    %v79 = vld [vmem:[#allocation2 + $0x198] sm:$0xff]
    %v80 = vld [vmem:[#allocation2 + $0x1a0] sm:$0xff]
    %v81 = vld [vmem:[#allocation2 + $0x1a8] sm:$0xff]
    %v82 = vld [vmem:[#allocation2 + $0x1b0] sm:$0xff]
    %v83 = vld [vmem:[#allocation2 + $0x1b8] sm:$0xff]
    %v84 = vld [vmem:[#allocation2 + $0x1c0] sm:$0xff]
    %v85 = vld [vmem:[#allocation2 + $0x1c8] sm:$0xff]
    %v86 = vld [vmem:[#allocation2 + $0x1d0] sm:$0xff]
    %v87 = vld [vmem:[#allocation2 + $0x1d8] sm:$0xff]
    %v88 = vld [vmem:[#allocation2 + $0x1e0] sm:$0xff]
    %v89 = vld [vmem:[#allocation2 + $0x1e8] sm:$0xff]
    %v90 = vld [vmem:[#allocation2 + $0x1f0] sm:$0xff]
    %v91 = vld [vmem:[#allocation2 + $0x1f8] sm:$0xff]
    %v92 = vpack.c.bf16 %v29, %v28
    %v93 = vpack.c.bf16 %v31, %v30
    %v94 = vpack.c.bf16 %v33, %v32
    %v95 = vpack.c.bf16 %v35, %v34
    %v96 = vpack.c.bf16 %v37, %v36
    %v97 = vpack.c.bf16 %v39, %v38
    %v98 = vpack.c.bf16 %v41, %v40
    %v99 = vpack.c.bf16 %v43, %v42
    %v100 = vpack.c.bf16 %v45, %v44
    %v101 = vpack.c.bf16 %v47, %v46
    %v102 = vpack.c.bf16 %v49, %v48
    %v103 = vpack.c.bf16 %v51, %v50
    %v104 = vpack.c.bf16 %v53, %v52
    %v105 = vpack.c.bf16 %v55, %v54
    %v106 = vpack.c.bf16 %v57, %v56
    %v107 = vpack.c.bf16 %v59, %v58
    %v108 = vpack.c.bf16 %v61, %v60
    %v109 = vpack.c.bf16 %v63, %v62
    %v110 = vpack.c.bf16 %v65, %v64
    %v111 = vpack.c.bf16 %v67, %v66
    %v112 = vpack.c.bf16 %v69, %v68
    %v113 = vpack.c.bf16 %v71, %v70
    %v114 = vpack.c.bf16 %v73, %v72
    %v115 = vpack.c.bf16 %v75, %v74
    %v116 = vpack.c.bf16 %v77, %v76
    %v117 = vpack.c.bf16 %v79, %v78
    %v118 = vpack.c.bf16 %v81, %v80
    %v119 = vpack.c.bf16 %v83, %v82
    %v120 = vpack.c.bf16 %v85, %v84
    %v121 = vpack.c.bf16 %v87, %v86
    %v122 = vpack.c.bf16 %v89, %v88
    %v123 = vpack.c.bf16 %v91, %v90
    %v124 = vld [vmem:[%s1] sm:$0xf]
    %v125 = vld [vmem:[%s1 + $0x4] sm:$0xf]
    %v126 = vld [vmem:[%s1 + $0x8] sm:$0xf]
    %v127 = vld [vmem:[%s1 + $0xc] sm:$0xf]
    %v132 = vunpack.c.l.b16 %v124
    %v133 = vunpack.c.l.b16 %v125
    %v134 = vunpack.c.l.b16 %v126
    %v135 = vunpack.c.l.b16 %v127
    %v136 = vpack.c.b16 %v133, %v132
    %v137 = vpack.c.b16 %v135, %v134
    %vm140 = vcmask 261120
    %v142 = vsel %vm140, %v92, 0
    %v145 = vsel %vm140, %v93, 0
    %v148 = vsel %vm140, %v94, 0
    %v151 = vsel %vm140, %v95, 0
    %v154 = vsel %vm140, %v96, 0
    %v157 = vsel %vm140, %v97, 0
    %v160 = vsel %vm140, %v98, 0
    %v163 = vsel %vm140, %v99, 0
    %v166 = vsel %vm140, %v100, 0
    %v169 = vsel %vm140, %v101, 0
    %v172 = vsel %vm140, %v102, 0
    %v175 = vsel %vm140, %v103, 0
    %v178 = vsel %vm140, %v104, 0
    %v181 = vsel %vm140, %v105, 0
    %v184 = vsel %vm140, %v106, 0
    %v187 = vsel %vm140, %v107, 0
    %v190 = vsel %vm140, %v108, 0
    %v193 = vsel %vm140, %v109, 0
    %v196 = vsel %vm140, %v110, 0
    %v199 = vsel %vm140, %v111, 0
    %v202 = vsel %vm140, %v112, 0
    %v205 = vsel %vm140, %v113, 0
    %v208 = vsel %vm140, %v114, 0
    %v211 = vsel %vm140, %v115, 0
    %v214 = vsel %vm140, %v116, 0
    %v217 = vsel %vm140, %v117, 0
    %v220 = vsel %vm140, %v118, 0
    %v223 = vsel %vm140, %v119, 0
    %v226 = vsel %vm140, %v120, 0
    %v229 = vsel %vm140, %v121, 0
    %v232 = vsel %vm140, %v122, 0
    %v235 = vsel %vm140, %v123, 0
    %237 = vmatprep.subr.bf16.mxu0 0
    %238 = vmatpush1.bf16.msra.mxu0 %v136
    %239 = vmatprep.subr.bf16.mxu0 0
    %240 = vmatpush1.bf16.msra.mxu0 %v137
    %241 = vmatprep.subr.bf16.mxu0 0
    %242 = vmatpush1.bf16.msra.mxu0 0
    %243 = vmatprep.subr.bf16.mxu0 0
    %244 = vmatpush1.bf16.msra.mxu0 0
    %245 = vmatprep.subr.bf16.mxu0 0
    %246 = vmatpush1.bf16.msra.mxu0 0
    %247 = vmatprep.subr.bf16.mxu0 0
    %248 = vmatpush1.bf16.msra.mxu0 0
    %249 = vmatprep.subr.bf16.mxu0 0
    %250 = vmatpush1.bf16.msra.mxu0 0
    %251 = vmatprep.subr.bf16.mxu0 0
    %252 = vmatpush1.bf16.msra.mxu0 0
    %253 = vmatprep.subr.bf16.mxu0 0
    %254 = vmatpush1.bf16.msra.mxu0 0
    %255 = vmatprep.subr.bf16.mxu0 0
    %256 = vmatpush1.bf16.msra.mxu0 0
    %257 = vmatprep.subr.bf16.mxu0 0
    %258 = vmatpush1.bf16.msra.mxu0 0
    %259 = vmatprep.subr.bf16.mxu0 0
    %260 = vmatpush1.bf16.msra.mxu0 0
    %261 = vmatprep.subr.bf16.mxu0 0
    %262 = vmatpush1.bf16.msra.mxu0 0
    %263 = vmatprep.subr.bf16.mxu0 0
    %264 = vmatpush1.bf16.msra.mxu0 0
    %265 = vmatprep.subr.bf16.mxu0 0
    %266 = vmatpush1.bf16.msra.mxu0 0
    %267 = vmatprep.subr.bf16.mxu0 0
    %268 = vmatpush1.bf16.msra.mxu0 0
    %269 = vmatprep.mubr.bf16.mxu0 0
    %270 = vmatmul.mubr.bf16.gmra.mrb[0].mxu0 %v142
    %v271 = vpop.f32.mrb[0].mxu0
    %v272 = vadd.f32 0.0, %v271
    %v273 = vpop.f32.mrb[0].mxu0
    %v274 = vpop.f32.mrb[0].mxu0
    %v275 = vadd.f32 0.0, %v274
    %v276 = vpop.f32.mrb[0].mxu0
    %277 = vmatprep.mubr.bf16.mxu0 0
    %278 = vmatmul.mubr.bf16.gmra.mrb[0].mxu0 %v145
    %v279 = vpop.f32.mrb[0].mxu0
    %v280 = vadd.f32 0.0, %v279
    %v281 = vpop.f32.mrb[0].mxu0
    %v282 = vpop.f32.mrb[0].mxu0
    %v283 = vadd.f32 0.0, %v282
    %v284 = vpop.f32.mrb[0].mxu0
    %285 = vmatprep.mubr.bf16.mxu0 0
    %286 = vmatmul.mubr.bf16.gmra.mrb[0].mxu0 %v148
    %v287 = vpop.f32.mrb[0].mxu0
    %v288 = vadd.f32 0.0, %v287
    %v289 = vpop.f32.mrb[0].mxu0
    %v290 = vpop.f32.mrb[0].mxu0
    %v291 = vadd.f32 0.0, %v290
    %v292 = vpop.f32.mrb[0].mxu0
    %293 = vmatprep.mubr.bf16.mxu0 0
    %294 = vmatmul.mubr.bf16.gmra.mrb[0].mxu0 %v151
    %v295 = vpop.f32.mrb[0].mxu0
    %v296 = vadd.f32 0.0, %v295
    %v297 = vpop.f32.mrb[0].mxu0
    %v298 = vpop.f32.mrb[0].mxu0
    %v299 = vadd.f32 0.0, %v298
    %v300 = vpop.f32.mrb[0].mxu0
    %301 = vmatprep.mubr.bf16.mxu0 0
    %302 = vmatmul.mubr.bf16.gmra.mrb[0].mxu0 %v154
    %v303 = vpop.f32.mrb[0].mxu0
    %v304 = vadd.f32 0.0, %v303
    %v305 = vpop.f32.mrb[0].mxu0
    %v306 = vpop.f32.mrb[0].mxu0
    %v307 = vadd.f32 0.0, %v306
    %v308 = vpop.f32.mrb[0].mxu0
    %309 = vmatprep.mubr.bf16.mxu0 0
    %310 = vmatmul.mubr.bf16.gmra.mrb[0].mxu0 %v157
    %v311 = vpop.f32.mrb[0].mxu0
    %v312 = vadd.f32 0.0, %v311
    %v313 = vpop.f32.mrb[0].mxu0
    %v314 = vpop.f32.mrb[0].mxu0
    %v315 = vadd.f32 0.0, %v314
    %v316 = vpop.f32.mrb[0].mxu0
    %317 = vmatprep.mubr.bf16.mxu0 0
    %318 = vmatmul.mubr.bf16.gmra.mrb[0].mxu0 %v160
    %v319 = vpop.f32.mrb[0].mxu0
    %v320 = vadd.f32 0.0, %v319
    %v321 = vpop.f32.mrb[0].mxu0
    %v322 = vpop.f32.mrb[0].mxu0
    %v323 = vadd.f32 0.0, %v322
    %v324 = vpop.f32.mrb[0].mxu0
    %325 = vmatprep.mubr.bf16.mxu0 0
    %326 = vmatmul.mubr.bf16.gmra.mrb[0].mxu0 %v163
    %v327 = vpop.f32.mrb[0].mxu0
    %v328 = vadd.f32 0.0, %v327
    %v329 = vpop.f32.mrb[0].mxu0
    %v330 = vpop.f32.mrb[0].mxu0
    %v331 = vadd.f32 0.0, %v330
    %v332 = vpop.f32.mrb[0].mxu0
    %333 = vmatprep.mubr.bf16.mxu0 0
    %334 = vmatmul.mubr.bf16.gmra.mrb[0].mxu0 %v166
    %v335 = vpop.f32.mrb[0].mxu0
    %v336 = vadd.f32 0.0, %v335
    %v337 = vpop.f32.mrb[0].mxu0
    %v338 = vpop.f32.mrb[0].mxu0
    %v339 = vadd.f32 0.0, %v338
    %v340 = vpop.f32.mrb[0].mxu0
    %341 = vmatprep.mubr.bf16.mxu0 0
    %342 = vmatmul.mubr.bf16.gmra.mrb[0].mxu0 %v169
    %v343 = vpop.f32.mrb[0].mxu0
    %v344 = vadd.f32 0.0, %v343
    %v345 = vpop.f32.mrb[0].mxu0
    %v346 = vpop.f32.mrb[0].mxu0
    %v347 = vadd.f32 0.0, %v346
    %v348 = vpop.f32.mrb[0].mxu0
    %349 = vmatprep.mubr.bf16.mxu0 0
    %350 = vmatmul.mubr.bf16.gmra.mrb[0].mxu0 %v172
    %v351 = vpop.f32.mrb[0].mxu0
    %v352 = vadd.f32 0.0, %v351
    %v353 = vpop.f32.mrb[0].mxu0
    %v354 = vpop.f32.mrb[0].mxu0
    %v355 = vadd.f32 0.0, %v354
    %v356 = vpop.f32.mrb[0].mxu0
    %357 = vmatprep.mubr.bf16.mxu0 0
    %358 = vmatmul.mubr.bf16.gmra.mrb[0].mxu0 %v175
    %v359 = vpop.f32.mrb[0].mxu0
    %v360 = vadd.f32 0.0, %v359
    %v361 = vpop.f32.mrb[0].mxu0
    %v362 = vpop.f32.mrb[0].mxu0
    %v363 = vadd.f32 0.0, %v362
    %v364 = vpop.f32.mrb[0].mxu0
    %365 = vmatprep.mubr.bf16.mxu0 0
    %366 = vmatmul.mubr.bf16.gmra.mrb[0].mxu0 %v178
    %v367 = vpop.f32.mrb[0].mxu0
    %v368 = vadd.f32 0.0, %v367
    %v369 = vpop.f32.mrb[0].mxu0
    %v370 = vpop.f32.mrb[0].mxu0
    %v371 = vadd.f32 0.0, %v370
    %v372 = vpop.f32.mrb[0].mxu0
    %373 = vmatprep.mubr.bf16.mxu0 0
    %374 = vmatmul.mubr.bf16.gmra.mrb[0].mxu0 %v181
    %v375 = vpop.f32.mrb[0].mxu0
    %v376 = vadd.f32 0.0, %v375
    %v377 = vpop.f32.mrb[0].mxu0
    %v378 = vpop.f32.mrb[0].mxu0
    %v379 = vadd.f32 0.0, %v378
    %v380 = vpop.f32.mrb[0].mxu0
    %381 = vmatprep.mubr.bf16.mxu0 0
    %382 = vmatmul.mubr.bf16.gmra.mrb[0].mxu0 %v184
    %v383 = vpop.f32.mrb[0].mxu0
    %v384 = vadd.f32 0.0, %v383
    %v385 = vpop.f32.mrb[0].mxu0
    %v386 = vpop.f32.mrb[0].mxu0
    %v387 = vadd.f32 0.0, %v386
    %v388 = vpop.f32.mrb[0].mxu0
    %389 = vmatprep.mubr.bf16.mxu0 0
    %390 = vmatmul.mubr.bf16.gmra.mrb[0].mxu0 %v187
    %v391 = vpop.f32.mrb[0].mxu0
    %v392 = vadd.f32 0.0, %v391
    %v393 = vpop.f32.mrb[0].mxu0
    %v394 = vpop.f32.mrb[0].mxu0
    %v395 = vadd.f32 0.0, %v394
    %v396 = vpop.f32.mrb[0].mxu0
    %397 = vmatprep.mubr.bf16.mxu0 0
    %398 = vmatmul.mubr.bf16.gmra.mrb[0].mxu0 %v190
    %v399 = vpop.f32.mrb[0].mxu0
    %v400 = vadd.f32 0.0, %v399
    %v401 = vpop.f32.mrb[0].mxu0
    %v402 = vpop.f32.mrb[0].mxu0
    %v403 = vadd.f32 0.0, %v402
    %v404 = vpop.f32.mrb[0].mxu0
    %405 = vmatprep.mubr.bf16.mxu0 0
    %406 = vmatmul.mubr.bf16.gmra.mrb[0].mxu0 %v193
    %v407 = vpop.f32.mrb[0].mxu0
    %v408 = vadd.f32 0.0, %v407
    %v409 = vpop.f32.mrb[0].mxu0
    %v410 = vpop.f32.mrb[0].mxu0
    %v411 = vadd.f32 0.0, %v410
    %v412 = vpop.f32.mrb[0].mxu0
    %413 = vmatprep.mubr.bf16.mxu0 0
    %414 = vmatmul.mubr.bf16.gmra.mrb[0].mxu0 %v196
    %v415 = vpop.f32.mrb[0].mxu0
    %v416 = vadd.f32 0.0, %v415
    %v417 = vpop.f32.mrb[0].mxu0
    %v418 = vpop.f32.mrb[0].mxu0
    %v419 = vadd.f32 0.0, %v418
    %v420 = vpop.f32.mrb[0].mxu0
    %421 = vmatprep.mubr.bf16.mxu0 0
    %422 = vmatmul.mubr.bf16.gmra.mrb[0].mxu0 %v199
    %v423 = vpop.f32.mrb[0].mxu0
    %v424 = vadd.f32 0.0, %v423
    %v425 = vpop.f32.mrb[0].mxu0
    %v426 = vpop.f32.mrb[0].mxu0
    %v427 = vadd.f32 0.0, %v426
    %v428 = vpop.f32.mrb[0].mxu0
    %429 = vmatprep.mubr.bf16.mxu0 0
    %430 = vmatmul.mubr.bf16.gmra.mrb[0].mxu0 %v202
    %v431 = vpop.f32.mrb[0].mxu0
    %v432 = vadd.f32 0.0, %v431
    %v433 = vpop.f32.mrb[0].mxu0
    %v434 = vpop.f32.mrb[0].mxu0
    %v435 = vadd.f32 0.0, %v434
    %v436 = vpop.f32.mrb[0].mxu0
    %437 = vmatprep.mubr.bf16.mxu0 0
    %438 = vmatmul.mubr.bf16.gmra.mrb[0].mxu0 %v205
    %v439 = vpop.f32.mrb[0].mxu0
    %v440 = vadd.f32 0.0, %v439
    %v441 = vpop.f32.mrb[0].mxu0
    %v442 = vpop.f32.mrb[0].mxu0
    %v443 = vadd.f32 0.0, %v442
    %v444 = vpop.f32.mrb[0].mxu0
    %445 = vmatprep.mubr.bf16.mxu0 0
    %446 = vmatmul.mubr.bf16.gmra.mrb[0].mxu0 %v208
    %v447 = vpop.f32.mrb[0].mxu0
    %v448 = vadd.f32 0.0, %v447
    %v449 = vpop.f32.mrb[0].mxu0
    %v450 = vpop.f32.mrb[0].mxu0
    %v451 = vadd.f32 0.0, %v450
    %v452 = vpop.f32.mrb[0].mxu0
    %453 = vmatprep.mubr.bf16.mxu0 0
    %454 = vmatmul.mubr.bf16.gmra.mrb[0].mxu0 %v211
    %v455 = vpop.f32.mrb[0].mxu0
    %v456 = vadd.f32 0.0, %v455
    %v457 = vpop.f32.mrb[0].mxu0
    %v458 = vpop.f32.mrb[0].mxu0
    %v459 = vadd.f32 0.0, %v458
    %v460 = vpop.f32.mrb[0].mxu0
    %461 = vmatprep.mubr.bf16.mxu0 0
    %462 = vmatmul.mubr.bf16.gmra.mrb[0].mxu0 %v214
    %v463 = vpop.f32.mrb[0].mxu0
    %v464 = vadd.f32 0.0, %v463
    %v465 = vpop.f32.mrb[0].mxu0
    %v466 = vpop.f32.mrb[0].mxu0
    %v467 = vadd.f32 0.0, %v466
    %v468 = vpop.f32.mrb[0].mxu0
    %469 = vmatprep.mubr.bf16.mxu0 0
    %470 = vmatmul.mubr.bf16.gmra.mrb[0].mxu0 %v217
    %v471 = vpop.f32.mrb[0].mxu0
    %v472 = vadd.f32 0.0, %v471
    %v473 = vpop.f32.mrb[0].mxu0
    %v474 = vpop.f32.mrb[0].mxu0
    %v475 = vadd.f32 0.0, %v474
    %v476 = vpop.f32.mrb[0].mxu0
    %477 = vmatprep.mubr.bf16.mxu0 0
    %478 = vmatmul.mubr.bf16.gmra.mrb[0].mxu0 %v220
    %v479 = vpop.f32.mrb[0].mxu0
    %v480 = vadd.f32 0.0, %v479
    %v481 = vpop.f32.mrb[0].mxu0
    %v482 = vpop.f32.mrb[0].mxu0
    %v483 = vadd.f32 0.0, %v482
    %v484 = vpop.f32.mrb[0].mxu0
    %485 = vmatprep.mubr.bf16.mxu0 0
    %486 = vmatmul.mubr.bf16.gmra.mrb[0].mxu0 %v223
    %v487 = vpop.f32.mrb[0].mxu0
    %v488 = vadd.f32 0.0, %v487
    %v489 = vpop.f32.mrb[0].mxu0
    %v490 = vpop.f32.mrb[0].mxu0
    %v491 = vadd.f32 0.0, %v490
    %v492 = vpop.f32.mrb[0].mxu0
    %493 = vmatprep.mubr.bf16.mxu0 0
    %494 = vmatmul.mubr.bf16.gmra.mrb[0].mxu0 %v226
    %v495 = vpop.f32.mrb[0].mxu0
    %v496 = vadd.f32 0.0, %v495
    %v497 = vpop.f32.mrb[0].mxu0
    %v498 = vpop.f32.mrb[0].mxu0
    %v499 = vadd.f32 0.0, %v498
    %v500 = vpop.f32.mrb[0].mxu0
    %501 = vmatprep.mubr.bf16.mxu0 0
    %502 = vmatmul.mubr.bf16.gmra.mrb[0].mxu0 %v229
    %v503 = vpop.f32.mrb[0].mxu0
    %v504 = vadd.f32 0.0, %v503
    %v505 = vpop.f32.mrb[0].mxu0
    %v506 = vpop.f32.mrb[0].mxu0
    %v507 = vadd.f32 0.0, %v506
    %v508 = vpop.f32.mrb[0].mxu0
    %509 = vmatprep.mubr.bf16.mxu0 0
    %510 = vmatmul.mubr.bf16.gmra.mrb[0].mxu0 %v232
    %v511 = vpop.f32.mrb[0].mxu0
    %v512 = vadd.f32 0.0, %v511
    %v513 = vpop.f32.mrb[0].mxu0
    %v514 = vpop.f32.mrb[0].mxu0
    %v515 = vadd.f32 0.0, %v514
    %v516 = vpop.f32.mrb[0].mxu0
    %517 = vmatprep.mubr.bf16.mxu0 0
    %518 = vmatmul.mubr.bf16.gmra.mrb[0].mxu0 %v235
    %v519 = vpop.f32.mrb[0].mxu0
    %v520 = vadd.f32 0.0, %v519
    %v521 = vpop.f32.mrb[0].mxu0
    %v522 = vpop.f32.mrb[0].mxu0
    %v523 = vadd.f32 0.0, %v522
    %v524 = vpop.f32.mrb[0].mxu0
    %525 = vdwg.mxu0
    %v526 = vpack.c.bf16 %v275, %v272
    %v527 = vpack.c.bf16 %v283, %v280
    %v528 = vpack.c.bf16 %v291, %v288
    %v529 = vpack.c.bf16 %v299, %v296
    %v530 = vpack.c.bf16 %v307, %v304
    %v531 = vpack.c.bf16 %v315, %v312
    %v532 = vpack.c.bf16 %v323, %v320
    %v533 = vpack.c.bf16 %v331, %v328
    %v534 = vpack.c.bf16 %v339, %v336
    %v535 = vpack.c.bf16 %v347, %v344
    %v536 = vpack.c.bf16 %v355, %v352
    %v537 = vpack.c.bf16 %v363, %v360
    %v538 = vpack.c.bf16 %v371, %v368
    %v539 = vpack.c.bf16 %v379, %v376
    %v540 = vpack.c.bf16 %v387, %v384
    %v541 = vpack.c.bf16 %v395, %v392
    %v542 = vpack.c.bf16 %v403, %v400
    %v543 = vpack.c.bf16 %v411, %v408
    %v544 = vpack.c.bf16 %v419, %v416
    %v545 = vpack.c.bf16 %v427, %v424
    %v546 = vpack.c.bf16 %v435, %v432
    %v547 = vpack.c.bf16 %v443, %v440
    %v548 = vpack.c.bf16 %v451, %v448
    %v549 = vpack.c.bf16 %v459, %v456
    %v550 = vpack.c.bf16 %v467, %v464
    %v551 = vpack.c.bf16 %v475, %v472
    %v552 = vpack.c.bf16 %v483, %v480
    %v553 = vpack.c.bf16 %v491, %v488
    %v554 = vpack.c.bf16 %v499, %v496
    %v555 = vpack.c.bf16 %v507, %v504
    %v556 = vpack.c.bf16 %v515, %v512
    %v557 = vpack.c.bf16 %v523, %v520
    %v590 = vunpack.c.l.b16 %v526
    %v591 = vunpack.c.h.b16 %v526
    %v592 = vunpack.c.l.b16 %v527
    %v593 = vunpack.c.h.b16 %v527
    %v594 = vunpack.c.l.b16 %v528
    %v595 = vunpack.c.h.b16 %v528
    %v596 = vunpack.c.l.b16 %v529
    %v597 = vunpack.c.h.b16 %v529
    %v598 = vunpack.c.l.b16 %v530
    %v599 = vunpack.c.h.b16 %v530
    %v600 = vunpack.c.l.b16 %v531
    %v601 = vunpack.c.h.b16 %v531
    %v602 = vunpack.c.l.b16 %v532
    %v603 = vunpack.c.h.b16 %v532
    %v604 = vunpack.c.l.b16 %v533
    %v605 = vunpack.c.h.b16 %v533
    %v606 = vunpack.c.l.b16 %v534
    %v607 = vunpack.c.h.b16 %v534
    %v608 = vunpack.c.l.b16 %v535
    %v609 = vunpack.c.h.b16 %v535
    %v610 = vunpack.c.l.b16 %v536
    %v611 = vunpack.c.h.b16 %v536
    %v612 = vunpack.c.l.b16 %v537
    %v613 = vunpack.c.h.b16 %v537
    %v614 = vunpack.c.l.b16 %v538
    %v615 = vunpack.c.h.b16 %v538
    %v616 = vunpack.c.l.b16 %v539
    %v617 = vunpack.c.h.b16 %v539
    %v618 = vunpack.c.l.b16 %v540
    %v619 = vunpack.c.h.b16 %v540
    %v620 = vunpack.c.l.b16 %v541
    %v621 = vunpack.c.h.b16 %v541
    %v622 = vunpack.c.l.b16 %v542
    %v623 = vunpack.c.h.b16 %v542
    %v624 = vunpack.c.l.b16 %v543
    %v625 = vunpack.c.h.b16 %v543
    %v626 = vunpack.c.l.b16 %v544
    %v627 = vunpack.c.h.b16 %v544
    %v628 = vunpack.c.l.b16 %v545
    %v629 = vunpack.c.h.b16 %v545
    %v630 = vunpack.c.l.b16 %v546
    %v631 = vunpack.c.h.b16 %v546
    %v632 = vunpack.c.l.b16 %v547
    %v633 = vunpack.c.h.b16 %v547
    %v634 = vunpack.c.l.b16 %v548
    %v635 = vunpack.c.h.b16 %v548
    %v636 = vunpack.c.l.b16 %v549
    %v637 = vunpack.c.h.b16 %v549
    %v638 = vunpack.c.l.b16 %v550
    %v639 = vunpack.c.h.b16 %v550
    %v640 = vunpack.c.l.b16 %v551
    %v641 = vunpack.c.h.b16 %v551
    %v642 = vunpack.c.l.b16 %v552
    %v643 = vunpack.c.h.b16 %v552
    %v644 = vunpack.c.l.b16 %v553
    %v645 = vunpack.c.h.b16 %v553
    %v646 = vunpack.c.l.b16 %v554
    %v647 = vunpack.c.h.b16 %v554
    %v648 = vunpack.c.l.b16 %v555
    %v649 = vunpack.c.h.b16 %v555
    %v650 = vunpack.c.l.b16 %v556
    %v651 = vunpack.c.h.b16 %v556
    %v652 = vunpack.c.l.b16 %v557
    %v653 = vunpack.c.h.b16 %v557
    %v654 = vpack.c.b16 %v590, %v590
    %v655 = vpack.c.b16 %v591, %v591
    %v656 = vpack.c.b16 %v592, %v592
    %v657 = vpack.c.b16 %v593, %v593
    %v658 = vpack.c.b16 %v594, %v594
    %v659 = vpack.c.b16 %v595, %v595
    %v660 = vpack.c.b16 %v596, %v596
    %v661 = vpack.c.b16 %v597, %v597
    %v662 = vpack.c.b16 %v598, %v598
    %v663 = vpack.c.b16 %v599, %v599
    %v664 = vpack.c.b16 %v600, %v600
    %v665 = vpack.c.b16 %v601, %v601
    %v666 = vpack.c.b16 %v602, %v602
    %v667 = vpack.c.b16 %v603, %v603
    %v668 = vpack.c.b16 %v604, %v604
    %v669 = vpack.c.b16 %v605, %v605
    %v670 = vpack.c.b16 %v606, %v606
    %v671 = vpack.c.b16 %v607, %v607
    %v672 = vpack.c.b16 %v608, %v608
    %v673 = vpack.c.b16 %v609, %v609
    %v674 = vpack.c.b16 %v610, %v610
    %v675 = vpack.c.b16 %v611, %v611
    %v676 = vpack.c.b16 %v612, %v612
    %v677 = vpack.c.b16 %v613, %v613
    %v678 = vpack.c.b16 %v614, %v614
    %v679 = vpack.c.b16 %v615, %v615
    %v680 = vpack.c.b16 %v616, %v616
    %v681 = vpack.c.b16 %v617, %v617
    %v682 = vpack.c.b16 %v618, %v618
    %v683 = vpack.c.b16 %v619, %v619
    %v684 = vpack.c.b16 %v620, %v620
    %v685 = vpack.c.b16 %v621, %v621
    %v686 = vpack.c.b16 %v622, %v622
    %v687 = vpack.c.b16 %v623, %v623
    %v688 = vpack.c.b16 %v624, %v624
    %v689 = vpack.c.b16 %v625, %v625
    %v690 = vpack.c.b16 %v626, %v626
    %v691 = vpack.c.b16 %v627, %v627
    %v692 = vpack.c.b16 %v628, %v628
    %v693 = vpack.c.b16 %v629, %v629
    %v694 = vpack.c.b16 %v630, %v630
    %v695 = vpack.c.b16 %v631, %v631
    %v696 = vpack.c.b16 %v632, %v632
    %v697 = vpack.c.b16 %v633, %v633
    %v698 = vpack.c.b16 %v634, %v634
    %v699 = vpack.c.b16 %v635, %v635
    %v700 = vpack.c.b16 %v636, %v636
    %v701 = vpack.c.b16 %v637, %v637
    %v702 = vpack.c.b16 %v638, %v638
    %v703 = vpack.c.b16 %v639, %v639
    %v704 = vpack.c.b16 %v640, %v640
    %v705 = vpack.c.b16 %v641, %v641
    %v706 = vpack.c.b16 %v642, %v642
    %v707 = vpack.c.b16 %v643, %v643
    %v708 = vpack.c.b16 %v644, %v644
    %v709 = vpack.c.b16 %v645, %v645
    %v710 = vpack.c.b16 %v646, %v646
    %v711 = vpack.c.b16 %v647, %v647
    %v712 = vpack.c.b16 %v648, %v648
    %v713 = vpack.c.b16 %v649, %v649
    %v714 = vpack.c.b16 %v650, %v650
    %v715 = vpack.c.b16 %v651, %v651
    %v716 = vpack.c.b16 %v652, %v652
    %v717 = vpack.c.b16 %v653, %v653
    %782 = vst [vmem:[%s2] sm:$0xf] %v654
    %783 = vst [vmem:[%s2 + $0x4] sm:$0xf] %v655
    %784 = vst [vmem:[%s2 + $0x8] sm:$0xf] %v656
    %785 = vst [vmem:[%s2 + $0xc] sm:$0xf] %v657
    %786 = vst [vmem:[%s2 + $0x10] sm:$0xf] %v658
    %787 = vst [vmem:[%s2 + $0x14] sm:$0xf] %v659
    %788 = vst [vmem:[%s2 + $0x18] sm:$0xf] %v660
    %789 = vst [vmem:[%s2 + $0x1c] sm:$0xf] %v661
    %790 = vst [vmem:[%s2 + $0x20] sm:$0xf] %v662
    %791 = vst [vmem:[%s2 + $0x24] sm:$0xf] %v663
    %792 = vst [vmem:[%s2 + $0x28] sm:$0xf] %v664
    %793 = vst [vmem:[%s2 + $0x2c] sm:$0xf] %v665
    %794 = vst [vmem:[%s2 + $0x30] sm:$0xf] %v666
    %795 = vst [vmem:[%s2 + $0x34] sm:$0xf] %v667
    %796 = vst [vmem:[%s2 + $0x38] sm:$0xf] %v668
    %797 = vst [vmem:[%s2 + $0x3c] sm:$0xf] %v669
    %798 = vst [vmem:[%s2 + $0x40] sm:$0xf] %v670
    %799 = vst [vmem:[%s2 + $0x44] sm:$0xf] %v671
    %800 = vst [vmem:[%s2 + $0x48] sm:$0xf] %v672
    %801 = vst [vmem:[%s2 + $0x4c] sm:$0xf] %v673
    %802 = vst [vmem:[%s2 + $0x50] sm:$0xf] %v674
    %803 = vst [vmem:[%s2 + $0x54] sm:$0xf] %v675
    %804 = vst [vmem:[%s2 + $0x58] sm:$0xf] %v676
    %805 = vst [vmem:[%s2 + $0x5c] sm:$0xf] %v677
    %806 = vst [vmem:[%s2 + $0x60] sm:$0xf] %v678
    %807 = vst [vmem:[%s2 + $0x64] sm:$0xf] %v679
    %808 = vst [vmem:[%s2 + $0x68] sm:$0xf] %v680
    %809 = vst [vmem:[%s2 + $0x6c] sm:$0xf] %v681
    %810 = vst [vmem:[%s2 + $0x70] sm:$0xf] %v682
    %811 = vst [vmem:[%s2 + $0x74] sm:$0xf] %v683
    %812 = vst [vmem:[%s2 + $0x78] sm:$0xf] %v684
    %813 = vst [vmem:[%s2 + $0x7c] sm:$0xf] %v685
    %814 = vst [vmem:[%s2 + $0x80] sm:$0xf] %v686
    %815 = vst [vmem:[%s2 + $0x84] sm:$0xf] %v687
    %816 = vst [vmem:[%s2 + $0x88] sm:$0xf] %v688
    %817 = vst [vmem:[%s2 + $0x8c] sm:$0xf] %v689
    %818 = vst [vmem:[%s2 + $0x90] sm:$0xf] %v690
    %819 = vst [vmem:[%s2 + $0x94] sm:$0xf] %v691
    %820 = vst [vmem:[%s2 + $0x98] sm:$0xf] %v692
    %821 = vst [vmem:[%s2 + $0x9c] sm:$0xf] %v693
    %822 = vst [vmem:[%s2 + $0xa0] sm:$0xf] %v694
    %823 = vst [vmem:[%s2 + $0xa4] sm:$0xf] %v695
    %824 = vst [vmem:[%s2 + $0xa8] sm:$0xf] %v696
    %825 = vst [vmem:[%s2 + $0xac] sm:$0xf] %v697
    %826 = vst [vmem:[%s2 + $0xb0] sm:$0xf] %v698
    %827 = vst [vmem:[%s2 + $0xb4] sm:$0xf] %v699
    %828 = vst [vmem:[%s2 + $0xb8] sm:$0xf] %v700
    %829 = vst [vmem:[%s2 + $0xbc] sm:$0xf] %v701
    %830 = vst [vmem:[%s2 + $0xc0] sm:$0xf] %v702
    %831 = vst [vmem:[%s2 + $0xc4] sm:$0xf] %v703
    %832 = vst [vmem:[%s2 + $0xc8] sm:$0xf] %v704
    %833 = vst [vmem:[%s2 + $0xcc] sm:$0xf] %v705
    %834 = vst [vmem:[%s2 + $0xd0] sm:$0xf] %v706
    %835 = vst [vmem:[%s2 + $0xd4] sm:$0xf] %v707
    %836 = vst [vmem:[%s2 + $0xd8] sm:$0xf] %v708
    %837 = vst [vmem:[%s2 + $0xdc] sm:$0xf] %v709
    %838 = vst [vmem:[%s2 + $0xe0] sm:$0xf] %v710
    %839 = vst [vmem:[%s2 + $0xe4] sm:$0xf] %v711
    %840 = vst [vmem:[%s2 + $0xe8] sm:$0xf] %v712
    %841 = vst [vmem:[%s2 + $0xec] sm:$0xf] %v713
    %842 = vst [vmem:[%s2 + $0xf0] sm:$0xf] %v714
    %843 = vst [vmem:[%s2 + $0xf4] sm:$0xf] %v715
    %844 = vst [vmem:[%s2 + $0xf8] sm:$0xf] %v716
    %845 = vst [vmem:[%s2 + $0xfc] sm:$0xf] %v717
    %v846 = vadd.f32 %v272, %v275
    %v847 = vadd.f32 %v846, %v280
    %v848 = vadd.f32 %v847, %v283
    %v849 = vadd.f32 %v848, %v288
    %v850 = vadd.f32 %v849, %v291
    %v851 = vadd.f32 %v850, %v296
    %v852 = vadd.f32 %v851, %v299
    %v853 = vadd.f32 %v852, %v304
    %v854 = vadd.f32 %v853, %v307
    %v855 = vadd.f32 %v854, %v312
    %v856 = vadd.f32 %v855, %v315
    %v857 = vadd.f32 %v856, %v320
    %v858 = vadd.f32 %v857, %v323
    %v859 = vadd.f32 %v858, %v328
    %v860 = vadd.f32 %v859, %v331
    %v861 = vadd.f32 %v860, %v336
    %v862 = vadd.f32 %v861, %v339
    %v863 = vadd.f32 %v862, %v344
    %v864 = vadd.f32 %v863, %v347
    %v865 = vadd.f32 %v864, %v352
    %v866 = vadd.f32 %v865, %v355
    %v867 = vadd.f32 %v866, %v360
    %v868 = vadd.f32 %v867, %v363
    %v869 = vadd.f32 %v868, %v368
    %v870 = vadd.f32 %v869, %v371
    %v871 = vadd.f32 %v870, %v376
    %v872 = vadd.f32 %v871, %v379
    %v873 = vadd.f32 %v872, %v384
    %v874 = vadd.f32 %v873, %v387
    %v875 = vadd.f32 %v874, %v392
    %v876 = vadd.f32 %v875, %v395
    %v877 = vadd.f32 %v876, %v400
    %v878 = vadd.f32 %v877, %v403
    %v879 = vadd.f32 %v878, %v408
    %v880 = vadd.f32 %v879, %v411
    %v881 = vadd.f32 %v880, %v416
    %v882 = vadd.f32 %v881, %v419
    %v883 = vadd.f32 %v882, %v424
    %v884 = vadd.f32 %v883, %v427
    %v885 = vadd.f32 %v884, %v432
    %v886 = vadd.f32 %v885, %v435
    %v887 = vadd.f32 %v886, %v440
    %v888 = vadd.f32 %v887, %v443
    %v889 = vadd.f32 %v888, %v448
    %v890 = vadd.f32 %v889, %v451
    %v891 = vadd.f32 %v890, %v456
    %v892 = vadd.f32 %v891, %v459
    %v893 = vadd.f32 %v892, %v464
    %v894 = vadd.f32 %v893, %v467
    %v895 = vadd.f32 %v894, %v472
    %v896 = vadd.f32 %v895, %v475
    %v897 = vadd.f32 %v896, %v480
    %v898 = vadd.f32 %v897, %v483
    %v899 = vadd.f32 %v898, %v488
    %v900 = vadd.f32 %v899, %v491
    %v901 = vadd.f32 %v900, %v496
    %v902 = vadd.f32 %v901, %v499
    %v903 = vadd.f32 %v902, %v504
    %v904 = vadd.f32 %v903, %v507
    %v905 = vadd.f32 %v904, %v512
    %v906 = vadd.f32 %v905, %v515
    %v907 = vadd.f32 %v906, %v520
    %v908 = vadd.f32 %v907, %v523
    %v909 = vrot.slane %v908, 4
    %v910 = vadd.f32 %v908, %v909
    %v911 = vrot.slane %v910, 2
    %v912 = vadd.f32 %v910, %v911
    %v913 = vrot.slane %v912, 1
    %v914 = vadd.f32 %v912, %v913
    %v915 = vmul.f32 %v272, %v272
    %v916 = vmul.f32 %v275, %v275
    %v917 = vmul.f32 %v280, %v280
    %v918 = vmul.f32 %v283, %v283
    %v919 = vmul.f32 %v288, %v288
    %v920 = vmul.f32 %v291, %v291
    %v921 = vmul.f32 %v296, %v296
    %v922 = vmul.f32 %v299, %v299
    %v923 = vmul.f32 %v304, %v304
    %v924 = vmul.f32 %v307, %v307
    %v925 = vmul.f32 %v312, %v312
    %v926 = vmul.f32 %v315, %v315
    %v927 = vmul.f32 %v320, %v320
    %v928 = vmul.f32 %v323, %v323
    %v929 = vmul.f32 %v328, %v328
    %v930 = vmul.f32 %v331, %v331
    %v931 = vmul.f32 %v336, %v336
    %v932 = vmul.f32 %v339, %v339
    %v933 = vmul.f32 %v344, %v344
    %v934 = vmul.f32 %v347, %v347
    %v935 = vmul.f32 %v352, %v352
    %v936 = vmul.f32 %v355, %v355
    %v937 = vmul.f32 %v360, %v360
    %v938 = vmul.f32 %v363, %v363
    %v939 = vmul.f32 %v368, %v368
    %v940 = vmul.f32 %v371, %v371
    %v941 = vmul.f32 %v376, %v376
    %v942 = vmul.f32 %v379, %v379
    %v943 = vmul.f32 %v384, %v384
    %v944 = vmul.f32 %v387, %v387
    %v945 = vmul.f32 %v392, %v392
    %v946 = vmul.f32 %v395, %v395
    %v947 = vmul.f32 %v400, %v400
    %v948 = vmul.f32 %v403, %v403
    %v949 = vmul.f32 %v408, %v408
    %v950 = vmul.f32 %v411, %v411
    %v951 = vmul.f32 %v416, %v416
    %v952 = vmul.f32 %v419, %v419
    %v953 = vmul.f32 %v424, %v424
    %v954 = vmul.f32 %v427, %v427
    %v955 = vmul.f32 %v432, %v432
    %v956 = vmul.f32 %v435, %v435
    %v957 = vmul.f32 %v440, %v440
    %v958 = vmul.f32 %v443, %v443
    %v959 = vmul.f32 %v448, %v448
    %v960 = vmul.f32 %v451, %v451
    %v961 = vmul.f32 %v456, %v456
    %v962 = vmul.f32 %v459, %v459
    %v963 = vmul.f32 %v464, %v464
    %v964 = vmul.f32 %v467, %v467
    %v965 = vmul.f32 %v472, %v472
    %v966 = vmul.f32 %v475, %v475
    %v967 = vmul.f32 %v480, %v480
    %v968 = vmul.f32 %v483, %v483
    %v969 = vmul.f32 %v488, %v488
    %v970 = vmul.f32 %v491, %v491
    %v971 = vmul.f32 %v496, %v496
    %v972 = vmul.f32 %v499, %v499
    %v973 = vmul.f32 %v504, %v504
    %v974 = vmul.f32 %v507, %v507
    %v975 = vmul.f32 %v512, %v512
    %v976 = vmul.f32 %v515, %v515
    %v977 = vmul.f32 %v520, %v520
    %v978 = vmul.f32 %v523, %v523
    %v979 = vadd.f32 %v915, %v916
    %v980 = vadd.f32 %v979, %v917
    %v981 = vadd.f32 %v980, %v918
    %v982 = vadd.f32 %v981, %v919
    %v983 = vadd.f32 %v982, %v920
    %v984 = vadd.f32 %v983, %v921
    %v985 = vadd.f32 %v984, %v922
    %v986 = vadd.f32 %v985, %v923
    %v987 = vadd.f32 %v986, %v924
    %v988 = vadd.f32 %v987, %v925
    %v989 = vadd.f32 %v988, %v926
    %v990 = vadd.f32 %v989, %v927
    %v991 = vadd.f32 %v990, %v928
    %v992 = vadd.f32 %v991, %v929
    %v993 = vadd.f32 %v992, %v930
    %v994 = vadd.f32 %v993, %v931
    %v995 = vadd.f32 %v994, %v932
    %v996 = vadd.f32 %v995, %v933
    %v997 = vadd.f32 %v996, %v934
    %v998 = vadd.f32 %v997, %v935
    %v999 = vadd.f32 %v998, %v936
    %v1000 = vadd.f32 %v999, %v937
    %v1001 = vadd.f32 %v1000, %v938
    %v1002 = vadd.f32 %v1001, %v939
    %v1003 = vadd.f32 %v1002, %v940
    %v1004 = vadd.f32 %v1003, %v941
    %v1005 = vadd.f32 %v1004, %v942
    %v1006 = vadd.f32 %v1005, %v943
    %v1007 = vadd.f32 %v1006, %v944
    %v1008 = vadd.f32 %v1007, %v945
    %v1009 = vadd.f32 %v1008, %v946
    %v1010 = vadd.f32 %v1009, %v947
    %v1011 = vadd.f32 %v1010, %v948
    %v1012 = vadd.f32 %v1011, %v949
    %v1013 = vadd.f32 %v1012, %v950
    %v1014 = vadd.f32 %v1013, %v951
    %v1015 = vadd.f32 %v1014, %v952
    %v1016 = vadd.f32 %v1015, %v953
    %v1017 = vadd.f32 %v1016, %v954
    %v1018 = vadd.f32 %v1017, %v955
    %v1019 = vadd.f32 %v1018, %v956
    %v1020 = vadd.f32 %v1019, %v957
    %v1021 = vadd.f32 %v1020, %v958
    %v1022 = vadd.f32 %v1021, %v959
    %v1023 = vadd.f32 %v1022, %v960
    %v1024 = vadd.f32 %v1023, %v961
    %v1025 = vadd.f32 %v1024, %v962
    %v1026 = vadd.f32 %v1025, %v963
    %v1027 = vadd.f32 %v1026, %v964
    %v1028 = vadd.f32 %v1027, %v965
    %v1029 = vadd.f32 %v1028, %v966
    %v1030 = vadd.f32 %v1029, %v967
    %v1031 = vadd.f32 %v1030, %v968
    %v1032 = vadd.f32 %v1031, %v969
    %v1033 = vadd.f32 %v1032, %v970
    %v1034 = vadd.f32 %v1033, %v971
    %v1035 = vadd.f32 %v1034, %v972
    %v1036 = vadd.f32 %v1035, %v973
    %v1037 = vadd.f32 %v1036, %v974
    %v1038 = vadd.f32 %v1037, %v975
    %v1039 = vadd.f32 %v1038, %v976
    %v1040 = vadd.f32 %v1039, %v977
    %v1041 = vadd.f32 %v1040, %v978
    %v1042 = vrot.slane %v1041, 4
    %v1043 = vadd.f32 %v1041, %v1042
    %v1044 = vrot.slane %v1043, 2
    %v1045 = vadd.f32 %v1043, %v1044
    %v1046 = vrot.slane %v1045, 1
    %v1047 = vadd.f32 %v1045, %v1046
    %vm1048 = vcmask 1040384
    %v1049 = vsel %vm1048, %v914, %v1047
    %1050 = vst [vmem:[%s3] sm:$0x3] %v1049
    // Predicated region
    $region14: #{bottleneck_forward_nhwc.4} parent=1 // pred_check
      _
    $region15: #{bottleneck_forward_nhwc.4} parent=1 // pred_check_branch
      %1052 = sbr.rel (0) target = $region17
    $region16: #{bottleneck_forward_nhwc.4} parent=1 // pred_region
      _
    $region17: #{bottleneck_forward_nhwc.4} parent=1 // pred_fallthru
      _
    // Predicated region
    $region18: #{bottleneck_forward_nhwc.4} parent=1 // pred_check
      _
    $region19: #{bottleneck_forward_nhwc.4} parent=1 // pred_check_branch
      %1054 = sbr.rel (0) target = $region21
    $region20: #{bottleneck_forward_nhwc.4} parent=1 // pred_region
      _
    $region21: #{bottleneck_forward_nhwc.4} parent=1 // pred_fallthru
      _
    // Predicated region
    $region22: #{bottleneck_forward_nhwc.4} parent=1 // pred_check
      _
    $region23: #{bottleneck_forward_nhwc.4} parent=1 // pred_check_branch
      %1056 = sbr.rel (0) target = $region25
    $region24: #{bottleneck_forward_nhwc.4} parent=1 // pred_region
      _
    $region25: #{bottleneck_forward_nhwc.4} parent=1 // pred_fallthru
      _
    // Predicated region
    $region26: #{bottleneck_forward_nhwc.4} parent=1 // pred_check
      _
    $region27: #{bottleneck_forward_nhwc.4} parent=1 // pred_check_branch
      %1058 = sbr.rel (0) target = $region29
    $region28: #{bottleneck_forward_nhwc.4} parent=1 // pred_region
      _
    $region29: #{bottleneck_forward_nhwc.4} parent=1 // pred_fallthru
      _
    %1059 = vsyncpa [#allocation3], 1

// kernel: bottleneck_forward_nhwc.7
$region0: #{bottleneck_forward_nhwc.7}
  #allocation0 [shape = 'u32[]', space=smem, size = 0x4, offset = 0x4, fixed_abs, tag = 'smem constant byte address 0x4 - core index']
  #allocation1 [shape = 'u32[144,128]{1,0:T(1,128)}', space=vmem, size = 0x12000, scoped, tag = 'internal scratch']
  %s0 = inlined_call_operand.vmem [shape: bf16[128,128], index: 0, kind: input, shape index: {}]
  %s1 = inlined_call_operand.vmem [shape: f32[128,128], index: 1, kind: input, shape index: {}]
  %s2 = inlined_call_operand.vmem [shape: f32[1,128], index: 2, kind: input, shape index: {}]
  %s3 = inlined_call_operand.vmem [shape: f32[1,128], index: 3, kind: input, shape index: {}]
  %s4 = inlined_call_operand.vmem [shape: f32[128,128], index: 4, kind: output, shape index: {}]
  %s5 = sld [smem:[#allocation0]]
  $region26: #{bottleneck_forward_nhwc.7} parent=0
    _
  %s7 = ssub.s32 1, %s5
  %s8 = scalar_select 0, %s7, %s5
  // Predicated region
  $region2: #{bottleneck_forward_nhwc.7} parent=0 // pred_check
    _
  $region3: #{bottleneck_forward_nhwc.7} parent=0 // pred_check_branch
    %10 = sbr.rel (0) target = $region5
  $region4: #{bottleneck_forward_nhwc.7} parent=0 // pred_region
    _
  $region5: #{bottleneck_forward_nhwc.7} parent=0 // pred_fallthru
    _
  // Predicated region
  $region6: #{bottleneck_forward_nhwc.7} parent=0 // pred_check
    _
  $region7: #{bottleneck_forward_nhwc.7} parent=0 // pred_check_branch
    %12 = sbr.rel (0) target = $region9
  $region8: #{bottleneck_forward_nhwc.7} parent=0 // pred_region
    _
  $region9: #{bottleneck_forward_nhwc.7} parent=0 // pred_fallthru
    _
  // Predicated region
  $region10: #{bottleneck_forward_nhwc.7} parent=0 // pred_check
    _
  $region11: #{bottleneck_forward_nhwc.7} parent=0 // pred_check_branch
    %14 = sbr.rel (0) target = $region13
  $region12: #{bottleneck_forward_nhwc.7} parent=0 // pred_region
    _
  $region13: #{bottleneck_forward_nhwc.7} parent=0 // pred_fallthru
    _
  // Predicated region
  $region14: #{bottleneck_forward_nhwc.7} parent=0 // pred_check
    _
  $region15: #{bottleneck_forward_nhwc.7} parent=0 // pred_check_branch
    %16 = sbr.rel (0) target = $region17
  $region16: #{bottleneck_forward_nhwc.7} parent=0 // pred_region
    _
  $region17: #{bottleneck_forward_nhwc.7} parent=0 // pred_fallthru
    _
  %v17 = vld [vmem:[%s0] sm:$0xf]
  %v18 = vld [vmem:[%s0 + $0x4] sm:$0xf]
  %v19 = vld [vmem:[%s0 + $0x8] sm:$0xf]
  %v20 = vld [vmem:[%s0 + $0xc] sm:$0xf]
  %v21 = vld [vmem:[%s0 + $0x10] sm:$0xf]
  %v22 = vld [vmem:[%s0 + $0x14] sm:$0xf]
  %v23 = vld [vmem:[%s0 + $0x18] sm:$0xf]
  %v24 = vld [vmem:[%s0 + $0x1c] sm:$0xf]
  %v25 = vld [vmem:[%s0 + $0x20] sm:$0xf]
  %v26 = vld [vmem:[%s0 + $0x24] sm:$0xf]
  %v27 = vld [vmem:[%s0 + $0x28] sm:$0xf]
  %v28 = vld [vmem:[%s0 + $0x2c] sm:$0xf]
  %v29 = vld [vmem:[%s0 + $0x30] sm:$0xf]
  %v30 = vld [vmem:[%s0 + $0x34] sm:$0xf]
  %v31 = vld [vmem:[%s0 + $0x38] sm:$0xf]
  %v32 = vld [vmem:[%s0 + $0x3c] sm:$0xf]
  %v33 = vunpack.c.l.bf16 %v17
  %v34 = vunpack.c.l.bf16 %v18
  %v35 = vunpack.c.l.bf16 %v19
  %v36 = vunpack.c.l.bf16 %v20
  %v37 = vunpack.c.l.bf16 %v21
  %v38 = vunpack.c.l.bf16 %v22
  %v39 = vunpack.c.l.bf16 %v23
  %v40 = vunpack.c.l.bf16 %v24
  %v41 = vunpack.c.l.bf16 %v25
  %v42 = vunpack.c.l.bf16 %v26
  %v43 = vunpack.c.l.bf16 %v27
  %v44 = vunpack.c.l.bf16 %v28
  %v45 = vunpack.c.l.bf16 %v29
  %v46 = vunpack.c.l.bf16 %v30
  %v47 = vunpack.c.l.bf16 %v31
  %v48 = vunpack.c.l.bf16 %v32
  %v49 = vld [vmem:[%s2] sm:$0x1]
  %v51 = vlaneseq
  %v52 = vshrl.u32 %v51, 7
  %v53 = vsub.s32 0, %v52
  %v54 = vrot.slane %v49, %v53
  %v56 = vmul.f32 %v33, %v54
  %v57 = vmul.f32 %v34, %v54
  %v58 = vmul.f32 %v35, %v54
  %v59 = vmul.f32 %v36, %v54
  %v60 = vmul.f32 %v37, %v54
  %v61 = vmul.f32 %v38, %v54
  %v62 = vmul.f32 %v39, %v54
  %v63 = vmul.f32 %v40, %v54
  %v64 = vmul.f32 %v41, %v54
  %v65 = vmul.f32 %v42, %v54
  %v66 = vmul.f32 %v43, %v54
  %v67 = vmul.f32 %v44, %v54
  %v68 = vmul.f32 %v45, %v54
  %v69 = vmul.f32 %v46, %v54
  %v70 = vmul.f32 %v47, %v54
  %v71 = vmul.f32 %v48, %v54
  %v72 = vld [vmem:[%s3] sm:$0x1]
  %v74 = vlaneseq
  %v75 = vshrl.u32 %v74, 7
  %v76 = vsub.s32 0, %v75
  %v77 = vrot.slane %v72, %v76
  %v79 = vadd.f32 %v56, %v77
  %v80 = vadd.f32 %v57, %v77
  %v81 = vadd.f32 %v58, %v77
  %v82 = vadd.f32 %v59, %v77
  %v83 = vadd.f32 %v60, %v77
  %v84 = vadd.f32 %v61, %v77
  %v85 = vadd.f32 %v62, %v77
  %v86 = vadd.f32 %v63, %v77
  %v87 = vadd.f32 %v64, %v77
  %v88 = vadd.f32 %v65, %v77
  %v89 = vadd.f32 %v66, %v77
  %v90 = vadd.f32 %v67, %v77
  %v91 = vadd.f32 %v68, %v77
  %v92 = vadd.f32 %v69, %v77
  %v93 = vadd.f32 %v70, %v77
  %v94 = vadd.f32 %v71, %v77
  %v95 = vld [vmem:[%s1] sm:$0xff]
  %v96 = vld [vmem:[%s1 + $0x8] sm:$0xff]
  %v97 = vld [vmem:[%s1 + $0x10] sm:$0xff]
  %v98 = vld [vmem:[%s1 + $0x18] sm:$0xff]
  %v99 = vld [vmem:[%s1 + $0x20] sm:$0xff]
  %v100 = vld [vmem:[%s1 + $0x28] sm:$0xff]
  %v101 = vld [vmem:[%s1 + $0x30] sm:$0xff]
  %v102 = vld [vmem:[%s1 + $0x38] sm:$0xff]
  %v103 = vld [vmem:[%s1 + $0x40] sm:$0xff]
  %v104 = vld [vmem:[%s1 + $0x48] sm:$0xff]
  %v105 = vld [vmem:[%s1 + $0x50] sm:$0xff]
  %v106 = vld [vmem:[%s1 + $0x58] sm:$0xff]
  %v107 = vld [vmem:[%s1 + $0x60] sm:$0xff]
  %v108 = vld [vmem:[%s1 + $0x68] sm:$0xff]
  %v109 = vld [vmem:[%s1 + $0x70] sm:$0xff]
  %v110 = vld [vmem:[%s1 + $0x78] sm:$0xff]
  %v111 = vadd.f32 %v79, %v95
  %v112 = vadd.f32 %v80, %v96
  %v113 = vadd.f32 %v81, %v97
  %v114 = vadd.f32 %v82, %v98
  %v115 = vadd.f32 %v83, %v99
  %v116 = vadd.f32 %v84, %v100
  %v117 = vadd.f32 %v85, %v101
  %v118 = vadd.f32 %v86, %v102
  %v119 = vadd.f32 %v87, %v103
  %v120 = vadd.f32 %v88, %v104
  %v121 = vadd.f32 %v89, %v105
  %v122 = vadd.f32 %v90, %v106
  %v123 = vadd.f32 %v91, %v107
  %v124 = vadd.f32 %v92, %v108
  %v125 = vadd.f32 %v93, %v109
  %v126 = vadd.f32 %v94, %v110
  %v127 = vmax.f32 %v111, 0.0
  %v128 = vmax.f32 %v112, 0.0
  %v129 = vmax.f32 %v113, 0.0
  %v130 = vmax.f32 %v114, 0.0
  %v131 = vmax.f32 %v115, 0.0
  %v132 = vmax.f32 %v116, 0.0
  %v133 = vmax.f32 %v117, 0.0
  %v134 = vmax.f32 %v118, 0.0
  %v135 = vmax.f32 %v119, 0.0
  %v136 = vmax.f32 %v120, 0.0
  %v137 = vmax.f32 %v121, 0.0
  %v138 = vmax.f32 %v122, 0.0
  %v139 = vmax.f32 %v123, 0.0
  %v140 = vmax.f32 %v124, 0.0
  %v141 = vmax.f32 %v125, 0.0
  %v142 = vmax.f32 %v126, 0.0
  %143 = vst [vmem:[%s4] sm:$0xff] %v127
  %144 = vst [vmem:[%s4 + $0x8] sm:$0xff] %v128
  %145 = vst [vmem:[%s4 + $0x10] sm:$0xff] %v129
  %146 = vst [vmem:[%s4 + $0x18] sm:$0xff] %v130
  %147 = vst [vmem:[%s4 + $0x20] sm:$0xff] %v131
  %148 = vst [vmem:[%s4 + $0x28] sm:$0xff] %v132
  %149 = vst [vmem:[%s4 + $0x30] sm:$0xff] %v133
  %150 = vst [vmem:[%s4 + $0x38] sm:$0xff] %v134
  %151 = vst [vmem:[%s4 + $0x40] sm:$0xff] %v135
  %152 = vst [vmem:[%s4 + $0x48] sm:$0xff] %v136
  %153 = vst [vmem:[%s4 + $0x50] sm:$0xff] %v137
  %154 = vst [vmem:[%s4 + $0x58] sm:$0xff] %v138
  %155 = vst [vmem:[%s4 + $0x60] sm:$0xff] %v139
  %156 = vst [vmem:[%s4 + $0x68] sm:$0xff] %v140
  %157 = vst [vmem:[%s4 + $0x70] sm:$0xff] %v141
  %158 = vst [vmem:[%s4 + $0x78] sm:$0xff] %v142
  // Predicated region
  $region18: #{bottleneck_forward_nhwc.7} parent=0 // pred_check
    _
  $region19: #{bottleneck_forward_nhwc.7} parent=0 // pred_check_branch
    %160 = sbr.rel (0) target = $region21
  $region20: #{bottleneck_forward_nhwc.7} parent=0 // pred_region
    _
  $region21: #{bottleneck_forward_nhwc.7} parent=0 // pred_fallthru
    _
  // Predicated region
  $region22: #{bottleneck_forward_nhwc.7} parent=0 // pred_check
    _
  $region23: #{bottleneck_forward_nhwc.7} parent=0 // pred_check_branch
    %162 = sbr.rel (0) target = $region25
  $region24: #{bottleneck_forward_nhwc.7} parent=0 // pred_region
    _
  $region25: #{bottleneck_forward_nhwc.7} parent=0 // pred_fallthru
    _

// kernel: bottleneck_forward_nhwc.5
$region0: #{bottleneck_forward_nhwc.5}
  #allocation0 [shape = 'u32[]', space=smem, size = 0x4, offset = 0x4, fixed_abs, tag = 'smem constant byte address 0x4 - core index']
  #allocation1 [shape = 'u32[144,128]{1,0:T(1,128)}', space=vmem, size = 0x12000, scoped, tag = 'internal scratch']
  %s0 = inlined_call_operand.vmem [shape: bf16[2,16,16,128], index: 0, kind: input, shape index: {}, may-alias: {0,1,2}]
  %s1 = inlined_call_operand.vmem [shape: bf16[2,16,16,128], index: 1, kind: input, shape index: {}, may-alias: {0,1,2}]
  %s2 = inlined_call_operand.vmem [shape: bf16[2,16,16,128], index: 2, kind: input, shape index: {}, may-alias: {0,1,2}]
  %s3 = inlined_call_operand.vmem [shape: f32[1,128], index: 3, kind: input, shape index: {}]
  %s4 = inlined_call_operand.vmem [shape: f32[1,128], index: 4, kind: input, shape index: {}]
  %s5 = inlined_call_operand.vmem [shape: bf16[3,384,128], index: 5, kind: input, shape index: {}]
  %s6 = inlined_call_operand.vmem [shape: bf16[2,16,16,128], index: 6, kind: output, shape index: {0}]
  %s7 = inlined_call_operand.vmem [shape: f32[2,2,2,128], index: 7, kind: output, shape index: {1}]
  %8 = xla_tuple %s6, %s7
  %s9 = sld [smem:[#allocation0]]
  $region65: #{bottleneck_forward_nhwc.5} parent=0
    _
  %s11 = ssub.s32 1, %s9
  %s12 = scalar_select 0, %s11, %s9
  loop: start=0, step=1, limit=6
  $region2: #{bottleneck_forward_nhwc.5} parent=0 // loop_pre_header
    _
  $region3: #{bottleneck_forward_nhwc.5} parent=0 // loop_header
    %s14 = sphi 0, %s18
    %p15 = scmp.ge.s32.totalorder %s14, 6
    %s21 = sphi 0, %s33
    %s22 = sphi 0, %s29
    %s23 = sphi 0, %s21
    %s24 = sphi 0, %s22
    %s25 = sphi 0, %s23
    %s26 = sphi 0, %s24
    %s38 = sphi 0, %s40
    %s41 = sphi 0, %s38
    %s42 = sphi 0, %s41
    %s58 = sphi 0, %s42
    %s74 = sphi 0, %s76
    %s77 = sphi 0, %s74
    %s78 = sphi 0, %s77
    %s94 = sphi 0, %s78
    %s110 = sphi 0, %s112
    %s113 = sphi 0, %s110
    %s114 = sphi 0, %s113
    %s130 = sphi 0, %s114
    %s134 = sphi 0, %s134
    %s136 = sphi 0, %s134
    %s137 = sphi 0, %s136
    %s151 = sphi 0, %s137
    %s155 = sphi 0, %s155
    %s157 = sphi 0, %s155
    %s158 = sphi 0, %s157
    %s172 = sphi 0, %s158
    %s176 = sphi 0, %s176
    %s178 = sphi 0, %s176
    %s179 = sphi 0, %s178
    %s193 = sphi 0, %s179
    %s201 = sphi 0, %s203
    %s204 = sphi 0, %s201
    %s205 = sphi 0, %s204
    %s221 = sphi 0, %s205
    %s229 = sphi 0, %s231
    %s232 = sphi 0, %s229
    %s233 = sphi 0, %s232
    %s249 = sphi 0, %s233
  $region4: #{bottleneck_forward_nhwc.5} parent=0 // loop_header_branch
    %17 = sbr.rel (%p15) target = $region8
  $region5: #{bottleneck_forward_nhwc.5} parent=0 // loop_body
    %s19 = ssub.s32 %s14, 1
    %s20 = ssub.s32 %s14, 2
    %s27 = sadd.s32 1, %s22
    %p28 = scmp.ge.s32.totalorder %s27, 2
    %s29 = scalar_select %p28, 0, %s27
    %s30 = sadd.s32 1, %s21
    %s31 = scalar_select %p28, %s30, %s21
    %p32 = scmp.ge.s32.totalorder %s31, 2
    %s33 = scalar_select %p32, 0, %s31
    %s34 = ssub.s32 %s21, %s33
    %s35 = ssub.s32 %s22, %s29
    %s36 = sor.u32 %s34, %s35
    %p37 = scmp.eq.s32.totalorder %s36, 0
    %s39 = sadd.s32 %s38, 1
    %s40 = scalar_select %p37, %s38, %s39
    %p43 = pneg %p37
    %p44 = scmp.eq.s32.totalorder %s14, 3
    %p45 = por %p43, %p44
    %p46 = scmp.ne.s32.totalorder %s38, %s41
    %p47 = scmp.eq.s32.totalorder %s14, 0
    %p48 = por %p46, %p47
    %p49 = scmp.ne.s32.totalorder %s38, %s41
    %p50 = scmp.eq.s32.totalorder %s19, 3
    %p51 = por %p49, %p50
    %p52 = scmp.ne.s32.totalorder %s41, %s42
    %p53 = scmp.eq.s32.totalorder %s19, 0
    %p54 = por %p52, %p53
    %p55 = scmp.ne.s32.totalorder %s41, %s42
    %p56 = scmp.eq.s32.totalorder %s20, 3
    %p57 = por %p55, %p56
    %p59 = scmp.ne.s32.totalorder %s42, %s58
    %p60 = scmp.eq.s32.totalorder %s20, 0
    %p61 = por %p59, %p60
    %s62 = smul.u32 %s22, 8
    %s63 = ssub.s32 %s62, 1
    %p64 = scmp.gt.s32.totalorder %s63, 0
    %s65 = scalar_select %p64, %s63, 0
    %s66 = smul.u32 %s29, 8
    %s67 = ssub.s32 %s66, 1
    %p68 = scmp.gt.s32.totalorder %s67, 0
    %s69 = scalar_select %p68, %s67, 0
    %s70 = ssub.s32 %s21, %s33
    %s71 = ssub.s32 %s65, %s69
    %s72 = sor.u32 %s70, %s71
    %p73 = scmp.eq.s32.totalorder %s72, 0
    %s75 = sadd.s32 %s74, 1
    %s76 = scalar_select %p73, %s74, %s75
    %p79 = pneg %p73
    %p80 = scmp.eq.s32.totalorder %s14, 3
    %p81 = por %p79, %p80
    %p82 = scmp.ne.s32.totalorder %s74, %s77
    %p83 = scmp.eq.s32.totalorder %s14, 0
    %p84 = por %p82, %p83
    %p85 = scmp.ne.s32.totalorder %s74, %s77
    %p86 = scmp.eq.s32.totalorder %s19, 3
    %p87 = por %p85, %p86
    %p88 = scmp.ne.s32.totalorder %s77, %s78
    %p89 = scmp.eq.s32.totalorder %s19, 0
    %p90 = por %p88, %p89
    %p91 = scmp.ne.s32.totalorder %s77, %s78
    %p92 = scmp.eq.s32.totalorder %s20, 3
    %p93 = por %p91, %p92
    %p95 = scmp.ne.s32.totalorder %s78, %s94
    %p96 = scmp.eq.s32.totalorder %s20, 0
    %p97 = por %p95, %p96
    %s98 = sadd.s32 %s22, 1
    %s99 = smul.u32 %s98, 8
    %p100 = scmp.lt.s32.totalorder %s99, 15
    %s101 = scalar_select %p100, %s99, 15
    %s102 = sadd.s32 %s29, 1
    %s103 = smul.u32 %s102, 8
    %p104 = scmp.lt.s32.totalorder %s103, 15
    %s105 = scalar_select %p104, %s103, 15
    %s106 = ssub.s32 %s21, %s33
    %s107 = ssub.s32 %s101, %s105
    %s108 = sor.u32 %s106, %s107
    %p109 = scmp.eq.s32.totalorder %s108, 0
    %s111 = sadd.s32 %s110, 1
    %s112 = scalar_select %p109, %s110, %s111
    %p115 = pneg %p109
    %p116 = scmp.eq.s32.totalorder %s14, 3
    %p117 = por %p115, %p116
    %p118 = scmp.ne.s32.totalorder %s110, %s113
    %p119 = scmp.eq.s32.totalorder %s14, 0
    %p120 = por %p118, %p119
    %p121 = scmp.ne.s32.totalorder %s110, %s113
    %p122 = scmp.eq.s32.totalorder %s19, 3
    %p123 = por %p121, %p122
    %p124 = scmp.ne.s32.totalorder %s113, %s114
    %p125 = scmp.eq.s32.totalorder %s19, 0
    %p126 = por %p124, %p125
    %p127 = scmp.ne.s32.totalorder %s113, %s114
    %p128 = scmp.eq.s32.totalorder %s20, 3
    %p129 = por %p127, %p128
    %p131 = scmp.ne.s32.totalorder %s114, %s130
    %p132 = scmp.eq.s32.totalorder %s20, 0
    %p133 = por %p131, %p132
    %s135 = sadd.s32 %s134, 1
    %p138 = scmp.eq.s32.totalorder %s14, 3
    %p139 = scmp.ne.s32.totalorder %s134, %s136
    %p140 = scmp.eq.s32.totalorder %s14, 0
    %p141 = por %p139, %p140
    %p142 = scmp.ne.s32.totalorder %s134, %s136
    %p143 = scmp.eq.s32.totalorder %s19, 3
    %p144 = por %p142, %p143
    %p145 = scmp.ne.s32.totalorder %s136, %s137
    %p146 = scmp.eq.s32.totalorder %s19, 0
    %p147 = por %p145, %p146
    %p148 = scmp.ne.s32.totalorder %s136, %s137
    %p149 = scmp.eq.s32.totalorder %s20, 3
    %p150 = por %p148, %p149
    %p152 = scmp.ne.s32.totalorder %s137, %s151
    %p153 = scmp.eq.s32.totalorder %s20, 0
    %p154 = por %p152, %p153
    %s156 = sadd.s32 %s155, 1
    %p159 = scmp.eq.s32.totalorder %s14, 3
    %p160 = scmp.ne.s32.totalorder %s155, %s157
    %p161 = scmp.eq.s32.totalorder %s14, 0
    %p162 = por %p160, %p161
    %p163 = scmp.ne.s32.totalorder %s155, %s157
    %p164 = scmp.eq.s32.totalorder %s19, 3
    %p165 = por %p163, %p164
    %p166 = scmp.ne.s32.totalorder %s157, %s158
    %p167 = scmp.eq.s32.totalorder %s19, 0
    %p168 = por %p166, %p167
    %p169 = scmp.ne.s32.totalorder %s157, %s158
    %p170 = scmp.eq.s32.totalorder %s20, 3
    %p171 = por %p169, %p170
    %p173 = scmp.ne.s32.totalorder %s158, %s172
    %p174 = scmp.eq.s32.totalorder %s20, 0
    %p175 = por %p173, %p174
    %s177 = sadd.s32 %s176, 1
    %p180 = scmp.eq.s32.totalorder %s14, 3
    %p181 = scmp.ne.s32.totalorder %s176, %s178
    %p182 = scmp.eq.s32.totalorder %s14, 0
    %p183 = por %p181, %p182
    %p184 = scmp.ne.s32.totalorder %s176, %s178
    %p185 = scmp.eq.s32.totalorder %s19, 3
    %p186 = por %p184, %p185
    %p187 = scmp.ne.s32.totalorder %s178, %s179
    %p188 = scmp.eq.s32.totalorder %s19, 0
    %p189 = por %p187, %p188
    %p190 = scmp.ne.s32.totalorder %s178, %s179
    %p191 = scmp.eq.s32.totalorder %s20, 3
    %p192 = por %p190, %p191
    %p194 = scmp.ne.s32.totalorder %s179, %s193
    %p195 = scmp.eq.s32.totalorder %s20, 0
    %p196 = por %p194, %p195
    %s197 = ssub.s32 %s21, %s33
    %s198 = ssub.s32 %s22, %s29
    %s199 = sor.u32 %s197, %s198
    %p200 = scmp.eq.s32.totalorder %s199, 0
    %s202 = sadd.s32 %s201, 1
    %s203 = scalar_select %p200, %s201, %s202
    %p206 = pneg %p200
    %p207 = scmp.eq.s32.totalorder %s14, 3
    %p208 = por %p206, %p207
    %p209 = scmp.ne.s32.totalorder %s201, %s204
    %p210 = scmp.eq.s32.totalorder %s14, 0
    %p211 = por %p209, %p210
    %p212 = scmp.ne.s32.totalorder %s201, %s204
    %p213 = scmp.eq.s32.totalorder %s19, 3
    %p214 = por %p212, %p213
    %p215 = scmp.ne.s32.totalorder %s204, %s205
    %p216 = scmp.eq.s32.totalorder %s19, 0
    %p217 = por %p215, %p216
    %p218 = scmp.ne.s32.totalorder %s204, %s205
    %p219 = scmp.eq.s32.totalorder %s20, 3
    %p220 = por %p218, %p219
    %p222 = scmp.ne.s32.totalorder %s205, %s221
    %p223 = scmp.eq.s32.totalorder %s20, 0
    %p224 = por %p222, %p223
    %s225 = ssub.s32 %s21, %s33
    %s226 = ssub.s32 %s22, %s29
    %s227 = sor.u32 %s225, %s226
    %p228 = scmp.eq.s32.totalorder %s227, 0
    %s230 = sadd.s32 %s229, 1
    %s231 = scalar_select %p228, %s229, %s230
    %p234 = pneg %p228
    %p235 = scmp.eq.s32.totalorder %s14, 3
    %p236 = por %p234, %p235
    %p237 = scmp.ne.s32.totalorder %s229, %s232
    %p238 = scmp.eq.s32.totalorder %s14, 0
    %p239 = por %p237, %p238
    %p240 = scmp.ne.s32.totalorder %s229, %s232
    %p241 = scmp.eq.s32.totalorder %s19, 3
    %p242 = por %p240, %p241
    %p243 = scmp.ne.s32.totalorder %s232, %s233
    %p244 = scmp.eq.s32.totalorder %s19, 0
    %p245 = por %p243, %p244
    %p246 = scmp.ne.s32.totalorder %s232, %s233
    %p247 = scmp.eq.s32.totalorder %s20, 3
    %p248 = por %p246, %p247
    %p250 = scmp.ne.s32.totalorder %s233, %s249
    %p251 = scmp.eq.s32.totalorder %s20, 0
    %p252 = por %p250, %p251
    %p253 = scmp.le.s32.totalorder 1, %s14
    %p254 = scmp.lt.s32.totalorder %s14, 5
    %p255 = pnand %p253, %p254
    %p256 = pneg %p255
    // Predicated region
    $region9: #{bottleneck_forward_nhwc.5} parent=5 // pred_check
      _
    $region10: #{bottleneck_forward_nhwc.5} parent=5 // pred_check_branch
      %258 = sbr.rel (%p255) target = $region12
    $region11: #{bottleneck_forward_nhwc.5} parent=5 // pred_region
      %s259 = ssub.s32 %s14, 1
      // Predicated region
      $region13: #{bottleneck_forward_nhwc.5} parent=11 // pred_check
        %p260 = pneg %p147
      $region14: #{bottleneck_forward_nhwc.5} parent=11 // pred_check_branch
        %262 = sbr.rel (%p260) target = $region16
      $region15: #{bottleneck_forward_nhwc.5} parent=11 // pred_region
        _
      $region16: #{bottleneck_forward_nhwc.5} parent=11 // pred_fallthru
        _
      // Predicated region
      $region17: #{bottleneck_forward_nhwc.5} parent=11 // pred_check
        %p263 = pneg %p168
      $region18: #{bottleneck_forward_nhwc.5} parent=11 // pred_check_branch
        %265 = sbr.rel (%p263) target = $region20
      $region19: #{bottleneck_forward_nhwc.5} parent=11 // pred_region
        _
      $region20: #{bottleneck_forward_nhwc.5} parent=11 // pred_fallthru
        _
      // Predicated region
      $region21: #{bottleneck_forward_nhwc.5} parent=11 // pred_check
        %p266 = pneg %p189
      $region22: #{bottleneck_forward_nhwc.5} parent=11 // pred_check_branch
        %268 = sbr.rel (%p266) target = $region24
      $region23: #{bottleneck_forward_nhwc.5} parent=11 // pred_region
        _
      $region24: #{bottleneck_forward_nhwc.5} parent=11 // pred_fallthru
        _
    $region12: #{bottleneck_forward_nhwc.5} parent=5 // pred_fallthru
      _
    %p269 = scmp.lt.s32.totalorder %s14, 4
    // Predicated region
    $region25: #{bottleneck_forward_nhwc.5} parent=5 // pred_check
      %p270 = pneg %p269
    $region26: #{bottleneck_forward_nhwc.5} parent=5 // pred_check_branch
      %272 = sbr.rel (%p270) target = $region28
    $region27: #{bottleneck_forward_nhwc.5} parent=5 // pred_region
      // Predicated region
      $region29: #{bottleneck_forward_nhwc.5} parent=27 // pred_check
        %p273 = pneg %p48
      $region30: #{bottleneck_forward_nhwc.5} parent=27 // pred_check_branch
        %275 = sbr.rel (%p273) target = $region32
      $region31: #{bottleneck_forward_nhwc.5} parent=27 // pred_region
        %s276 = smul.u32 8, %s22
        %p277 = scmp.lt.s32.totalorder %s21, 1
        %s278 = scalar_select %p277, %s21, 1
        %p279 = scmp.lt.s32.totalorder %s276, 15
        %s280 = scalar_select %p279, %s276, 15
        %s281 = smul.addr %s280, 2
        %s282 = smul.addr %s278, 32
        %s283 = sadd.s32 %s281, %s282
        %s284 = smul.addr %s283, 4
        %s285 = scalar_lea.vmem %s0, %s284
        %s286 = smul.u32 8, %s22
      $region32: #{bottleneck_forward_nhwc.5} parent=27 // pred_fallthru
        _
      // Predicated region
      $region33: #{bottleneck_forward_nhwc.5} parent=27 // pred_check
        %p287 = pneg %p84
      $region34: #{bottleneck_forward_nhwc.5} parent=27 // pred_check_branch
        %289 = sbr.rel (%p287) target = $region36
      $region35: #{bottleneck_forward_nhwc.5} parent=27 // pred_region
        %s290 = smul.u32 %s22, 8
        %s291 = ssub.s32 %s290, 1
        %p292 = scmp.gt.s32.totalorder %s291, 0
        %s293 = scalar_select %p292, %s291, 0
        %p294 = scmp.lt.s32.totalorder %s21, 1
        %s295 = scalar_select %p294, %s21, 1
        %p296 = scmp.lt.s32.totalorder %s293, 15
        %s297 = scalar_select %p296, %s293, 15
        %s298 = smul.addr %s297, 2
        %s299 = smul.addr %s295, 32
        %s300 = sadd.s32 %s298, %s299
        %s301 = smul.addr %s300, 4
        %s302 = scalar_lea.vmem %s1, %s301
        %s303 = smul.u32 %s22, 8
        %s304 = ssub.s32 %s303, 1
        %p305 = scmp.gt.s32.totalorder %s304, 0
        %s306 = scalar_select %p305, %s304, 0
      $region36: #{bottleneck_forward_nhwc.5} parent=27 // pred_fallthru
        _
      // Predicated region
      $region37: #{bottleneck_forward_nhwc.5} parent=27 // pred_check
        %p307 = pneg %p120
      $region38: #{bottleneck_forward_nhwc.5} parent=27 // pred_check_branch
        %309 = sbr.rel (%p307) target = $region40
      $region39: #{bottleneck_forward_nhwc.5} parent=27 // pred_region
        %s310 = sadd.s32 %s22, 1
        %s311 = smul.u32 %s310, 8
        %p312 = scmp.lt.s32.totalorder %s311, 15
        %s313 = scalar_select %p312, %s311, 15
        %p314 = scmp.lt.s32.totalorder %s21, 1
        %s315 = scalar_select %p314, %s21, 1
        %p316 = scmp.lt.s32.totalorder %s313, 15
        %s317 = scalar_select %p316, %s313, 15
        %s318 = smul.addr %s317, 2
        %s319 = smul.addr %s315, 32
        %s320 = sadd.s32 %s318, %s319
        %s321 = smul.addr %s320, 4
        %s322 = scalar_lea.vmem %s2, %s321
        %s323 = sadd.s32 %s22, 1
        %s324 = smul.u32 %s323, 8
        %p325 = scmp.lt.s32.totalorder %s324, 15
        %s326 = scalar_select %p325, %s324, 15
      $region40: #{bottleneck_forward_nhwc.5} parent=27 // pred_fallthru
        _
    $region28: #{bottleneck_forward_nhwc.5} parent=5 // pred_fallthru
      _
    %p327 = scmp.le.s32.totalorder 1, %s14
    %p328 = scmp.lt.s32.totalorder %s14, 5
    %p329 = pnand %p327, %p328
    %p330 = pneg %p329
    // Predicated region
    $region41: #{bottleneck_forward_nhwc.5} parent=5 // pred_check
      _
    $region42: #{bottleneck_forward_nhwc.5} parent=5 // pred_check_branch
      %332 = sbr.rel (%p329) target = $region44
    $region43: #{bottleneck_forward_nhwc.5} parent=5 // pred_region
      %s333 = ssub.s32 %s14, 1
      %s334 = smul.u32 8, %s24
      %p335 = scmp.lt.s32.totalorder %s23, 1
      %s336 = scalar_select %p335, %s23, 1
      %p337 = scmp.lt.s32.totalorder %s334, 15
      %s338 = scalar_select %p337, %s334, 15
      %s339 = smul.addr %s338, 2
      %s340 = smul.addr %s336, 32
      %s341 = sadd.s32 %s339, %s340
      %s342 = smul.addr %s341, 4
      %s343 = scalar_lea.vmem %s0, %s342
      %p344 = pneg %p54
      %p345 = pneg %p51
      %s346 = smul.u32 %s24, 8
      %s347 = ssub.s32 %s346, 1
      %p348 = scmp.gt.s32.totalorder %s347, 0
      %s349 = scalar_select %p348, %s347, 0
      %p350 = scmp.lt.s32.totalorder %s23, 1
      %s351 = scalar_select %p350, %s23, 1
      %p352 = scmp.lt.s32.totalorder %s349, 15
      %s353 = scalar_select %p352, %s349, 15
      %s354 = smul.addr %s353, 2
      %s355 = smul.addr %s351, 32
      %s356 = sadd.s32 %s354, %s355
      %s357 = smul.addr %s356, 4
      %s358 = scalar_lea.vmem %s1, %s357
      %p359 = pneg %p90
      %p360 = pneg %p87
      %s361 = sadd.s32 %s24, 1
      %s362 = smul.u32 %s361, 8
      %p363 = scmp.lt.s32.totalorder %s362, 15
      %s364 = scalar_select %p363, %s362, 15
      %p365 = scmp.lt.s32.totalorder %s23, 1
      %s366 = scalar_select %p365, %s23, 1
      %p367 = scmp.lt.s32.totalorder %s364, 15
      %s368 = scalar_select %p367, %s364, 15
      %s369 = smul.addr %s368, 2
      %s370 = smul.addr %s366, 32
      %s371 = sadd.s32 %s369, %s370
      %s372 = smul.addr %s371, 4
      %s373 = scalar_lea.vmem %s2, %s372
      %p374 = pneg %p126
      %p375 = pneg %p123
      %p376 = pneg %p147
      %p377 = pneg %p144
      %p378 = pneg %p168
      %p379 = pneg %p165
      %p380 = pneg %p189
      %p381 = pneg %p186
      %p382 = pneg %p217
      %p383 = pneg %p214
      %s384 = smul.u32 8, %s24
      %p385 = scmp.lt.s32.totalorder %s23, 1
      %s386 = scalar_select %p385, %s23, 1
      %p387 = scmp.lt.s32.totalorder %s384, 15
      %s388 = scalar_select %p387, %s384, 15
      %s389 = smul.addr %s388, 2
      %s390 = smul.addr %s386, 32
      %s391 = sadd.s32 %s389, %s390
      %s392 = smul.addr %s391, 4
      %s393 = scalar_lea.vmem %s6, %s392
      %p394 = pneg %p245
      %p395 = pneg %p242
      %p396 = scmp.lt.s32.totalorder %s23, 1
      %s397 = scalar_select %p396, %s23, 1
      %p398 = scmp.lt.s32.totalorder %s24, 1
      %s399 = scalar_select %p398, %s24, 1
      %s400 = smul.addr %s397, 2
      %s401 = sadd.s32 %s399, %s400
      %s402 = smul.addr %s401, 2
      %s403 = scalar_lea.vmem %s7, %s402
      %s404 = smul.u32 8, %s24
      %p405 = scmp.lt.s32.totalorder %s23, 1
      %s406 = scalar_select %p405, %s23, 1
      %p407 = scmp.lt.s32.totalorder %s404, 15
      %s408 = scalar_select %p407, %s404, 15
      %s409 = smul.addr %s408, 2
      %s410 = smul.addr %s406, 32
      %s411 = sadd.s32 %s409, %s410
      %s412 = smul.addr %s411, 4
      %s413 = scalar_lea.vmem %s0, %s412
      %s414 = smul.u32 8, %s24
      %s415 = smul.u32 %s24, 8
      %s416 = ssub.s32 %s415, 1
      %p417 = scmp.gt.s32.totalorder %s416, 0
      %s418 = scalar_select %p417, %s416, 0
      %p419 = scmp.lt.s32.totalorder %s23, 1
      %s420 = scalar_select %p419, %s23, 1
      %p421 = scmp.lt.s32.totalorder %s418, 15
      %s422 = scalar_select %p421, %s418, 15
      %s423 = smul.addr %s422, 2
      %s424 = smul.addr %s420, 32
      %s425 = sadd.s32 %s423, %s424
      %s426 = smul.addr %s425, 4
      %s427 = scalar_lea.vmem %s1, %s426
      %s428 = smul.u32 %s24, 8
      %s429 = ssub.s32 %s428, 1
      %p430 = scmp.gt.s32.totalorder %s429, 0
      %s431 = scalar_select %p430, %s429, 0
      %s432 = sadd.s32 %s24, 1
      %s433 = smul.u32 %s432, 8
      %p434 = scmp.lt.s32.totalorder %s433, 15
      %s435 = scalar_select %p434, %s433, 15
      %p436 = scmp.lt.s32.totalorder %s23, 1
      %s437 = scalar_select %p436, %s23, 1
      %p438 = scmp.lt.s32.totalorder %s435, 15
      %s439 = scalar_select %p438, %s435, 15
      %s440 = smul.addr %s439, 2
      %s441 = smul.addr %s437, 32
      %s442 = sadd.s32 %s440, %s441
      %s443 = smul.addr %s442, 4
      %s444 = scalar_lea.vmem %s2, %s443
      %s445 = sadd.s32 %s24, 1
      %s446 = smul.u32 %s445, 8
      %p447 = scmp.lt.s32.totalorder %s446, 15
      %s448 = scalar_select %p447, %s446, 15
      %s449 = smul.u32 8, %s24
      %p450 = scmp.lt.s32.totalorder %s23, 1
      %s451 = scalar_select %p450, %s23, 1
      %p452 = scmp.lt.s32.totalorder %s449, 15
      %s453 = scalar_select %p452, %s449, 15
      %s454 = smul.addr %s453, 2
      %s455 = smul.addr %s451, 32
      %s456 = sadd.s32 %s454, %s455
      %s457 = smul.addr %s456, 4
      %s458 = scalar_lea.vmem %s6, %s457
      %s459 = smul.u32 8, %s24
      %p460 = scmp.lt.s32.totalorder %s23, 1
      %s461 = scalar_select %p460, %s23, 1
      %p462 = scmp.lt.s32.totalorder %s24, 1
      %s463 = scalar_select %p462, %s24, 1
      %s464 = smul.addr %s461, 2
      %s465 = sadd.s32 %s463, %s464
      %s466 = smul.addr %s465, 2
      %s467 = scalar_lea.vmem %s7, %s466
      %v469 = vld [vmem:[%s3] sm:$0x1]
      %v470 = vld [vmem:[%s4] sm:$0x1]
      %v471 = vld [vmem:[%s413] sm:$0xf]
      %v472 = vld [vmem:[%s413 + $0x4] sm:$0xf]
      %v473 = vld [vmem:[%s413 + $0x8] sm:$0xf]
      %v474 = vld [vmem:[%s413 + $0xc] sm:$0xf]
      %v475 = vld [vmem:[%s413 + $0x10] sm:$0xf]
      %v476 = vld [vmem:[%s413 + $0x14] sm:$0xf]
      %v477 = vld [vmem:[%s413 + $0x18] sm:$0xf]
      %v478 = vld [vmem:[%s413 + $0x1c] sm:$0xf]
      %v479 = vld [vmem:[%s413 + $0x20] sm:$0xf]
      %v480 = vld [vmem:[%s413 + $0x24] sm:$0xf]
      %v481 = vld [vmem:[%s413 + $0x28] sm:$0xf]
      %v482 = vld [vmem:[%s413 + $0x2c] sm:$0xf]
      %v483 = vld [vmem:[%s413 + $0x30] sm:$0xf]
      %v484 = vld [vmem:[%s413 + $0x34] sm:$0xf]
      %v485 = vld [vmem:[%s413 + $0x38] sm:$0xf]
      %v486 = vld [vmem:[%s413 + $0x3c] sm:$0xf]
      %v487 = vunpack.c.l.bf16 %v471
      %v488 = vunpack.c.l.bf16 %v472
      %v489 = vunpack.c.l.bf16 %v473
      %v490 = vunpack.c.l.bf16 %v474
      %v491 = vunpack.c.l.bf16 %v475
      %v492 = vunpack.c.l.bf16 %v476
      %v493 = vunpack.c.l.bf16 %v477
      %v494 = vunpack.c.l.bf16 %v478
      %v495 = vunpack.c.l.bf16 %v479
      %v496 = vunpack.c.l.bf16 %v480
      %v497 = vunpack.c.l.bf16 %v481
      %v498 = vunpack.c.l.bf16 %v482
      %v499 = vunpack.c.l.bf16 %v483
      %v500 = vunpack.c.l.bf16 %v484
      %v501 = vunpack.c.l.bf16 %v485
      %v502 = vunpack.c.l.bf16 %v486
      %v504 = vlaneseq
      %v505 = vshrl.u32 %v504, 7
      %v506 = vsub.s32 0, %v505
      %v507 = vrot.slane %v469, %v506
      %v509 = vmul.f32 %v487, %v507
      %v510 = vmul.f32 %v488, %v507
      %v511 = vmul.f32 %v489, %v507
      %v512 = vmul.f32 %v490, %v507
      %v513 = vmul.f32 %v491, %v507
      %v514 = vmul.f32 %v492, %v507
      %v515 = vmul.f32 %v493, %v507
      %v516 = vmul.f32 %v494, %v507
      %v517 = vmul.f32 %v495, %v507
      %v518 = vmul.f32 %v496, %v507
      %v519 = vmul.f32 %v497, %v507
      %v520 = vmul.f32 %v498, %v507
      %v521 = vmul.f32 %v499, %v507
      %v522 = vmul.f32 %v500, %v507
      %v523 = vmul.f32 %v501, %v507
      %v524 = vmul.f32 %v502, %v507
      %v526 = vlaneseq
      %v527 = vshrl.u32 %v526, 7
      %v528 = vsub.s32 0, %v527
      %v529 = vrot.slane %v470, %v528
      %v531 = vadd.f32 %v509, %v529
      %v532 = vadd.f32 %v510, %v529
      %v533 = vadd.f32 %v511, %v529
      %v534 = vadd.f32 %v512, %v529
      %v535 = vadd.f32 %v513, %v529
      %v536 = vadd.f32 %v514, %v529
      %v537 = vadd.f32 %v515, %v529
      %v538 = vadd.f32 %v516, %v529
      %v539 = vadd.f32 %v517, %v529
      %v540 = vadd.f32 %v518, %v529
      %v541 = vadd.f32 %v519, %v529
      %v542 = vadd.f32 %v520, %v529
      %v543 = vadd.f32 %v521, %v529
      %v544 = vadd.f32 %v522, %v529
      %v545 = vadd.f32 %v523, %v529
      %v546 = vadd.f32 %v524, %v529
      %v547 = vmax.f32 %v531, 0.0
      %v548 = vmax.f32 %v532, 0.0
      %v549 = vmax.f32 %v533, 0.0
      %v550 = vmax.f32 %v534, 0.0
      %v551 = vmax.f32 %v535, 0.0
      %v552 = vmax.f32 %v536, 0.0
      %v553 = vmax.f32 %v537, 0.0
      %v554 = vmax.f32 %v538, 0.0
      %v555 = vmax.f32 %v539, 0.0
      %v556 = vmax.f32 %v540, 0.0
      %v557 = vmax.f32 %v541, 0.0
      %v558 = vmax.f32 %v542, 0.0
      %v559 = vmax.f32 %v543, 0.0
      %v560 = vmax.f32 %v544, 0.0
      %v561 = vmax.f32 %v545, 0.0
      %v562 = vmax.f32 %v546, 0.0
      %v563 = vld [vmem:[%s427] sm:$0xf]
      %v564 = vld [vmem:[%s427 + $0x4] sm:$0xf]
      %v565 = vunpack.c.l.bf16 %v563
      %v566 = vunpack.c.l.bf16 %v564
      %v567 = vmul.f32 %v565, %v507
      %v568 = vmul.f32 %v566, %v507
      %v569 = vadd.f32 %v567, %v529
      %v570 = vadd.f32 %v568, %v529
      %v571 = vmax.f32 %v569, 0.0
      %v572 = vmax.f32 %v570, 0.0
      %p573 = scmp.gt.s32.totalorder %s24, 0
      %s574 = scalar_select %p573, 1, 0
      %s575 = scvt.s32.f32 %s574
      %v576 = vstv %s575
      %v577 = vmul.f32 %v571, %v576
      %v578 = vmul.f32 %v572, %v576
      %v579 = vld [vmem:[%s444] sm:$0xf]
      %v580 = vld [vmem:[%s444 + $0x4] sm:$0xf]
      %v581 = vunpack.c.l.bf16 %v579
      %v582 = vunpack.c.l.bf16 %v580
      %v583 = vmul.f32 %v581, %v507
      %v584 = vmul.f32 %v582, %v507
      %v585 = vadd.f32 %v583, %v529
      %v586 = vadd.f32 %v584, %v529
      %v587 = vmax.f32 %v585, 0.0
      %v588 = vmax.f32 %v586, 0.0
      %p589 = scmp.lt.s32.totalorder %s24, 1
      %s590 = scalar_select %p589, 1, 0
      %s591 = scvt.s32.f32 %s590
      %v592 = vstv %s591
      %v593 = vmul.f32 %v587, %v592
      %v594 = vmul.f32 %v588, %v592
      %v595 = vlaneseq
      %v596 = vshrl.u32 %v595, 7
      %v597 = vadd.s32 %v596, 8
      %v598 = vadd.s32 %v596, 16
      %v599 = vadd.s32 %v596, 24
      %v600 = vadd.s32 %v596, 32
      %v601 = vadd.s32 %v596, 40
      %v602 = vadd.s32 %v596, 48
      %v603 = vadd.s32 %v596, 56
      %v604 = vadd.s32 %v596, 64
      %v605 = vadd.s32 %v596, 72
      %v606 = vadd.s32 %v596, 80
      %v607 = vadd.s32 %v596, 88
      %v608 = vadd.s32 %v596, 96
      %v609 = vadd.s32 %v596, 104
      %v610 = vadd.s32 %v596, 112
      %v611 = vadd.s32 %v596, 120
      %vm612 = vcmp.lt.s32.totalorder %v596, 0
      %v613 = vsub.s32 0, %v596
      %v614 = vsel %vm612, %v613, %v596
      %v615 = vshrl.u32 %v614, 4
      %v616 = vand.u32 %v614, 15
      %v617 = vsub.s32 0, %v616
      %v618 = vsel %vm612, %v617, %v616
      %vm619 = vcmp.lt.s32.totalorder %v597, 0
      %v620 = vsub.s32 0, %v597
      %v621 = vsel %vm619, %v620, %v597
      %v622 = vshrl.u32 %v621, 4
      %v623 = vand.u32 %v621, 15
      %v624 = vsub.s32 0, %v623
      %v625 = vsel %vm619, %v624, %v623
      %vm626 = vcmp.lt.s32.totalorder %v598, 0
      %v627 = vsub.s32 0, %v598
      %v628 = vsel %vm626, %v627, %v598
      %v629 = vshrl.u32 %v628, 4
      %v630 = vand.u32 %v628, 15
      %v631 = vsub.s32 0, %v630
      %v632 = vsel %vm626, %v631, %v630
      %vm633 = vcmp.lt.s32.totalorder %v599, 0
      %v634 = vsub.s32 0, %v599
      %v635 = vsel %vm633, %v634, %v599
      %v636 = vshrl.u32 %v635, 4
      %v637 = vand.u32 %v635, 15
      %v638 = vsub.s32 0, %v637
      %v639 = vsel %vm633, %v638, %v637
      %vm640 = vcmp.lt.s32.totalorder %v600, 0
      %v641 = vsub.s32 0, %v600
      %v642 = vsel %vm640, %v641, %v600
      %v643 = vshrl.u32 %v642, 4
      %v644 = vand.u32 %v642, 15
      %v645 = vsub.s32 0, %v644
      %v646 = vsel %vm640, %v645, %v644
      %vm647 = vcmp.lt.s32.totalorder %v601, 0
      %v648 = vsub.s32 0, %v601
      %v649 = vsel %vm647, %v648, %v601
      %v650 = vshrl.u32 %v649, 4
      %v651 = vand.u32 %v649, 15
      %v652 = vsub.s32 0, %v651
      %v653 = vsel %vm647, %v652, %v651
      %vm654 = vcmp.lt.s32.totalorder %v602, 0
      %v655 = vsub.s32 0, %v602
      %v656 = vsel %vm654, %v655, %v602
      %v657 = vshrl.u32 %v656, 4
      %v658 = vand.u32 %v656, 15
      %v659 = vsub.s32 0, %v658
      %v660 = vsel %vm654, %v659, %v658
      %vm661 = vcmp.lt.s32.totalorder %v603, 0
      %v662 = vsub.s32 0, %v603
      %v663 = vsel %vm661, %v662, %v603
      %v664 = vshrl.u32 %v663, 4
      %v665 = vand.u32 %v663, 15
      %v666 = vsub.s32 0, %v665
      %v667 = vsel %vm661, %v666, %v665
      %vm668 = vcmp.lt.s32.totalorder %v604, 0
      %v669 = vsub.s32 0, %v604
      %v670 = vsel %vm668, %v669, %v604
      %v671 = vshrl.u32 %v670, 4
      %v672 = vand.u32 %v670, 15
      %v673 = vsub.s32 0, %v672
      %v674 = vsel %vm668, %v673, %v672
      %vm675 = vcmp.lt.s32.totalorder %v605, 0
      %v676 = vsub.s32 0, %v605
      %v677 = vsel %vm675, %v676, %v605
      %v678 = vshrl.u32 %v677, 4
      %v679 = vand.u32 %v677, 15
      %v680 = vsub.s32 0, %v679
      %v681 = vsel %vm675, %v680, %v679
      %vm682 = vcmp.lt.s32.totalorder %v606, 0
      %v683 = vsub.s32 0, %v606
      %v684 = vsel %vm682, %v683, %v606
      %v685 = vshrl.u32 %v684, 4
      %v686 = vand.u32 %v684, 15
      %v687 = vsub.s32 0, %v686
      %v688 = vsel %vm682, %v687, %v686
      %vm689 = vcmp.lt.s32.totalorder %v607, 0
      %v690 = vsub.s32 0, %v607
      %v691 = vsel %vm689, %v690, %v607
      %v692 = vshrl.u32 %v691, 4
      %v693 = vand.u32 %v691, 15
      %v694 = vsub.s32 0, %v693
      %v695 = vsel %vm689, %v694, %v693
      %vm696 = vcmp.lt.s32.totalorder %v608, 0
      %v697 = vsub.s32 0, %v608
      %v698 = vsel %vm696, %v697, %v608
      %v699 = vshrl.u32 %v698, 4
      %v700 = vand.u32 %v698, 15
      %v701 = vsub.s32 0, %v700
      %v702 = vsel %vm696, %v701, %v700
      %vm703 = vcmp.lt.s32.totalorder %v609, 0
      %v704 = vsub.s32 0, %v609
      %v705 = vsel %vm703, %v704, %v609
      %v706 = vshrl.u32 %v705, 4
      %v707 = vand.u32 %v705, 15
      %v708 = vsub.s32 0, %v707
      %v709 = vsel %vm703, %v708, %v707
      %vm710 = vcmp.lt.s32.totalorder %v610, 0
      %v711 = vsub.s32 0, %v610
      %v712 = vsel %vm710, %v711, %v610
      %v713 = vshrl.u32 %v712, 4
      %v714 = vand.u32 %v712, 15
      %v715 = vsub.s32 0, %v714
      %v716 = vsel %vm710, %v715, %v714
      %vm717 = vcmp.lt.s32.totalorder %v611, 0
      %v718 = vsub.s32 0, %v611
      %v719 = vsel %vm717, %v718, %v611
      %v720 = vshrl.u32 %v719, 4
      %v721 = vand.u32 %v719, 15
      %v722 = vsub.s32 0, %v721
      %v723 = vsel %vm717, %v722, %v721
      %vm724 = vcmp.ne.s32.totalorder %v618, 0
      %vm725 = vcmp.ne.s32.totalorder %v625, 0
      %vm726 = vcmp.ne.s32.totalorder %v632, 0
      %vm727 = vcmp.ne.s32.totalorder %v639, 0
      %vm728 = vcmp.ne.s32.totalorder %v646, 0
      %vm729 = vcmp.ne.s32.totalorder %v653, 0
      %vm730 = vcmp.ne.s32.totalorder %v660, 0
      %vm731 = vcmp.ne.s32.totalorder %v667, 0
      %vm732 = vcmp.ne.s32.totalorder %v674, 0
      %vm733 = vcmp.ne.s32.totalorder %v681, 0
      %vm734 = vcmp.ne.s32.totalorder %v688, 0
      %vm735 = vcmp.ne.s32.totalorder %v695, 0
      %vm736 = vcmp.ne.s32.totalorder %v702, 0
      %vm737 = vcmp.ne.s32.totalorder %v709, 0
      %vm738 = vcmp.ne.s32.totalorder %v716, 0
      %vm739 = vcmp.ne.s32.totalorder %v723, 0
      %vm740 = vcmp.lt.s32.totalorder %v618, 0
      %vm741 = vcmp.lt.s32.totalorder %v625, 0
      %vm742 = vcmp.lt.s32.totalorder %v632, 0
      %vm743 = vcmp.lt.s32.totalorder %v639, 0
      %vm744 = vcmp.lt.s32.totalorder %v646, 0
      %vm745 = vcmp.lt.s32.totalorder %v653, 0
      %vm746 = vcmp.lt.s32.totalorder %v660, 0
      %vm747 = vcmp.lt.s32.totalorder %v667, 0
      %vm748 = vcmp.lt.s32.totalorder %v674, 0
      %vm749 = vcmp.lt.s32.totalorder %v681, 0
      %vm750 = vcmp.lt.s32.totalorder %v688, 0
      %vm751 = vcmp.lt.s32.totalorder %v695, 0
      %vm752 = vcmp.lt.s32.totalorder %v702, 0
      %vm753 = vcmp.lt.s32.totalorder %v709, 0
      %vm754 = vcmp.lt.s32.totalorder %v716, 0
      %vm755 = vcmp.lt.s32.totalorder %v723, 0
      %vm756 = vmand %vm740, %vm724
      %vm757 = vmand %vm741, %vm725
      %vm758 = vmand %vm742, %vm726
      %vm759 = vmand %vm743, %vm727
      %vm760 = vmand %vm744, %vm728
      %vm761 = vmand %vm745, %vm729
      %vm762 = vmand %vm746, %vm730
      %vm763 = vmand %vm747, %vm731
      %vm764 = vmand %vm748, %vm732
      %vm765 = vmand %vm749, %vm733
      %vm766 = vmand %vm750, %vm734
      %vm767 = vmand %vm751, %vm735
      %vm768 = vmand %vm752, %vm736
      %vm769 = vmand %vm753, %vm737
      %vm770 = vmand %vm754, %vm738
      %vm771 = vmand %vm755, %vm739
      %v772 = vadd.s32 %v618, 16
      %v773 = vadd.s32 %v625, 16
      %v774 = vadd.s32 %v632, 16
      %v775 = vadd.s32 %v639, 16
      %v776 = vadd.s32 %v646, 16
      %v777 = vadd.s32 %v653, 16
      %v778 = vadd.s32 %v660, 16
      %v779 = vadd.s32 %v667, 16
      %v780 = vadd.s32 %v674, 16
      %v781 = vadd.s32 %v681, 16
      %v782 = vadd.s32 %v688, 16
      %v783 = vadd.s32 %v695, 16
      %v784 = vadd.s32 %v702, 16
      %v785 = vadd.s32 %v709, 16
      %v786 = vadd.s32 %v716, 16
      %v787 = vadd.s32 %v723, 16
      %v788 = vsel %vm756, %v772, %v618
      %v789 = vsel %vm757, %v773, %v625
      %v790 = vsel %vm758, %v774, %v632
      %v791 = vsel %vm759, %v775, %v639
      %v792 = vsel %vm760, %v776, %v646
      %v793 = vsel %vm761, %v777, %v653
      %v794 = vsel %vm762, %v778, %v660
      %v795 = vsel %vm763, %v779, %v667
      %v796 = vsel %vm764, %v780, %v674
      %v797 = vsel %vm765, %v781, %v681
      %v798 = vsel %vm766, %v782, %v688
      %v799 = vsel %vm767, %v783, %v695
      %v800 = vsel %vm768, %v784, %v702
      %v801 = vsel %vm769, %v785, %v709
      %v802 = vsel %vm770, %v786, %v716
      %v803 = vsel %vm771, %v787, %v723
      %vm804 = vcmp.ne.s32.totalorder %v788, 0
      %vm805 = vcmp.ne.s32.totalorder %v789, 0
      %vm806 = vcmp.ne.s32.totalorder %v790, 0
      %vm807 = vcmp.ne.s32.totalorder %v791, 0
      %vm808 = vcmp.ne.s32.totalorder %v792, 0
      %vm809 = vcmp.ne.s32.totalorder %v793, 0
      %vm810 = vcmp.ne.s32.totalorder %v794, 0
      %vm811 = vcmp.ne.s32.totalorder %v795, 0
      %vm812 = vcmp.ne.s32.totalorder %v796, 0
      %vm813 = vcmp.ne.s32.totalorder %v797, 0
      %vm814 = vcmp.ne.s32.totalorder %v798, 0
      %vm815 = vcmp.ne.s32.totalorder %v799, 0
      %vm816 = vcmp.ne.s32.totalorder %v800, 0
      %vm817 = vcmp.ne.s32.totalorder %v801, 0
      %vm818 = vcmp.ne.s32.totalorder %v802, 0
      %vm819 = vcmp.ne.s32.totalorder %v803, 0
      %v820 = vsel %vm804, 1, 0
      %v821 = vsel %vm805, 1, 0
      %v822 = vsel %vm806, 1, 0
      %v823 = vsel %vm807, 1, 0
      %v824 = vsel %vm808, 1, 0
      %v825 = vsel %vm809, 1, 0
      %v826 = vsel %vm810, 1, 0
      %v827 = vsel %vm811, 1, 0
      %v828 = vsel %vm812, 1, 0
      %v829 = vsel %vm813, 1, 0
      %v830 = vsel %vm814, 1, 0
      %v831 = vsel %vm815, 1, 0
      %v832 = vsel %vm816, 1, 0
      %v833 = vsel %vm817, 1, 0
      %v834 = vsel %vm818, 1, 0
      %v835 = vsel %vm819, 1, 0
      %v836 = vcvt.s32.f32 %v820
      %v837 = vcvt.s32.f32 %v821
      %v838 = vcvt.s32.f32 %v822
      %v839 = vcvt.s32.f32 %v823
      %v840 = vcvt.s32.f32 %v824
      %v841 = vcvt.s32.f32 %v825
      %v842 = vcvt.s32.f32 %v826
      %v843 = vcvt.s32.f32 %v827
      %v844 = vcvt.s32.f32 %v828
      %v845 = vcvt.s32.f32 %v829
      %v846 = vcvt.s32.f32 %v830
      %v847 = vcvt.s32.f32 %v831
      %v848 = vcvt.s32.f32 %v832
      %v849 = vcvt.s32.f32 %v833
      %v850 = vcvt.s32.f32 %v834
      %v851 = vcvt.s32.f32 %v835
      %vm852 = vcmp.ne.s32.totalorder %v788, 15
      %vm853 = vcmp.ne.s32.totalorder %v789, 15
      %vm854 = vcmp.ne.s32.totalorder %v790, 15
      %vm855 = vcmp.ne.s32.totalorder %v791, 15
      %vm856 = vcmp.ne.s32.totalorder %v792, 15
      %vm857 = vcmp.ne.s32.totalorder %v793, 15
      %vm858 = vcmp.ne.s32.totalorder %v794, 15
      %vm859 = vcmp.ne.s32.totalorder %v795, 15
      %vm860 = vcmp.ne.s32.totalorder %v796, 15
      %vm861 = vcmp.ne.s32.totalorder %v797, 15
      %vm862 = vcmp.ne.s32.totalorder %v798, 15
      %vm863 = vcmp.ne.s32.totalorder %v799, 15
      %vm864 = vcmp.ne.s32.totalorder %v800, 15
      %vm865 = vcmp.ne.s32.totalorder %v801, 15
      %vm866 = vcmp.ne.s32.totalorder %v802, 15
      %vm867 = vcmp.ne.s32.totalorder %v803, 15
      %v868 = vsel %vm852, 1, 0
      %v869 = vsel %vm853, 1, 0
      %v870 = vsel %vm854, 1, 0
      %v871 = vsel %vm855, 1, 0
      %v872 = vsel %vm856, 1, 0
      %v873 = vsel %vm857, 1, 0
      %v874 = vsel %vm858, 1, 0
      %v875 = vsel %vm859, 1, 0
      %v876 = vsel %vm860, 1, 0
      %v877 = vsel %vm861, 1, 0
      %v878 = vsel %vm862, 1, 0
      %v879 = vsel %vm863, 1, 0
      %v880 = vsel %vm864, 1, 0
      %v881 = vsel %vm865, 1, 0
      %v882 = vsel %vm866, 1, 0
      %v883 = vsel %vm867, 1, 0
      %v884 = vcvt.s32.f32 %v868
      %v885 = vcvt.s32.f32 %v869
      %v886 = vcvt.s32.f32 %v870
      %v887 = vcvt.s32.f32 %v871
      %v888 = vcvt.s32.f32 %v872
      %v889 = vcvt.s32.f32 %v873
      %v890 = vcvt.s32.f32 %v874
      %v891 = vcvt.s32.f32 %v875
      %v892 = vcvt.s32.f32 %v876
      %v893 = vcvt.s32.f32 %v877
      %v894 = vcvt.s32.f32 %v878
      %v895 = vcvt.s32.f32 %v879
      %v896 = vcvt.s32.f32 %v880
      %v897 = vcvt.s32.f32 %v881
      %v898 = vcvt.s32.f32 %v882
      %v899 = vcvt.s32.f32 %v883
      %v900 = vrot.slane %v577, 7
      %v901 = vrot.slane %v578, 7
      %v902 = vrot.slane %v547, 7
      %v903 = vrot.slane %v548, 7
      %v904 = vrot.slane %v549, 7
      %v905 = vrot.slane %v550, 7
      %v906 = vrot.slane %v551, 7
      %v907 = vrot.slane %v552, 7
      %v908 = vrot.slane %v553, 7
      %v909 = vrot.slane %v554, 7
      %v910 = vrot.slane %v555, 7
      %v911 = vrot.slane %v556, 7
      %v912 = vrot.slane %v557, 7
      %v913 = vrot.slane %v558, 7
      %v914 = vrot.slane %v559, 7
      %v915 = vrot.slane %v560, 7
      %vm916 = vcmp.lt.s32.totalorder %v596, 1
      %v917 = vsel %vm916, %v914, %v915
      %v918 = vsel %vm916, %v913, %v914
      %v919 = vsel %vm916, %v912, %v913
      %v920 = vsel %vm916, %v911, %v912
      %v921 = vsel %vm916, %v910, %v911
      %v922 = vsel %vm916, %v909, %v910
      %v923 = vsel %vm916, %v908, %v909
      %v924 = vsel %vm916, %v907, %v908
      %v925 = vsel %vm916, %v906, %v907
      %v926 = vsel %vm916, %v905, %v906
      %v927 = vsel %vm916, %v904, %v905
      %v928 = vsel %vm916, %v903, %v904
      %v929 = vsel %vm916, %v902, %v903
      %v930 = vsel %vm916, %v901, %v902
      %v931 = vsel %vm916, %v900, %v901
      %v932 = vsel %vm916, %v915, %v900
      %v933 = vmul.f32 %v932, %v836
      %v934 = vmul.f32 %v931, %v837
      %v935 = vmul.f32 %v930, %v838
      %v936 = vmul.f32 %v929, %v839
      %v937 = vmul.f32 %v928, %v840
      %v938 = vmul.f32 %v927, %v841
      %v939 = vmul.f32 %v926, %v842
      %v940 = vmul.f32 %v925, %v843
      %v941 = vmul.f32 %v924, %v844
      %v942 = vmul.f32 %v923, %v845
      %v943 = vmul.f32 %v922, %v846
      %v944 = vmul.f32 %v921, %v847
      %v945 = vmul.f32 %v920, %v848
      %v946 = vmul.f32 %v919, %v849
      %v947 = vmul.f32 %v918, %v850
      %v948 = vmul.f32 %v917, %v851
      %v949 = vrot.slane %v577, 1
      %v950 = vrot.slane %v578, 1
      %v951 = vrot.slane %v547, 1
      %v952 = vrot.slane %v548, 1
      %v953 = vrot.slane %v549, 1
      %v954 = vrot.slane %v550, 1
      %v955 = vrot.slane %v551, 1
      %v956 = vrot.slane %v552, 1
      %v957 = vrot.slane %v553, 1
      %v958 = vrot.slane %v554, 1
      %v959 = vrot.slane %v555, 1
      %v960 = vrot.slane %v556, 1
      %v961 = vrot.slane %v557, 1
      %v962 = vrot.slane %v558, 1
      %v963 = vrot.slane %v559, 1
      %v964 = vrot.slane %v560, 1
      %vm965 = vcmp.lt.s32.totalorder %v596, 7
      %v966 = vsel %vm965, %v963, %v964
      %v967 = vsel %vm965, %v962, %v963
      %v968 = vsel %vm965, %v961, %v962
      %v969 = vsel %vm965, %v960, %v961
      %v970 = vsel %vm965, %v959, %v960
      %v971 = vsel %vm965, %v958, %v959
      %v972 = vsel %vm965, %v957, %v958
      %v973 = vsel %vm965, %v956, %v957
      %v974 = vsel %vm965, %v955, %v956
      %v975 = vsel %vm965, %v954, %v955
      %v976 = vsel %vm965, %v953, %v954
      %v977 = vsel %vm965, %v952, %v953
      %v978 = vsel %vm965, %v951, %v952
      %v979 = vsel %vm965, %v950, %v951
      %v980 = vsel %vm965, %v949, %v950
      %v981 = vsel %vm965, %v964, %v949
      %v982 = vmul.f32 %v980, %v884
      %v983 = vmul.f32 %v979, %v885
      %v984 = vmul.f32 %v978, %v886
      %v985 = vmul.f32 %v977, %v887
      %v986 = vmul.f32 %v976, %v888
      %v987 = vmul.f32 %v975, %v889
      %v988 = vmul.f32 %v974, %v890
      %v989 = vmul.f32 %v973, %v891
      %v990 = vmul.f32 %v972, %v892
      %v991 = vmul.f32 %v971, %v893
      %v992 = vmul.f32 %v970, %v894
      %v993 = vmul.f32 %v969, %v895
      %v994 = vmul.f32 %v968, %v896
      %v995 = vmul.f32 %v967, %v897
      %v996 = vmul.f32 %v966, %v898
      %v997 = vmul.f32 %v981, %v899
      %v998 = vpack.c.bf16 %v934, %v933
      %v999 = vpack.c.bf16 %v936, %v935
      %v1000 = vpack.c.bf16 %v938, %v937
      %v1001 = vpack.c.bf16 %v940, %v939
      %v1002 = vpack.c.bf16 %v942, %v941
      %v1003 = vpack.c.bf16 %v944, %v943
      %v1004 = vpack.c.bf16 %v946, %v945
      %v1005 = vpack.c.bf16 %v948, %v947
      %v1006 = vpack.c.bf16 %v578, %v577
      %v1007 = vpack.c.bf16 %v548, %v547
      %v1008 = vpack.c.bf16 %v550, %v549
      %v1009 = vpack.c.bf16 %v552, %v551
      %v1010 = vpack.c.bf16 %v554, %v553
      %v1011 = vpack.c.bf16 %v556, %v555
      %v1012 = vpack.c.bf16 %v558, %v557
      %v1013 = vpack.c.bf16 %v560, %v559
      %v1014 = vpack.c.bf16 %v983, %v982
      %v1015 = vpack.c.bf16 %v985, %v984
      %v1016 = vpack.c.bf16 %v987, %v986
      %v1017 = vpack.c.bf16 %v989, %v988
      %v1018 = vpack.c.bf16 %v991, %v990
      %v1019 = vpack.c.bf16 %v993, %v992
      %v1020 = vpack.c.bf16 %v995, %v994
      %v1021 = vpack.c.bf16 %v997, %v996
      %v1022 = vld [vmem:[%s5] sm:$0xf]
      %v1023 = vld [vmem:[%s5 + $0x4] sm:$0xf]
      %v1024 = vld [vmem:[%s5 + $0x8] sm:$0xf]
      %v1025 = vld [vmem:[%s5 + $0xc] sm:$0xf]
      %v1026 = vld [vmem:[%s5 + $0x10] sm:$0xf]
      %v1027 = vld [vmem:[%s5 + $0x14] sm:$0xf]
      %v1028 = vld [vmem:[%s5 + $0x18] sm:$0xf]
      %v1029 = vld [vmem:[%s5 + $0x1c] sm:$0xf]
      %v1030 = vld [vmem:[%s5 + $0x20] sm:$0xf]
      %v1031 = vld [vmem:[%s5 + $0x24] sm:$0xf]
      %v1032 = vld [vmem:[%s5 + $0x28] sm:$0xf]
      %v1033 = vld [vmem:[%s5 + $0x2c] sm:$0xf]
      %v1034 = vld [vmem:[%s5 + $0x30] sm:$0xf]
      %v1035 = vld [vmem:[%s5 + $0x34] sm:$0xf]
      %v1036 = vld [vmem:[%s5 + $0x38] sm:$0xf]
      %v1037 = vld [vmem:[%s5 + $0x3c] sm:$0xf]
      %v1038 = vld [vmem:[%s5 + $0x40] sm:$0xf]
      %v1039 = vld [vmem:[%s5 + $0x44] sm:$0xf]
      %v1040 = vld [vmem:[%s5 + $0x48] sm:$0xf]
      %v1041 = vld [vmem:[%s5 + $0x4c] sm:$0xf]
      %v1042 = vld [vmem:[%s5 + $0x50] sm:$0xf]
      %v1043 = vld [vmem:[%s5 + $0x54] sm:$0xf]
      %v1044 = vld [vmem:[%s5 + $0x58] sm:$0xf]
      %v1045 = vld [vmem:[%s5 + $0x5c] sm:$0xf]
      %v1046 = vld [vmem:[%s5 + $0x60] sm:$0xf]
      %v1047 = vld [vmem:[%s5 + $0x64] sm:$0xf]
      %v1048 = vld [vmem:[%s5 + $0x68] sm:$0xf]
      %v1049 = vld [vmem:[%s5 + $0x6c] sm:$0xf]
      %v1050 = vld [vmem:[%s5 + $0x70] sm:$0xf]
      %v1051 = vld [vmem:[%s5 + $0x74] sm:$0xf]
      %v1052 = vld [vmem:[%s5 + $0x78] sm:$0xf]
      %v1053 = vld [vmem:[%s5 + $0x7c] sm:$0xf]
      %v1054 = vld [vmem:[%s5 + $0x80] sm:$0xf]
      %v1055 = vld [vmem:[%s5 + $0x84] sm:$0xf]
      %v1056 = vld [vmem:[%s5 + $0x88] sm:$0xf]
      %v1057 = vld [vmem:[%s5 + $0x8c] sm:$0xf]
      %v1058 = vld [vmem:[%s5 + $0x90] sm:$0xf]
      %v1059 = vld [vmem:[%s5 + $0x94] sm:$0xf]
      %v1060 = vld [vmem:[%s5 + $0x98] sm:$0xf]
      %v1061 = vld [vmem:[%s5 + $0x9c] sm:$0xf]
      %v1062 = vld [vmem:[%s5 + $0xa0] sm:$0xf]
      %v1063 = vld [vmem:[%s5 + $0xa4] sm:$0xf]
      %v1064 = vld [vmem:[%s5 + $0xa8] sm:$0xf]
      %v1065 = vld [vmem:[%s5 + $0xac] sm:$0xf]
      %v1066 = vld [vmem:[%s5 + $0xb0] sm:$0xf]
      %v1067 = vld [vmem:[%s5 + $0xb4] sm:$0xf]
      %v1068 = vld [vmem:[%s5 + $0xb8] sm:$0xf]
      %v1069 = vld [vmem:[%s5 + $0xbc] sm:$0xf]
      %v1070 = vrot.slane %v561, 7
      %v1071 = vrot.slane %v562, 7
      %v1072 = vsel %vm916, %v1070, %v1071
      %v1073 = vsel %vm916, %v915, %v1070
      %v1074 = vsel %vm916, %v1071, %v902
      %v1075 = vmul.f32 %v1074, %v836
      %v1076 = vmul.f32 %v929, %v837
      %v1077 = vmul.f32 %v928, %v838
      %v1078 = vmul.f32 %v927, %v839
      %v1079 = vmul.f32 %v926, %v840
      %v1080 = vmul.f32 %v925, %v841
      %v1081 = vmul.f32 %v924, %v842
      %v1082 = vmul.f32 %v923, %v843
      %v1083 = vmul.f32 %v922, %v844
      %v1084 = vmul.f32 %v921, %v845
      %v1085 = vmul.f32 %v920, %v846
      %v1086 = vmul.f32 %v919, %v847
      %v1087 = vmul.f32 %v918, %v848
      %v1088 = vmul.f32 %v917, %v849
      %v1089 = vmul.f32 %v1073, %v850
      %v1090 = vmul.f32 %v1072, %v851
      %v1091 = vrot.slane %v561, 1
      %v1092 = vrot.slane %v562, 1
      %v1093 = vsel %vm965, %v1091, %v1092
      %v1094 = vsel %vm965, %v964, %v1091
      %v1095 = vsel %vm965, %v1092, %v951
      %v1096 = vmul.f32 %v978, %v884
      %v1097 = vmul.f32 %v977, %v885
      %v1098 = vmul.f32 %v976, %v886
      %v1099 = vmul.f32 %v975, %v887
      %v1100 = vmul.f32 %v974, %v888
      %v1101 = vmul.f32 %v973, %v889
      %v1102 = vmul.f32 %v972, %v890
      %v1103 = vmul.f32 %v971, %v891
      %v1104 = vmul.f32 %v970, %v892
      %v1105 = vmul.f32 %v969, %v893
      %v1106 = vmul.f32 %v968, %v894
      %v1107 = vmul.f32 %v967, %v895
      %v1108 = vmul.f32 %v966, %v896
      %v1109 = vmul.f32 %v1094, %v897
      %v1110 = vmul.f32 %v1093, %v898
      %v1111 = vmul.f32 %v1095, %v899
      %v1112 = vpack.c.bf16 %v1076, %v1075
      %v1113 = vpack.c.bf16 %v1078, %v1077
      %v1114 = vpack.c.bf16 %v1080, %v1079
      %v1115 = vpack.c.bf16 %v1082, %v1081
      %v1116 = vpack.c.bf16 %v1084, %v1083
      %v1117 = vpack.c.bf16 %v1086, %v1085
      %v1118 = vpack.c.bf16 %v1088, %v1087
      %v1119 = vpack.c.bf16 %v1090, %v1089
      %v1120 = vpack.c.bf16 %v562, %v561
      %v1121 = vpack.c.bf16 %v1097, %v1096
      %v1122 = vpack.c.bf16 %v1099, %v1098
      %v1123 = vpack.c.bf16 %v1101, %v1100
      %v1124 = vpack.c.bf16 %v1103, %v1102
      %v1125 = vpack.c.bf16 %v1105, %v1104
      %v1126 = vpack.c.bf16 %v1107, %v1106
      %v1127 = vpack.c.bf16 %v1109, %v1108
      %v1128 = vpack.c.bf16 %v1111, %v1110
      %s1129 = scalar_lea.vmem %s5, 192
      %v1130 = vld [vmem:[%s1129] sm:$0xf]
      %v1131 = vld [vmem:[%s1129 + $0x4] sm:$0xf]
      %v1132 = vld [vmem:[%s1129 + $0x8] sm:$0xf]
      %v1133 = vld [vmem:[%s1129 + $0xc] sm:$0xf]
      %v1134 = vld [vmem:[%s1129 + $0x10] sm:$0xf]
      %v1135 = vld [vmem:[%s1129 + $0x14] sm:$0xf]
      %v1136 = vld [vmem:[%s1129 + $0x18] sm:$0xf]
      %v1137 = vld [vmem:[%s1129 + $0x1c] sm:$0xf]
      %v1138 = vld [vmem:[%s1129 + $0x20] sm:$0xf]
      %v1139 = vld [vmem:[%s1129 + $0x24] sm:$0xf]
      %v1140 = vld [vmem:[%s1129 + $0x28] sm:$0xf]
      %v1141 = vld [vmem:[%s1129 + $0x2c] sm:$0xf]
      %v1142 = vld [vmem:[%s1129 + $0x30] sm:$0xf]
      %v1143 = vld [vmem:[%s1129 + $0x34] sm:$0xf]
      %v1144 = vld [vmem:[%s1129 + $0x38] sm:$0xf]
      %v1145 = vld [vmem:[%s1129 + $0x3c] sm:$0xf]
      %v1146 = vld [vmem:[%s1129 + $0x40] sm:$0xf]
      %v1147 = vld [vmem:[%s1129 + $0x44] sm:$0xf]
      %v1148 = vld [vmem:[%s1129 + $0x48] sm:$0xf]
      %v1149 = vld [vmem:[%s1129 + $0x4c] sm:$0xf]
      %v1150 = vld [vmem:[%s1129 + $0x50] sm:$0xf]
      %v1151 = vld [vmem:[%s1129 + $0x54] sm:$0xf]
      %v1152 = vld [vmem:[%s1129 + $0x58] sm:$0xf]
      %v1153 = vld [vmem:[%s1129 + $0x5c] sm:$0xf]
      %v1154 = vld [vmem:[%s1129 + $0x60] sm:$0xf]
      %v1155 = vld [vmem:[%s1129 + $0x64] sm:$0xf]
      %v1156 = vld [vmem:[%s1129 + $0x68] sm:$0xf]
      %v1157 = vld [vmem:[%s1129 + $0x6c] sm:$0xf]
      %v1158 = vld [vmem:[%s1129 + $0x70] sm:$0xf]
      %v1159 = vld [vmem:[%s1129 + $0x74] sm:$0xf]
      %v1160 = vld [vmem:[%s1129 + $0x78] sm:$0xf]
      %v1161 = vld [vmem:[%s1129 + $0x7c] sm:$0xf]
      %v1162 = vld [vmem:[%s1129 + $0x80] sm:$0xf]
      %v1163 = vld [vmem:[%s1129 + $0x84] sm:$0xf]
      %v1164 = vld [vmem:[%s1129 + $0x88] sm:$0xf]
      %v1165 = vld [vmem:[%s1129 + $0x8c] sm:$0xf]
      %v1166 = vld [vmem:[%s1129 + $0x90] sm:$0xf]
      %v1167 = vld [vmem:[%s1129 + $0x94] sm:$0xf]
      %v1168 = vld [vmem:[%s1129 + $0x98] sm:$0xf]
      %v1169 = vld [vmem:[%s1129 + $0x9c] sm:$0xf]
      %v1170 = vld [vmem:[%s1129 + $0xa0] sm:$0xf]
      %v1171 = vld [vmem:[%s1129 + $0xa4] sm:$0xf]
      %v1172 = vld [vmem:[%s1129 + $0xa8] sm:$0xf]
      %v1173 = vld [vmem:[%s1129 + $0xac] sm:$0xf]
      %v1174 = vld [vmem:[%s1129 + $0xb0] sm:$0xf]
      %v1175 = vld [vmem:[%s1129 + $0xb4] sm:$0xf]
      %v1176 = vld [vmem:[%s1129 + $0xb8] sm:$0xf]
      %v1177 = vld [vmem:[%s1129 + $0xbc] sm:$0xf]
      %v1226 = vunpack.c.l.b16 %v1130
      %v1227 = vunpack.c.l.b16 %v1131
      %v1228 = vunpack.c.l.b16 %v1132
      %v1229 = vunpack.c.l.b16 %v1133
      %v1230 = vunpack.c.l.b16 %v1134
      %v1231 = vunpack.c.l.b16 %v1135
      %v1232 = vunpack.c.l.b16 %v1136
      %v1233 = vunpack.c.l.b16 %v1137
      %v1234 = vunpack.c.l.b16 %v1138
      %v1235 = vunpack.c.l.b16 %v1139
      %v1236 = vunpack.c.l.b16 %v1140
      %v1237 = vunpack.c.l.b16 %v1141
      %v1238 = vunpack.c.l.b16 %v1142
      %v1239 = vunpack.c.l.b16 %v1143
      %v1240 = vunpack.c.l.b16 %v1144
      %v1241 = vunpack.c.l.b16 %v1145
      %v1242 = vunpack.c.l.b16 %v1146
      %v1243 = vunpack.c.l.b16 %v1147
      %v1244 = vunpack.c.l.b16 %v1148
      %v1245 = vunpack.c.l.b16 %v1149
      %v1246 = vunpack.c.l.b16 %v1150
      %v1247 = vunpack.c.l.b16 %v1151
      %v1248 = vunpack.c.l.b16 %v1152
      %v1249 = vunpack.c.l.b16 %v1153
      %v1250 = vunpack.c.l.b16 %v1154
      %v1251 = vunpack.c.l.b16 %v1155
      %v1252 = vunpack.c.l.b16 %v1156
      %v1253 = vunpack.c.l.b16 %v1157
      %v1254 = vunpack.c.l.b16 %v1158
      %v1255 = vunpack.c.l.b16 %v1159
      %v1256 = vunpack.c.l.b16 %v1160
      %v1257 = vunpack.c.l.b16 %v1161
      %v1258 = vunpack.c.l.b16 %v1162
      %v1259 = vunpack.c.l.b16 %v1163
      %v1260 = vunpack.c.l.b16 %v1164
      %v1261 = vunpack.c.l.b16 %v1165
      %v1262 = vunpack.c.l.b16 %v1166
      %v1263 = vunpack.c.l.b16 %v1167
      %v1264 = vunpack.c.l.b16 %v1168
      %v1265 = vunpack.c.l.b16 %v1169
      %v1266 = vunpack.c.l.b16 %v1170
      %v1267 = vunpack.c.l.b16 %v1171
      %v1268 = vunpack.c.l.b16 %v1172
      %v1269 = vunpack.c.l.b16 %v1173
      %v1270 = vunpack.c.l.b16 %v1174
      %v1271 = vunpack.c.l.b16 %v1175
      %v1272 = vunpack.c.l.b16 %v1176
      %v1273 = vunpack.c.l.b16 %v1177
      %v1274 = vpack.c.b16 %v1227, %v1226
      %v1275 = vpack.c.b16 %v1229, %v1228
      %v1276 = vpack.c.b16 %v1231, %v1230
      %v1277 = vpack.c.b16 %v1233, %v1232
      %v1278 = vpack.c.b16 %v1235, %v1234
      %v1279 = vpack.c.b16 %v1237, %v1236
      %v1280 = vpack.c.b16 %v1239, %v1238
      %v1281 = vpack.c.b16 %v1241, %v1240
      %v1282 = vpack.c.b16 %v1243, %v1242
      %v1283 = vpack.c.b16 %v1245, %v1244
      %v1284 = vpack.c.b16 %v1247, %v1246
      %v1285 = vpack.c.b16 %v1249, %v1248
      %v1286 = vpack.c.b16 %v1251, %v1250
      %v1287 = vpack.c.b16 %v1253, %v1252
      %v1288 = vpack.c.b16 %v1255, %v1254
      %v1289 = vpack.c.b16 %v1257, %v1256
      %v1290 = vpack.c.b16 %v1259, %v1258
      %v1291 = vpack.c.b16 %v1261, %v1260
      %v1292 = vpack.c.b16 %v1263, %v1262
      %v1293 = vpack.c.b16 %v1265, %v1264
      %v1294 = vpack.c.b16 %v1267, %v1266
      %v1295 = vpack.c.b16 %v1269, %v1268
      %v1296 = vpack.c.b16 %v1271, %v1270
      %v1297 = vpack.c.b16 %v1273, %v1272
      %1322 = vmatprep.subr.bf16.mxu0 0
      %1323 = vmatpush1.bf16.msra.mxu0 %v1274
      %1324 = vmatprep.subr.bf16.mxu0 0
      %1325 = vmatpush1.bf16.msra.mxu0 %v1275
      %1326 = vmatprep.subr.bf16.mxu0 0
      %1327 = vmatpush1.bf16.msra.mxu0 %v1276
      %1328 = vmatprep.subr.bf16.mxu0 0
      %1329 = vmatpush1.bf16.msra.mxu0 %v1277
      %1330 = vmatprep.subr.bf16.mxu0 0
      %1331 = vmatpush1.bf16.msra.mxu0 %v1278
      %1332 = vmatprep.subr.bf16.mxu0 0
      %1333 = vmatpush1.bf16.msra.mxu0 %v1279
      %1334 = vmatprep.subr.bf16.mxu0 0
      %1335 = vmatpush1.bf16.msra.mxu0 %v1280
      %1336 = vmatprep.subr.bf16.mxu0 0
      %1337 = vmatpush1.bf16.msra.mxu0 %v1281
      %1338 = vmatprep.subr.bf16.mxu0 0
      %1339 = vmatpush1.bf16.msra.mxu0 %v1282
      %1340 = vmatprep.subr.bf16.mxu0 0
      %1341 = vmatpush1.bf16.msra.mxu0 %v1283
      %1342 = vmatprep.subr.bf16.mxu0 0
      %1343 = vmatpush1.bf16.msra.mxu0 %v1284
      %1344 = vmatprep.subr.bf16.mxu0 0
      %1345 = vmatpush1.bf16.msra.mxu0 %v1285
      %1346 = vmatprep.subr.bf16.mxu0 0
      %1347 = vmatpush1.bf16.msra.mxu0 %v1286
      %1348 = vmatprep.subr.bf16.mxu0 0
      %1349 = vmatpush1.bf16.msra.mxu0 %v1287
      %1350 = vmatprep.subr.bf16.mxu0 0
      %1351 = vmatpush1.bf16.msra.mxu0 %v1288
      %1352 = vmatprep.subr.bf16.mxu0 0
      %1353 = vmatpush1.bf16.msra.mxu0 %v1289
      %1354 = vmatprep.mubr.bf16.mxu0 %v1007
      %1355 = vmatmul.mubr.bf16.gmra.mrb[0].mxu0 %v1112
      %v1356 = vpop.f32.mrb[0].mxu0
      %v1357 = vadd.f32 0.0, %v1356
      %v1358 = vpop.f32.mrb[0].mxu0
      %v1359 = vpop.f32.mrb[0].mxu0
      %v1360 = vadd.f32 0.0, %v1359
      %v1361 = vpop.f32.mrb[0].mxu0
      %1362 = vmatprep.mubr.bf16.mxu0 %v1008
      %1363 = vmatmul.mubr.bf16.gmra.mrb[0].mxu0 %v1113
      %v1364 = vpop.f32.mrb[0].mxu0
      %v1365 = vadd.f32 0.0, %v1364
      %v1366 = vpop.f32.mrb[0].mxu0
      %v1367 = vpop.f32.mrb[0].mxu0
      %v1368 = vadd.f32 0.0, %v1367
      %v1369 = vpop.f32.mrb[0].mxu0
      %1370 = vmatprep.mubr.bf16.mxu0 %v1009
      %1371 = vmatmul.mubr.bf16.gmra.mrb[0].mxu0 %v1114
      %v1372 = vpop.f32.mrb[0].mxu0
      %v1373 = vadd.f32 0.0, %v1372
      %v1374 = vpop.f32.mrb[0].mxu0
      %v1375 = vpop.f32.mrb[0].mxu0
      %v1376 = vadd.f32 0.0, %v1375
      %v1377 = vpop.f32.mrb[0].mxu0
      %1378 = vmatprep.mubr.bf16.mxu0 %v1010
      %1379 = vmatmul.mubr.bf16.gmra.mrb[0].mxu0 %v1115
      %v1380 = vpop.f32.mrb[0].mxu0
      %v1381 = vadd.f32 0.0, %v1380
      %v1382 = vpop.f32.mrb[0].mxu0
      %v1383 = vpop.f32.mrb[0].mxu0
      %v1384 = vadd.f32 0.0, %v1383
      %v1385 = vpop.f32.mrb[0].mxu0
      %1386 = vmatprep.mubr.bf16.mxu0 %v1011
      %1387 = vmatmul.mubr.bf16.gmra.mrb[0].mxu0 %v1116
      %v1388 = vpop.f32.mrb[0].mxu0
      %v1389 = vadd.f32 0.0, %v1388
      %v1390 = vpop.f32.mrb[0].mxu0
      %v1391 = vpop.f32.mrb[0].mxu0
      %v1392 = vadd.f32 0.0, %v1391
      %v1393 = vpop.f32.mrb[0].mxu0
      %1394 = vmatprep.mubr.bf16.mxu0 %v1012
      %1395 = vmatmul.mubr.bf16.gmra.mrb[0].mxu0 %v1117
      %v1396 = vpop.f32.mrb[0].mxu0
      %v1397 = vadd.f32 0.0, %v1396
      %v1398 = vpop.f32.mrb[0].mxu0
      %v1399 = vpop.f32.mrb[0].mxu0
      %v1400 = vadd.f32 0.0, %v1399
      %v1401 = vpop.f32.mrb[0].mxu0
      %1402 = vmatprep.mubr.bf16.mxu0 %v1013
      %1403 = vmatmul.mubr.bf16.gmra.mrb[0].mxu0 %v1118
      %v1404 = vpop.f32.mrb[0].mxu0
      %v1405 = vadd.f32 0.0, %v1404
      %v1406 = vpop.f32.mrb[0].mxu0
      %v1407 = vpop.f32.mrb[0].mxu0
      %v1408 = vadd.f32 0.0, %v1407
      %v1409 = vpop.f32.mrb[0].mxu0
      %1410 = vmatprep.mubr.bf16.mxu0 %v1120
      %1411 = vmatmul.mubr.bf16.gmra.mrb[0].mxu0 %v1119
      %v1412 = vpop.f32.mrb[0].mxu0
      %v1413 = vadd.f32 0.0, %v1412
      %v1414 = vpop.f32.mrb[0].mxu0
      %v1415 = vpop.f32.mrb[0].mxu0
      %v1416 = vadd.f32 0.0, %v1415
      %v1417 = vpop.f32.mrb[0].mxu0
      %1418 = vdwg.mxu0
      %1419 = vmatprep.subr.bf16.mxu0 0
      %1420 = vmatpush1.bf16.msra.mxu0 %v1290
      %1421 = vmatprep.subr.bf16.mxu0 0
      %1422 = vmatpush1.bf16.msra.mxu0 %v1291
      %1423 = vmatprep.subr.bf16.mxu0 0
      %1424 = vmatpush1.bf16.msra.mxu0 %v1292
      %1425 = vmatprep.subr.bf16.mxu0 0
      %1426 = vmatpush1.bf16.msra.mxu0 %v1293
      %1427 = vmatprep.subr.bf16.mxu0 0
      %1428 = vmatpush1.bf16.msra.mxu0 %v1294
      %1429 = vmatprep.subr.bf16.mxu0 0
      %1430 = vmatpush1.bf16.msra.mxu0 %v1295
      %1431 = vmatprep.subr.bf16.mxu0 0
      %1432 = vmatpush1.bf16.msra.mxu0 %v1296
      %1433 = vmatprep.subr.bf16.mxu0 0
      %1434 = vmatpush1.bf16.msra.mxu0 %v1297
      %1435 = vmatprep.subr.bf16.mxu0 0
      %1436 = vmatpush1.bf16.msra.mxu0 0
      %1437 = vmatprep.subr.bf16.mxu0 0
      %1438 = vmatpush1.bf16.msra.mxu0 0
      %1439 = vmatprep.subr.bf16.mxu0 0
      %1440 = vmatpush1.bf16.msra.mxu0 0
      %1441 = vmatprep.subr.bf16.mxu0 0
      %1442 = vmatpush1.bf16.msra.mxu0 0
      %1443 = vmatprep.subr.bf16.mxu0 0
      %1444 = vmatpush1.bf16.msra.mxu0 0
      %1445 = vmatprep.subr.bf16.mxu0 0
      %1446 = vmatpush1.bf16.msra.mxu0 0
      %1447 = vmatprep.subr.bf16.mxu0 0
      %1448 = vmatpush1.bf16.msra.mxu0 0
      %1449 = vmatprep.subr.bf16.mxu0 0
      %1450 = vmatpush1.bf16.msra.mxu0 0
      %1451 = vmatprep.mubr.bf16.mxu0 0
      %1452 = vmatmul.mubr.bf16.gmra.mrb[0].mxu0 %v1121
      %v1453 = vpop.f32.mrb[0].mxu0
      %v1454 = vadd.f32 %v1357, %v1453
      %v1455 = vpop.f32.mrb[0].mxu0
      %v1456 = vpop.f32.mrb[0].mxu0
      %v1457 = vadd.f32 %v1360, %v1456
      %v1458 = vpop.f32.mrb[0].mxu0
      %1459 = vmatprep.mubr.bf16.mxu0 0
      %1460 = vmatmul.mubr.bf16.gmra.mrb[0].mxu0 %v1122
      %v1461 = vpop.f32.mrb[0].mxu0
      %v1462 = vadd.f32 %v1365, %v1461
      %v1463 = vpop.f32.mrb[0].mxu0
      %v1464 = vpop.f32.mrb[0].mxu0
      %v1465 = vadd.f32 %v1368, %v1464
      %v1466 = vpop.f32.mrb[0].mxu0
      %1467 = vmatprep.mubr.bf16.mxu0 0
      %1468 = vmatmul.mubr.bf16.gmra.mrb[0].mxu0 %v1123
      %v1469 = vpop.f32.mrb[0].mxu0
      %v1470 = vadd.f32 %v1373, %v1469
      %v1471 = vpop.f32.mrb[0].mxu0
      %v1472 = vpop.f32.mrb[0].mxu0
      %v1473 = vadd.f32 %v1376, %v1472
      %v1474 = vpop.f32.mrb[0].mxu0
      %1475 = vmatprep.mubr.bf16.mxu0 0
      %1476 = vmatmul.mubr.bf16.gmra.mrb[0].mxu0 %v1124
      %v1477 = vpop.f32.mrb[0].mxu0
      %v1478 = vadd.f32 %v1381, %v1477
      %v1479 = vpop.f32.mrb[0].mxu0
      %v1480 = vpop.f32.mrb[0].mxu0
      %v1481 = vadd.f32 %v1384, %v1480
      %v1482 = vpop.f32.mrb[0].mxu0
      %1483 = vmatprep.mubr.bf16.mxu0 0
      %1484 = vmatmul.mubr.bf16.gmra.mrb[0].mxu0 %v1125
      %v1485 = vpop.f32.mrb[0].mxu0
      %v1486 = vadd.f32 %v1389, %v1485
      %v1487 = vpop.f32.mrb[0].mxu0
      %v1488 = vpop.f32.mrb[0].mxu0
      %v1489 = vadd.f32 %v1392, %v1488
      %v1490 = vpop.f32.mrb[0].mxu0
      %1491 = vmatprep.mubr.bf16.mxu0 0
      %1492 = vmatmul.mubr.bf16.gmra.mrb[0].mxu0 %v1126
      %v1493 = vpop.f32.mrb[0].mxu0
      %v1494 = vadd.f32 %v1397, %v1493
      %v1495 = vpop.f32.mrb[0].mxu0
      %v1496 = vpop.f32.mrb[0].mxu0
      %v1497 = vadd.f32 %v1400, %v1496
      %v1498 = vpop.f32.mrb[0].mxu0
      %1499 = vmatprep.mubr.bf16.mxu0 0
      %1500 = vmatmul.mubr.bf16.gmra.mrb[0].mxu0 %v1127
      %v1501 = vpop.f32.mrb[0].mxu0
      %v1502 = vadd.f32 %v1405, %v1501
      %v1503 = vpop.f32.mrb[0].mxu0
      %v1504 = vpop.f32.mrb[0].mxu0
      %v1505 = vadd.f32 %v1408, %v1504
      %v1506 = vpop.f32.mrb[0].mxu0
      %1507 = vmatprep.mubr.bf16.mxu0 0
      %1508 = vmatmul.mubr.bf16.gmra.mrb[0].mxu0 %v1128
      %v1509 = vpop.f32.mrb[0].mxu0
      %v1510 = vadd.f32 %v1413, %v1509
      %v1511 = vpop.f32.mrb[0].mxu0
      %v1512 = vpop.f32.mrb[0].mxu0
      %v1513 = vadd.f32 %v1416, %v1512
      %v1514 = vpop.f32.mrb[0].mxu0
      %1515 = vdwg.mxu0
      %v1564 = vunpack.c.l.b16 %v1022
      %v1565 = vunpack.c.l.b16 %v1023
      %v1566 = vunpack.c.l.b16 %v1024
      %v1567 = vunpack.c.l.b16 %v1025
      %v1568 = vunpack.c.l.b16 %v1026
      %v1569 = vunpack.c.l.b16 %v1027
      %v1570 = vunpack.c.l.b16 %v1028
      %v1571 = vunpack.c.l.b16 %v1029
      %v1572 = vunpack.c.l.b16 %v1030
      %v1573 = vunpack.c.l.b16 %v1031
      %v1574 = vunpack.c.l.b16 %v1032
      %v1575 = vunpack.c.l.b16 %v1033
      %v1576 = vunpack.c.l.b16 %v1034
      %v1577 = vunpack.c.l.b16 %v1035
      %v1578 = vunpack.c.l.b16 %v1036
      %v1579 = vunpack.c.l.b16 %v1037
      %v1580 = vunpack.c.l.b16 %v1038
      %v1581 = vunpack.c.l.b16 %v1039
      %v1582 = vunpack.c.l.b16 %v1040
      %v1583 = vunpack.c.l.b16 %v1041
      %v1584 = vunpack.c.l.b16 %v1042
      %v1585 = vunpack.c.l.b16 %v1043
      %v1586 = vunpack.c.l.b16 %v1044
      %v1587 = vunpack.c.l.b16 %v1045
      %v1588 = vunpack.c.l.b16 %v1046
      %v1589 = vunpack.c.l.b16 %v1047
      %v1590 = vunpack.c.l.b16 %v1048
      %v1591 = vunpack.c.l.b16 %v1049
      %v1592 = vunpack.c.l.b16 %v1050
      %v1593 = vunpack.c.l.b16 %v1051
      %v1594 = vunpack.c.l.b16 %v1052
      %v1595 = vunpack.c.l.b16 %v1053
      %v1596 = vunpack.c.l.b16 %v1054
      %v1597 = vunpack.c.l.b16 %v1055
      %v1598 = vunpack.c.l.b16 %v1056
      %v1599 = vunpack.c.l.b16 %v1057
      %v1600 = vunpack.c.l.b16 %v1058
      %v1601 = vunpack.c.l.b16 %v1059
      %v1602 = vunpack.c.l.b16 %v1060
      %v1603 = vunpack.c.l.b16 %v1061
      %v1604 = vunpack.c.l.b16 %v1062
      %v1605 = vunpack.c.l.b16 %v1063
      %v1606 = vunpack.c.l.b16 %v1064
      %v1607 = vunpack.c.l.b16 %v1065
      %v1608 = vunpack.c.l.b16 %v1066
      %v1609 = vunpack.c.l.b16 %v1067
      %v1610 = vunpack.c.l.b16 %v1068
      %v1611 = vunpack.c.l.b16 %v1069
      %v1612 = vpack.c.b16 %v1565, %v1564
      %v1613 = vpack.c.b16 %v1567, %v1566
      %v1614 = vpack.c.b16 %v1569, %v1568
      %v1615 = vpack.c.b16 %v1571, %v1570
      %v1616 = vpack.c.b16 %v1573, %v1572
      %v1617 = vpack.c.b16 %v1575, %v1574
      %v1618 = vpack.c.b16 %v1577, %v1576
      %v1619 = vpack.c.b16 %v1579, %v1578
      %v1620 = vpack.c.b16 %v1581, %v1580
      %v1621 = vpack.c.b16 %v1583, %v1582
      %v1622 = vpack.c.b16 %v1585, %v1584
      %v1623 = vpack.c.b16 %v1587, %v1586
      %v1624 = vpack.c.b16 %v1589, %v1588
      %v1625 = vpack.c.b16 %v1591, %v1590
      %v1626 = vpack.c.b16 %v1593, %v1592
      %v1627 = vpack.c.b16 %v1595, %v1594
      %v1628 = vpack.c.b16 %v1597, %v1596
      %v1629 = vpack.c.b16 %v1599, %v1598
      %v1630 = vpack.c.b16 %v1601, %v1600
      %v1631 = vpack.c.b16 %v1603, %v1602
      %v1632 = vpack.c.b16 %v1605, %v1604
      %v1633 = vpack.c.b16 %v1607, %v1606
      %v1634 = vpack.c.b16 %v1609, %v1608
      %v1635 = vpack.c.b16 %v1611, %v1610
      %1660 = vmatprep.subr.bf16.mxu0 0
      %1661 = vmatpush1.bf16.msra.mxu0 %v1612
      %1662 = vmatprep.subr.bf16.mxu0 0
      %1663 = vmatpush1.bf16.msra.mxu0 %v1613
      %1664 = vmatprep.subr.bf16.mxu0 0
      %1665 = vmatpush1.bf16.msra.mxu0 %v1614
      %1666 = vmatprep.subr.bf16.mxu0 0
      %1667 = vmatpush1.bf16.msra.mxu0 %v1615
      %1668 = vmatprep.subr.bf16.mxu0 0
      %1669 = vmatpush1.bf16.msra.mxu0 %v1616
      %1670 = vmatprep.subr.bf16.mxu0 0
      %1671 = vmatpush1.bf16.msra.mxu0 %v1617
      %1672 = vmatprep.subr.bf16.mxu0 0
      %1673 = vmatpush1.bf16.msra.mxu0 %v1618
      %1674 = vmatprep.subr.bf16.mxu0 0
      %1675 = vmatpush1.bf16.msra.mxu0 %v1619
      %1676 = vmatprep.subr.bf16.mxu0 0
      %1677 = vmatpush1.bf16.msra.mxu0 %v1620
      %1678 = vmatprep.subr.bf16.mxu0 0
      %1679 = vmatpush1.bf16.msra.mxu0 %v1621
      %1680 = vmatprep.subr.bf16.mxu0 0
      %1681 = vmatpush1.bf16.msra.mxu0 %v1622
      %1682 = vmatprep.subr.bf16.mxu0 0
      %1683 = vmatpush1.bf16.msra.mxu0 %v1623
      %1684 = vmatprep.subr.bf16.mxu0 0
      %1685 = vmatpush1.bf16.msra.mxu0 %v1624
      %1686 = vmatprep.subr.bf16.mxu0 0
      %1687 = vmatpush1.bf16.msra.mxu0 %v1625
      %1688 = vmatprep.subr.bf16.mxu0 0
      %1689 = vmatpush1.bf16.msra.mxu0 %v1626
      %1690 = vmatprep.subr.bf16.mxu0 0
      %1691 = vmatpush1.bf16.msra.mxu0 %v1627
      %1692 = vmatprep.mubr.bf16.mxu0 %v1006
      %1693 = vmatmul.mubr.bf16.gmra.mrb[0].mxu0 %v998
      %v1694 = vpop.f32.mrb[0].mxu0
      %v1695 = vadd.f32 %v1454, %v1694
      %v1696 = vpop.f32.mrb[0].mxu0
      %v1697 = vpop.f32.mrb[0].mxu0
      %v1698 = vadd.f32 %v1457, %v1697
      %v1699 = vpop.f32.mrb[0].mxu0
      %1700 = vmatprep.mubr.bf16.mxu0 %v1007
      %1701 = vmatmul.mubr.bf16.gmra.mrb[0].mxu0 %v999
      %v1702 = vpop.f32.mrb[0].mxu0
      %v1703 = vadd.f32 %v1462, %v1702
      %v1704 = vpop.f32.mrb[0].mxu0
      %v1705 = vpop.f32.mrb[0].mxu0
      %v1706 = vadd.f32 %v1465, %v1705
      %v1707 = vpop.f32.mrb[0].mxu0
      %1708 = vmatprep.mubr.bf16.mxu0 %v1008
      %1709 = vmatmul.mubr.bf16.gmra.mrb[0].mxu0 %v1000
      %v1710 = vpop.f32.mrb[0].mxu0
      %v1711 = vadd.f32 %v1470, %v1710
      %v1712 = vpop.f32.mrb[0].mxu0
      %v1713 = vpop.f32.mrb[0].mxu0
      %v1714 = vadd.f32 %v1473, %v1713
      %v1715 = vpop.f32.mrb[0].mxu0
      %1716 = vmatprep.mubr.bf16.mxu0 %v1009
      %1717 = vmatmul.mubr.bf16.gmra.mrb[0].mxu0 %v1001
      %v1718 = vpop.f32.mrb[0].mxu0
      %v1719 = vadd.f32 %v1478, %v1718
      %v1720 = vpop.f32.mrb[0].mxu0
      %v1721 = vpop.f32.mrb[0].mxu0
      %v1722 = vadd.f32 %v1481, %v1721
      %v1723 = vpop.f32.mrb[0].mxu0
      %1724 = vmatprep.mubr.bf16.mxu0 %v1010
      %1725 = vmatmul.mubr.bf16.gmra.mrb[0].mxu0 %v1002
      %v1726 = vpop.f32.mrb[0].mxu0
      %v1727 = vadd.f32 %v1486, %v1726
      %v1728 = vpop.f32.mrb[0].mxu0
      %v1729 = vpop.f32.mrb[0].mxu0
      %v1730 = vadd.f32 %v1489, %v1729
      %v1731 = vpop.f32.mrb[0].mxu0
      %1732 = vmatprep.mubr.bf16.mxu0 %v1011
      %1733 = vmatmul.mubr.bf16.gmra.mrb[0].mxu0 %v1003
      %v1734 = vpop.f32.mrb[0].mxu0
      %v1735 = vadd.f32 %v1494, %v1734
      %v1736 = vpop.f32.mrb[0].mxu0
      %v1737 = vpop.f32.mrb[0].mxu0
      %v1738 = vadd.f32 %v1497, %v1737
      %v1739 = vpop.f32.mrb[0].mxu0
      %1740 = vmatprep.mubr.bf16.mxu0 %v1012
      %1741 = vmatmul.mubr.bf16.gmra.mrb[0].mxu0 %v1004
      %v1742 = vpop.f32.mrb[0].mxu0
      %v1743 = vadd.f32 %v1502, %v1742
      %v1744 = vpop.f32.mrb[0].mxu0
      %v1745 = vpop.f32.mrb[0].mxu0
      %v1746 = vadd.f32 %v1505, %v1745
      %v1747 = vpop.f32.mrb[0].mxu0
      %1748 = vmatprep.mubr.bf16.mxu0 %v1013
      %1749 = vmatmul.mubr.bf16.gmra.mrb[0].mxu0 %v1005
      %v1750 = vpop.f32.mrb[0].mxu0
      %v1751 = vadd.f32 %v1510, %v1750
      %v1752 = vpop.f32.mrb[0].mxu0
      %v1753 = vpop.f32.mrb[0].mxu0
      %v1754 = vadd.f32 %v1513, %v1753
      %v1755 = vpop.f32.mrb[0].mxu0
      %1756 = vdwg.mxu0
      %1757 = vmatprep.subr.bf16.mxu0 0
      %1758 = vmatpush1.bf16.msra.mxu0 %v1628
      %1759 = vmatprep.subr.bf16.mxu0 0
      %1760 = vmatpush1.bf16.msra.mxu0 %v1629
      %1761 = vmatprep.subr.bf16.mxu0 0
      %1762 = vmatpush1.bf16.msra.mxu0 %v1630
      %1763 = vmatprep.subr.bf16.mxu0 0
      %1764 = vmatpush1.bf16.msra.mxu0 %v1631
      %1765 = vmatprep.subr.bf16.mxu0 0
      %1766 = vmatpush1.bf16.msra.mxu0 %v1632
      %1767 = vmatprep.subr.bf16.mxu0 0
      %1768 = vmatpush1.bf16.msra.mxu0 %v1633
      %1769 = vmatprep.subr.bf16.mxu0 0
      %1770 = vmatpush1.bf16.msra.mxu0 %v1634
      %1771 = vmatprep.subr.bf16.mxu0 0
      %1772 = vmatpush1.bf16.msra.mxu0 %v1635
      %1773 = vmatprep.subr.bf16.mxu0 0
      %1774 = vmatpush1.bf16.msra.mxu0 0
      %1775 = vmatprep.subr.bf16.mxu0 0
      %1776 = vmatpush1.bf16.msra.mxu0 0
      %1777 = vmatprep.subr.bf16.mxu0 0
      %1778 = vmatpush1.bf16.msra.mxu0 0
      %1779 = vmatprep.subr.bf16.mxu0 0
      %1780 = vmatpush1.bf16.msra.mxu0 0
      %1781 = vmatprep.subr.bf16.mxu0 0
      %1782 = vmatpush1.bf16.msra.mxu0 0
      %1783 = vmatprep.subr.bf16.mxu0 0
      %1784 = vmatpush1.bf16.msra.mxu0 0
      %1785 = vmatprep.subr.bf16.mxu0 0
      %1786 = vmatpush1.bf16.msra.mxu0 0
      %1787 = vmatprep.subr.bf16.mxu0 0
      %1788 = vmatpush1.bf16.msra.mxu0 0
      %1789 = vmatprep.mubr.bf16.mxu0 0
      %1790 = vmatmul.mubr.bf16.gmra.mrb[0].mxu0 %v1014
      %v1791 = vpop.f32.mrb[0].mxu0
      %v1792 = vadd.f32 %v1695, %v1791
      %v1793 = vpop.f32.mrb[0].mxu0
      %v1794 = vpop.f32.mrb[0].mxu0
      %v1795 = vadd.f32 %v1698, %v1794
      %v1796 = vpop.f32.mrb[0].mxu0
      %1797 = vmatprep.mubr.bf16.mxu0 0
      %1798 = vmatmul.mubr.bf16.gmra.mrb[0].mxu0 %v1015
      %v1799 = vpop.f32.mrb[0].mxu0
      %v1800 = vadd.f32 %v1703, %v1799
      %v1801 = vpop.f32.mrb[0].mxu0
      %v1802 = vpop.f32.mrb[0].mxu0
      %v1803 = vadd.f32 %v1706, %v1802
      %v1804 = vpop.f32.mrb[0].mxu0
      %1805 = vmatprep.mubr.bf16.mxu0 0
      %1806 = vmatmul.mubr.bf16.gmra.mrb[0].mxu0 %v1016
      %v1807 = vpop.f32.mrb[0].mxu0
      %v1808 = vadd.f32 %v1711, %v1807
      %v1809 = vpop.f32.mrb[0].mxu0
      %v1810 = vpop.f32.mrb[0].mxu0
      %v1811 = vadd.f32 %v1714, %v1810
      %v1812 = vpop.f32.mrb[0].mxu0
      %1813 = vmatprep.mubr.bf16.mxu0 0
      %1814 = vmatmul.mubr.bf16.gmra.mrb[0].mxu0 %v1017
      %v1815 = vpop.f32.mrb[0].mxu0
      %v1816 = vadd.f32 %v1719, %v1815
      %v1817 = vpop.f32.mrb[0].mxu0
      %v1818 = vpop.f32.mrb[0].mxu0
      %v1819 = vadd.f32 %v1722, %v1818
      %v1820 = vpop.f32.mrb[0].mxu0
      %1821 = vmatprep.mubr.bf16.mxu0 0
      %1822 = vmatmul.mubr.bf16.gmra.mrb[0].mxu0 %v1018
      %v1823 = vpop.f32.mrb[0].mxu0
      %v1824 = vadd.f32 %v1727, %v1823
      %v1825 = vpop.f32.mrb[0].mxu0
      %v1826 = vpop.f32.mrb[0].mxu0
      %v1827 = vadd.f32 %v1730, %v1826
      %v1828 = vpop.f32.mrb[0].mxu0
      %1829 = vmatprep.mubr.bf16.mxu0 0
      %1830 = vmatmul.mubr.bf16.gmra.mrb[0].mxu0 %v1019
      %v1831 = vpop.f32.mrb[0].mxu0
      %v1832 = vadd.f32 %v1735, %v1831
      %v1833 = vpop.f32.mrb[0].mxu0
      %v1834 = vpop.f32.mrb[0].mxu0
      %v1835 = vadd.f32 %v1738, %v1834
      %v1836 = vpop.f32.mrb[0].mxu0
      %1837 = vmatprep.mubr.bf16.mxu0 0
      %1838 = vmatmul.mubr.bf16.gmra.mrb[0].mxu0 %v1020
      %v1839 = vpop.f32.mrb[0].mxu0
      %v1840 = vadd.f32 %v1743, %v1839
      %v1841 = vpop.f32.mrb[0].mxu0
      %v1842 = vpop.f32.mrb[0].mxu0
      %v1843 = vadd.f32 %v1746, %v1842
      %v1844 = vpop.f32.mrb[0].mxu0
      %1845 = vmatprep.mubr.bf16.mxu0 0
      %1846 = vmatmul.mubr.bf16.gmra.mrb[0].mxu0 %v1021
      %v1847 = vpop.f32.mrb[0].mxu0
      %v1848 = vadd.f32 %v1751, %v1847
      %v1849 = vpop.f32.mrb[0].mxu0
      %v1850 = vpop.f32.mrb[0].mxu0
      %v1851 = vadd.f32 %v1754, %v1850
      %v1852 = vpop.f32.mrb[0].mxu0
      %1853 = vdwg.mxu0
      %v1854 = vrot.slane %v593, 7
      %v1855 = vrot.slane %v594, 7
      %v1856 = vsel %vm916, %v1854, %v1855
      %v1857 = vsel %vm916, %v1071, %v1854
      %v1858 = vsel %vm916, %v1855, %v904
      %v1859 = vmul.f32 %v1858, %v836
      %v1860 = vmul.f32 %v927, %v837
      %v1861 = vmul.f32 %v926, %v838
      %v1862 = vmul.f32 %v925, %v839
      %v1863 = vmul.f32 %v924, %v840
      %v1864 = vmul.f32 %v923, %v841
      %v1865 = vmul.f32 %v922, %v842
      %v1866 = vmul.f32 %v921, %v843
      %v1867 = vmul.f32 %v920, %v844
      %v1868 = vmul.f32 %v919, %v845
      %v1869 = vmul.f32 %v918, %v846
      %v1870 = vmul.f32 %v917, %v847
      %v1871 = vmul.f32 %v1073, %v848
      %v1872 = vmul.f32 %v1072, %v849
      %v1873 = vmul.f32 %v1857, %v850
      %v1874 = vmul.f32 %v1856, %v851
      %v1875 = vrot.slane %v593, 1
      %v1876 = vrot.slane %v594, 1
      %v1877 = vsel %vm965, %v1875, %v1876
      %v1878 = vsel %vm965, %v1092, %v1875
      %v1879 = vsel %vm965, %v1876, %v953
      %v1880 = vmul.f32 %v976, %v884
      %v1881 = vmul.f32 %v975, %v885
      %v1882 = vmul.f32 %v974, %v886
      %v1883 = vmul.f32 %v973, %v887
      %v1884 = vmul.f32 %v972, %v888
      %v1885 = vmul.f32 %v971, %v889
      %v1886 = vmul.f32 %v970, %v890
      %v1887 = vmul.f32 %v969, %v891
      %v1888 = vmul.f32 %v968, %v892
      %v1889 = vmul.f32 %v967, %v893
      %v1890 = vmul.f32 %v966, %v894
      %v1891 = vmul.f32 %v1094, %v895
      %v1892 = vmul.f32 %v1093, %v896
      %v1893 = vmul.f32 %v1878, %v897
      %v1894 = vmul.f32 %v1877, %v898
      %v1895 = vmul.f32 %v1879, %v899
      %v1896 = vpack.c.bf16 %v1860, %v1859
      %v1897 = vpack.c.bf16 %v1862, %v1861
      %v1898 = vpack.c.bf16 %v1864, %v1863
      %v1899 = vpack.c.bf16 %v1866, %v1865
      %v1900 = vpack.c.bf16 %v1868, %v1867
      %v1901 = vpack.c.bf16 %v1870, %v1869
      %v1902 = vpack.c.bf16 %v1872, %v1871
      %v1903 = vpack.c.bf16 %v1874, %v1873
      %v1904 = vpack.c.bf16 %v594, %v593
      %v1905 = vpack.c.bf16 %v1881, %v1880
      %v1906 = vpack.c.bf16 %v1883, %v1882
      %v1907 = vpack.c.bf16 %v1885, %v1884
      %v1908 = vpack.c.bf16 %v1887, %v1886
      %v1909 = vpack.c.bf16 %v1889, %v1888
      %v1910 = vpack.c.bf16 %v1891, %v1890
      %v1911 = vpack.c.bf16 %v1893, %v1892
      %v1912 = vpack.c.bf16 %v1895, %v1894
      %s1913 = scalar_lea.vmem %s5, 384
      %v1914 = vld [vmem:[%s1913] sm:$0xf]
      %v1915 = vld [vmem:[%s1913 + $0x4] sm:$0xf]
      %v1916 = vld [vmem:[%s1913 + $0x8] sm:$0xf]
      %v1917 = vld [vmem:[%s1913 + $0xc] sm:$0xf]
      %v1918 = vld [vmem:[%s1913 + $0x10] sm:$0xf]
      %v1919 = vld [vmem:[%s1913 + $0x14] sm:$0xf]
      %v1920 = vld [vmem:[%s1913 + $0x18] sm:$0xf]
      %v1921 = vld [vmem:[%s1913 + $0x1c] sm:$0xf]
      %v1922 = vld [vmem:[%s1913 + $0x20] sm:$0xf]
      %v1923 = vld [vmem:[%s1913 + $0x24] sm:$0xf]
      %v1924 = vld [vmem:[%s1913 + $0x28] sm:$0xf]
      %v1925 = vld [vmem:[%s1913 + $0x2c] sm:$0xf]
      %v1926 = vld [vmem:[%s1913 + $0x30] sm:$0xf]
      %v1927 = vld [vmem:[%s1913 + $0x34] sm:$0xf]
      %v1928 = vld [vmem:[%s1913 + $0x38] sm:$0xf]
      %v1929 = vld [vmem:[%s1913 + $0x3c] sm:$0xf]
      %v1930 = vld [vmem:[%s1913 + $0x40] sm:$0xf]
      %v1931 = vld [vmem:[%s1913 + $0x44] sm:$0xf]
      %v1932 = vld [vmem:[%s1913 + $0x48] sm:$0xf]
      %v1933 = vld [vmem:[%s1913 + $0x4c] sm:$0xf]
      %v1934 = vld [vmem:[%s1913 + $0x50] sm:$0xf]
      %v1935 = vld [vmem:[%s1913 + $0x54] sm:$0xf]
      %v1936 = vld [vmem:[%s1913 + $0x58] sm:$0xf]
      %v1937 = vld [vmem:[%s1913 + $0x5c] sm:$0xf]
      %v1938 = vld [vmem:[%s1913 + $0x60] sm:$0xf]
      %v1939 = vld [vmem:[%s1913 + $0x64] sm:$0xf]
      %v1940 = vld [vmem:[%s1913 + $0x68] sm:$0xf]
      %v1941 = vld [vmem:[%s1913 + $0x6c] sm:$0xf]
      %v1942 = vld [vmem:[%s1913 + $0x70] sm:$0xf]
      %v1943 = vld [vmem:[%s1913 + $0x74] sm:$0xf]
      %v1944 = vld [vmem:[%s1913 + $0x78] sm:$0xf]
      %v1945 = vld [vmem:[%s1913 + $0x7c] sm:$0xf]
      %v1946 = vld [vmem:[%s1913 + $0x80] sm:$0xf]
      %v1947 = vld [vmem:[%s1913 + $0x84] sm:$0xf]
      %v1948 = vld [vmem:[%s1913 + $0x88] sm:$0xf]
      %v1949 = vld [vmem:[%s1913 + $0x8c] sm:$0xf]
      %v1950 = vld [vmem:[%s1913 + $0x90] sm:$0xf]
      %v1951 = vld [vmem:[%s1913 + $0x94] sm:$0xf]
      %v1952 = vld [vmem:[%s1913 + $0x98] sm:$0xf]
      %v1953 = vld [vmem:[%s1913 + $0x9c] sm:$0xf]
      %v1954 = vld [vmem:[%s1913 + $0xa0] sm:$0xf]
      %v1955 = vld [vmem:[%s1913 + $0xa4] sm:$0xf]
      %v1956 = vld [vmem:[%s1913 + $0xa8] sm:$0xf]
      %v1957 = vld [vmem:[%s1913 + $0xac] sm:$0xf]
      %v1958 = vld [vmem:[%s1913 + $0xb0] sm:$0xf]
      %v1959 = vld [vmem:[%s1913 + $0xb4] sm:$0xf]
      %v1960 = vld [vmem:[%s1913 + $0xb8] sm:$0xf]
      %v1961 = vld [vmem:[%s1913 + $0xbc] sm:$0xf]
      %v2010 = vunpack.c.l.b16 %v1914
      %v2011 = vunpack.c.l.b16 %v1915
      %v2012 = vunpack.c.l.b16 %v1916
      %v2013 = vunpack.c.l.b16 %v1917
      %v2014 = vunpack.c.l.b16 %v1918
      %v2015 = vunpack.c.l.b16 %v1919
      %v2016 = vunpack.c.l.b16 %v1920
      %v2017 = vunpack.c.l.b16 %v1921
      %v2018 = vunpack.c.l.b16 %v1922
      %v2019 = vunpack.c.l.b16 %v1923
      %v2020 = vunpack.c.l.b16 %v1924
      %v2021 = vunpack.c.l.b16 %v1925
      %v2022 = vunpack.c.l.b16 %v1926
      %v2023 = vunpack.c.l.b16 %v1927
      %v2024 = vunpack.c.l.b16 %v1928
      %v2025 = vunpack.c.l.b16 %v1929
      %v2026 = vunpack.c.l.b16 %v1930
      %v2027 = vunpack.c.l.b16 %v1931
      %v2028 = vunpack.c.l.b16 %v1932
      %v2029 = vunpack.c.l.b16 %v1933
      %v2030 = vunpack.c.l.b16 %v1934
      %v2031 = vunpack.c.l.b16 %v1935
      %v2032 = vunpack.c.l.b16 %v1936
      %v2033 = vunpack.c.l.b16 %v1937
      %v2034 = vunpack.c.l.b16 %v1938
      %v2035 = vunpack.c.l.b16 %v1939
      %v2036 = vunpack.c.l.b16 %v1940
      %v2037 = vunpack.c.l.b16 %v1941
      %v2038 = vunpack.c.l.b16 %v1942
      %v2039 = vunpack.c.l.b16 %v1943
      %v2040 = vunpack.c.l.b16 %v1944
      %v2041 = vunpack.c.l.b16 %v1945
      %v2042 = vunpack.c.l.b16 %v1946
      %v2043 = vunpack.c.l.b16 %v1947
      %v2044 = vunpack.c.l.b16 %v1948
      %v2045 = vunpack.c.l.b16 %v1949
      %v2046 = vunpack.c.l.b16 %v1950
      %v2047 = vunpack.c.l.b16 %v1951
      %v2048 = vunpack.c.l.b16 %v1952
      %v2049 = vunpack.c.l.b16 %v1953
      %v2050 = vunpack.c.l.b16 %v1954
      %v2051 = vunpack.c.l.b16 %v1955
      %v2052 = vunpack.c.l.b16 %v1956
      %v2053 = vunpack.c.l.b16 %v1957
      %v2054 = vunpack.c.l.b16 %v1958
      %v2055 = vunpack.c.l.b16 %v1959
      %v2056 = vunpack.c.l.b16 %v1960
      %v2057 = vunpack.c.l.b16 %v1961
      %v2058 = vpack.c.b16 %v2011, %v2010
      %v2059 = vpack.c.b16 %v2013, %v2012
      %v2060 = vpack.c.b16 %v2015, %v2014
      %v2061 = vpack.c.b16 %v2017, %v2016
      %v2062 = vpack.c.b16 %v2019, %v2018
      %v2063 = vpack.c.b16 %v2021, %v2020
      %v2064 = vpack.c.b16 %v2023, %v2022
      %v2065 = vpack.c.b16 %v2025, %v2024
      %v2066 = vpack.c.b16 %v2027, %v2026
      %v2067 = vpack.c.b16 %v2029, %v2028
      %v2068 = vpack.c.b16 %v2031, %v2030
      %v2069 = vpack.c.b16 %v2033, %v2032
      %v2070 = vpack.c.b16 %v2035, %v2034
      %v2071 = vpack.c.b16 %v2037, %v2036
      %v2072 = vpack.c.b16 %v2039, %v2038
      %v2073 = vpack.c.b16 %v2041, %v2040
      %v2074 = vpack.c.b16 %v2043, %v2042
      %v2075 = vpack.c.b16 %v2045, %v2044
      %v2076 = vpack.c.b16 %v2047, %v2046
      %v2077 = vpack.c.b16 %v2049, %v2048
      %v2078 = vpack.c.b16 %v2051, %v2050
      %v2079 = vpack.c.b16 %v2053, %v2052
      %v2080 = vpack.c.b16 %v2055, %v2054
      %v2081 = vpack.c.b16 %v2057, %v2056
      %2106 = vmatprep.subr.bf16.mxu0 0
      %2107 = vmatpush1.bf16.msra.mxu0 %v2058
      %2108 = vmatprep.subr.bf16.mxu0 0
      %2109 = vmatpush1.bf16.msra.mxu0 %v2059
      %2110 = vmatprep.subr.bf16.mxu0 0
      %2111 = vmatpush1.bf16.msra.mxu0 %v2060
      %2112 = vmatprep.subr.bf16.mxu0 0
      %2113 = vmatpush1.bf16.msra.mxu0 %v2061
      %2114 = vmatprep.subr.bf16.mxu0 0
      %2115 = vmatpush1.bf16.msra.mxu0 %v2062
      %2116 = vmatprep.subr.bf16.mxu0 0
      %2117 = vmatpush1.bf16.msra.mxu0 %v2063
      %2118 = vmatprep.subr.bf16.mxu0 0
      %2119 = vmatpush1.bf16.msra.mxu0 %v2064
      %2120 = vmatprep.subr.bf16.mxu0 0
      %2121 = vmatpush1.bf16.msra.mxu0 %v2065
      %2122 = vmatprep.subr.bf16.mxu0 0
      %2123 = vmatpush1.bf16.msra.mxu0 %v2066
      %2124 = vmatprep.subr.bf16.mxu0 0
      %2125 = vmatpush1.bf16.msra.mxu0 %v2067
      %2126 = vmatprep.subr.bf16.mxu0 0
      %2127 = vmatpush1.bf16.msra.mxu0 %v2068
      %2128 = vmatprep.subr.bf16.mxu0 0
      %2129 = vmatpush1.bf16.msra.mxu0 %v2069
      %2130 = vmatprep.subr.bf16.mxu0 0
      %2131 = vmatpush1.bf16.msra.mxu0 %v2070
      %2132 = vmatprep.subr.bf16.mxu0 0
      %2133 = vmatpush1.bf16.msra.mxu0 %v2071
      %2134 = vmatprep.subr.bf16.mxu0 0
      %2135 = vmatpush1.bf16.msra.mxu0 %v2072
      %2136 = vmatprep.subr.bf16.mxu0 0
      %2137 = vmatpush1.bf16.msra.mxu0 %v2073
      %2138 = vmatprep.mubr.bf16.mxu0 %v1008
      %2139 = vmatmul.mubr.bf16.gmra.mrb[0].mxu0 %v1896
      %v2140 = vpop.f32.mrb[0].mxu0
      %v2141 = vadd.f32 0.0, %v2140
      %v2142 = vpop.f32.mrb[0].mxu0
      %v2143 = vpop.f32.mrb[0].mxu0
      %v2144 = vadd.f32 0.0, %v2143
      %v2145 = vpop.f32.mrb[0].mxu0
      %2146 = vmatprep.mubr.bf16.mxu0 %v1009
      %2147 = vmatmul.mubr.bf16.gmra.mrb[0].mxu0 %v1897
      %v2148 = vpop.f32.mrb[0].mxu0
      %v2149 = vadd.f32 0.0, %v2148
      %v2150 = vpop.f32.mrb[0].mxu0
      %v2151 = vpop.f32.mrb[0].mxu0
      %v2152 = vadd.f32 0.0, %v2151
      %v2153 = vpop.f32.mrb[0].mxu0
      %2154 = vmatprep.mubr.bf16.mxu0 %v1010
      %2155 = vmatmul.mubr.bf16.gmra.mrb[0].mxu0 %v1898
      %v2156 = vpop.f32.mrb[0].mxu0
      %v2157 = vadd.f32 0.0, %v2156
      %v2158 = vpop.f32.mrb[0].mxu0
      %v2159 = vpop.f32.mrb[0].mxu0
      %v2160 = vadd.f32 0.0, %v2159
      %v2161 = vpop.f32.mrb[0].mxu0
      %2162 = vmatprep.mubr.bf16.mxu0 %v1011
      %2163 = vmatmul.mubr.bf16.gmra.mrb[0].mxu0 %v1899
      %v2164 = vpop.f32.mrb[0].mxu0
      %v2165 = vadd.f32 0.0, %v2164
      %v2166 = vpop.f32.mrb[0].mxu0
      %v2167 = vpop.f32.mrb[0].mxu0
      %v2168 = vadd.f32 0.0, %v2167
      %v2169 = vpop.f32.mrb[0].mxu0
      %2170 = vmatprep.mubr.bf16.mxu0 %v1012
      %2171 = vmatmul.mubr.bf16.gmra.mrb[0].mxu0 %v1900
      %v2172 = vpop.f32.mrb[0].mxu0
      %v2173 = vadd.f32 0.0, %v2172
      %v2174 = vpop.f32.mrb[0].mxu0
      %v2175 = vpop.f32.mrb[0].mxu0
      %v2176 = vadd.f32 0.0, %v2175
      %v2177 = vpop.f32.mrb[0].mxu0
      %2178 = vmatprep.mubr.bf16.mxu0 %v1013
      %2179 = vmatmul.mubr.bf16.gmra.mrb[0].mxu0 %v1901
      %v2180 = vpop.f32.mrb[0].mxu0
      %v2181 = vadd.f32 0.0, %v2180
      %v2182 = vpop.f32.mrb[0].mxu0
      %v2183 = vpop.f32.mrb[0].mxu0
      %v2184 = vadd.f32 0.0, %v2183
      %v2185 = vpop.f32.mrb[0].mxu0
      %2186 = vmatprep.mubr.bf16.mxu0 %v1120
      %2187 = vmatmul.mubr.bf16.gmra.mrb[0].mxu0 %v1902
      %v2188 = vpop.f32.mrb[0].mxu0
      %v2189 = vadd.f32 0.0, %v2188
      %v2190 = vpop.f32.mrb[0].mxu0
      %v2191 = vpop.f32.mrb[0].mxu0
      %v2192 = vadd.f32 0.0, %v2191
      %v2193 = vpop.f32.mrb[0].mxu0
      %2194 = vmatprep.mubr.bf16.mxu0 %v1904
      %2195 = vmatmul.mubr.bf16.gmra.mrb[0].mxu0 %v1903
      %v2196 = vpop.f32.mrb[0].mxu0
      %v2197 = vadd.f32 0.0, %v2196
      %v2198 = vpop.f32.mrb[0].mxu0
      %v2199 = vpop.f32.mrb[0].mxu0
      %v2200 = vadd.f32 0.0, %v2199
      %v2201 = vpop.f32.mrb[0].mxu0
      %2202 = vdwg.mxu0
      %2203 = vmatprep.subr.bf16.mxu0 0
      %2204 = vmatpush1.bf16.msra.mxu0 %v2074
      %2205 = vmatprep.subr.bf16.mxu0 0
      %2206 = vmatpush1.bf16.msra.mxu0 %v2075
      %2207 = vmatprep.subr.bf16.mxu0 0
      %2208 = vmatpush1.bf16.msra.mxu0 %v2076
      %2209 = vmatprep.subr.bf16.mxu0 0
      %2210 = vmatpush1.bf16.msra.mxu0 %v2077
      %2211 = vmatprep.subr.bf16.mxu0 0
      %2212 = vmatpush1.bf16.msra.mxu0 %v2078
      %2213 = vmatprep.subr.bf16.mxu0 0
      %2214 = vmatpush1.bf16.msra.mxu0 %v2079
      %2215 = vmatprep.subr.bf16.mxu0 0
      %2216 = vmatpush1.bf16.msra.mxu0 %v2080
      %2217 = vmatprep.subr.bf16.mxu0 0
      %2218 = vmatpush1.bf16.msra.mxu0 %v2081
      %2219 = vmatprep.subr.bf16.mxu0 0
      %2220 = vmatpush1.bf16.msra.mxu0 0
      %2221 = vmatprep.subr.bf16.mxu0 0
      %2222 = vmatpush1.bf16.msra.mxu0 0
      %2223 = vmatprep.subr.bf16.mxu0 0
      %2224 = vmatpush1.bf16.msra.mxu0 0
      %2225 = vmatprep.subr.bf16.mxu0 0
      %2226 = vmatpush1.bf16.msra.mxu0 0
      %2227 = vmatprep.subr.bf16.mxu0 0
      %2228 = vmatpush1.bf16.msra.mxu0 0
      %2229 = vmatprep.subr.bf16.mxu0 0
      %2230 = vmatpush1.bf16.msra.mxu0 0
      %2231 = vmatprep.subr.bf16.mxu0 0
      %2232 = vmatpush1.bf16.msra.mxu0 0
      %2233 = vmatprep.subr.bf16.mxu0 0
      %2234 = vmatpush1.bf16.msra.mxu0 0
      %2235 = vmatprep.mubr.bf16.mxu0 0
      %2236 = vmatmul.mubr.bf16.gmra.mrb[0].mxu0 %v1905
      %v2237 = vpop.f32.mrb[0].mxu0
      %v2238 = vadd.f32 %v2141, %v2237
      %v2239 = vpop.f32.mrb[0].mxu0
      %v2240 = vpop.f32.mrb[0].mxu0
      %v2241 = vadd.f32 %v2144, %v2240
      %v2242 = vpop.f32.mrb[0].mxu0
      %2243 = vmatprep.mubr.bf16.mxu0 0
      %2244 = vmatmul.mubr.bf16.gmra.mrb[0].mxu0 %v1906
      %v2245 = vpop.f32.mrb[0].mxu0
      %v2246 = vadd.f32 %v2149, %v2245
      %v2247 = vpop.f32.mrb[0].mxu0
      %v2248 = vpop.f32.mrb[0].mxu0
      %v2249 = vadd.f32 %v2152, %v2248
      %v2250 = vpop.f32.mrb[0].mxu0
      %2251 = vmatprep.mubr.bf16.mxu0 0
      %2252 = vmatmul.mubr.bf16.gmra.mrb[0].mxu0 %v1907
      %v2253 = vpop.f32.mrb[0].mxu0
      %v2254 = vadd.f32 %v2157, %v2253
      %v2255 = vpop.f32.mrb[0].mxu0
      %v2256 = vpop.f32.mrb[0].mxu0
      %v2257 = vadd.f32 %v2160, %v2256
      %v2258 = vpop.f32.mrb[0].mxu0
      %2259 = vmatprep.mubr.bf16.mxu0 0
      %2260 = vmatmul.mubr.bf16.gmra.mrb[0].mxu0 %v1908
      %v2261 = vpop.f32.mrb[0].mxu0
      %v2262 = vadd.f32 %v2165, %v2261
      %v2263 = vpop.f32.mrb[0].mxu0
      %v2264 = vpop.f32.mrb[0].mxu0
      %v2265 = vadd.f32 %v2168, %v2264
      %v2266 = vpop.f32.mrb[0].mxu0
      %2267 = vmatprep.mubr.bf16.mxu0 0
      %2268 = vmatmul.mubr.bf16.gmra.mrb[0].mxu0 %v1909
      %v2269 = vpop.f32.mrb[0].mxu0
      %v2270 = vadd.f32 %v2173, %v2269
      %v2271 = vpop.f32.mrb[0].mxu0
      %v2272 = vpop.f32.mrb[0].mxu0
      %v2273 = vadd.f32 %v2176, %v2272
      %v2274 = vpop.f32.mrb[0].mxu0
      %2275 = vmatprep.mubr.bf16.mxu0 0
      %2276 = vmatmul.mubr.bf16.gmra.mrb[0].mxu0 %v1910
      %v2277 = vpop.f32.mrb[0].mxu0
      %v2278 = vadd.f32 %v2181, %v2277
      %v2279 = vpop.f32.mrb[0].mxu0
      %v2280 = vpop.f32.mrb[0].mxu0
      %v2281 = vadd.f32 %v2184, %v2280
      %v2282 = vpop.f32.mrb[0].mxu0
      %2283 = vmatprep.mubr.bf16.mxu0 0
      %2284 = vmatmul.mubr.bf16.gmra.mrb[0].mxu0 %v1911
      %v2285 = vpop.f32.mrb[0].mxu0
      %v2286 = vadd.f32 %v2189, %v2285
      %v2287 = vpop.f32.mrb[0].mxu0
      %v2288 = vpop.f32.mrb[0].mxu0
      %v2289 = vadd.f32 %v2192, %v2288
      %v2290 = vpop.f32.mrb[0].mxu0
      %2291 = vmatprep.mubr.bf16.mxu0 0
      %2292 = vmatmul.mubr.bf16.gmra.mrb[0].mxu0 %v1912
      %v2293 = vpop.f32.mrb[0].mxu0
      %v2294 = vadd.f32 %v2197, %v2293
      %v2295 = vpop.f32.mrb[0].mxu0
      %v2296 = vpop.f32.mrb[0].mxu0
      %v2297 = vadd.f32 %v2200, %v2296
      %v2298 = vpop.f32.mrb[0].mxu0
      %2299 = vdwg.mxu0
      %v2300 = vadd.f32 %v1792, %v2238
      %v2301 = vadd.f32 %v1795, %v2241
      %v2302 = vadd.f32 %v1800, %v2246
      %v2303 = vadd.f32 %v1803, %v2249
      %v2304 = vadd.f32 %v1808, %v2254
      %v2305 = vadd.f32 %v1811, %v2257
      %v2306 = vadd.f32 %v1816, %v2262
      %v2307 = vadd.f32 %v1819, %v2265
      %v2308 = vadd.f32 %v1824, %v2270
      %v2309 = vadd.f32 %v1827, %v2273
      %v2310 = vadd.f32 %v1832, %v2278
      %v2311 = vadd.f32 %v1835, %v2281
      %v2312 = vadd.f32 %v1840, %v2286
      %v2313 = vadd.f32 %v1843, %v2289
      %v2314 = vadd.f32 %v1848, %v2294
      %v2315 = vadd.f32 %v1851, %v2297
      %v2316 = vpack.c.bf16 %v2301, %v2300
      %v2317 = vpack.c.bf16 %v2303, %v2302
      %v2318 = vpack.c.bf16 %v2305, %v2304
      %v2319 = vpack.c.bf16 %v2307, %v2306
      %v2320 = vpack.c.bf16 %v2309, %v2308
      %v2321 = vpack.c.bf16 %v2311, %v2310
      %v2322 = vpack.c.bf16 %v2313, %v2312
      %v2323 = vpack.c.bf16 %v2315, %v2314
      %v2332 = vunpack.c.l.b16 %v2316
      %v2333 = vunpack.c.h.b16 %v2316
      %v2334 = vunpack.c.l.b16 %v2317
      %v2335 = vunpack.c.h.b16 %v2317
      %v2336 = vunpack.c.l.b16 %v2318
      %v2337 = vunpack.c.h.b16 %v2318
      %v2338 = vunpack.c.l.b16 %v2319
      %v2339 = vunpack.c.h.b16 %v2319
      %v2340 = vunpack.c.l.b16 %v2320
      %v2341 = vunpack.c.h.b16 %v2320
      %v2342 = vunpack.c.l.b16 %v2321
      %v2343 = vunpack.c.h.b16 %v2321
      %v2344 = vunpack.c.l.b16 %v2322
      %v2345 = vunpack.c.h.b16 %v2322
      %v2346 = vunpack.c.l.b16 %v2323
      %v2347 = vunpack.c.h.b16 %v2323
      %v2348 = vpack.c.b16 %v2332, %v2332
      %v2349 = vpack.c.b16 %v2333, %v2333
      %v2350 = vpack.c.b16 %v2334, %v2334
      %v2351 = vpack.c.b16 %v2335, %v2335
      %v2352 = vpack.c.b16 %v2336, %v2336
      %v2353 = vpack.c.b16 %v2337, %v2337
      %v2354 = vpack.c.b16 %v2338, %v2338
      %v2355 = vpack.c.b16 %v2339, %v2339
      %v2356 = vpack.c.b16 %v2340, %v2340
      %v2357 = vpack.c.b16 %v2341, %v2341
      %v2358 = vpack.c.b16 %v2342, %v2342
      %v2359 = vpack.c.b16 %v2343, %v2343
      %v2360 = vpack.c.b16 %v2344, %v2344
      %v2361 = vpack.c.b16 %v2345, %v2345
      %v2362 = vpack.c.b16 %v2346, %v2346
      %v2363 = vpack.c.b16 %v2347, %v2347
      %2380 = vst [vmem:[%s458] sm:$0xf] %v2348
      %2381 = vst [vmem:[%s458 + $0x4] sm:$0xf] %v2349
      %2382 = vst [vmem:[%s458 + $0x8] sm:$0xf] %v2350
      %2383 = vst [vmem:[%s458 + $0xc] sm:$0xf] %v2351
      %2384 = vst [vmem:[%s458 + $0x10] sm:$0xf] %v2352
      %2385 = vst [vmem:[%s458 + $0x14] sm:$0xf] %v2353
      %2386 = vst [vmem:[%s458 + $0x18] sm:$0xf] %v2354
      %2387 = vst [vmem:[%s458 + $0x1c] sm:$0xf] %v2355
      %2388 = vst [vmem:[%s458 + $0x20] sm:$0xf] %v2356
      %2389 = vst [vmem:[%s458 + $0x24] sm:$0xf] %v2357
      %2390 = vst [vmem:[%s458 + $0x28] sm:$0xf] %v2358
      %2391 = vst [vmem:[%s458 + $0x2c] sm:$0xf] %v2359
      %2392 = vst [vmem:[%s458 + $0x30] sm:$0xf] %v2360
      %2393 = vst [vmem:[%s458 + $0x34] sm:$0xf] %v2361
      %2394 = vst [vmem:[%s458 + $0x38] sm:$0xf] %v2362
      %2395 = vst [vmem:[%s458 + $0x3c] sm:$0xf] %v2363
      %v2396 = vadd.f32 %v2300, %v2301
      %v2397 = vadd.f32 %v2396, %v2302
      %v2398 = vadd.f32 %v2397, %v2303
      %v2399 = vadd.f32 %v2398, %v2304
      %v2400 = vadd.f32 %v2399, %v2305
      %v2401 = vadd.f32 %v2400, %v2306
      %v2402 = vadd.f32 %v2401, %v2307
      %v2403 = vadd.f32 %v2402, %v2308
      %v2404 = vadd.f32 %v2403, %v2309
      %v2405 = vadd.f32 %v2404, %v2310
      %v2406 = vadd.f32 %v2405, %v2311
      %v2407 = vadd.f32 %v2406, %v2312
      %v2408 = vadd.f32 %v2407, %v2313
      %v2409 = vadd.f32 %v2408, %v2314
      %v2410 = vadd.f32 %v2409, %v2315
      %v2411 = vrot.slane %v2410, 4
      %v2412 = vadd.f32 %v2410, %v2411
      %v2413 = vrot.slane %v2412, 2
      %v2414 = vadd.f32 %v2412, %v2413
      %v2415 = vrot.slane %v2414, 1
      %v2416 = vadd.f32 %v2414, %v2415
      %v2417 = vmul.f32 %v2300, %v2300
      %v2418 = vmul.f32 %v2301, %v2301
      %v2419 = vmul.f32 %v2302, %v2302
      %v2420 = vmul.f32 %v2303, %v2303
      %v2421 = vmul.f32 %v2304, %v2304
      %v2422 = vmul.f32 %v2305, %v2305
      %v2423 = vmul.f32 %v2306, %v2306
      %v2424 = vmul.f32 %v2307, %v2307
      %v2425 = vmul.f32 %v2308, %v2308
      %v2426 = vmul.f32 %v2309, %v2309
      %v2427 = vmul.f32 %v2310, %v2310
      %v2428 = vmul.f32 %v2311, %v2311
      %v2429 = vmul.f32 %v2312, %v2312
      %v2430 = vmul.f32 %v2313, %v2313
      %v2431 = vmul.f32 %v2314, %v2314
      %v2432 = vmul.f32 %v2315, %v2315
      %v2433 = vadd.f32 %v2417, %v2418
      %v2434 = vadd.f32 %v2433, %v2419
      %v2435 = vadd.f32 %v2434, %v2420
      %v2436 = vadd.f32 %v2435, %v2421
      %v2437 = vadd.f32 %v2436, %v2422
      %v2438 = vadd.f32 %v2437, %v2423
      %v2439 = vadd.f32 %v2438, %v2424
      %v2440 = vadd.f32 %v2439, %v2425
      %v2441 = vadd.f32 %v2440, %v2426
      %v2442 = vadd.f32 %v2441, %v2427
      %v2443 = vadd.f32 %v2442, %v2428
      %v2444 = vadd.f32 %v2443, %v2429
      %v2445 = vadd.f32 %v2444, %v2430
      %v2446 = vadd.f32 %v2445, %v2431
      %v2447 = vadd.f32 %v2446, %v2432
      %v2448 = vrot.slane %v2447, 4
      %v2449 = vadd.f32 %v2447, %v2448
      %v2450 = vrot.slane %v2449, 2
      %v2451 = vadd.f32 %v2449, %v2450
      %v2452 = vrot.slane %v2451, 1
      %v2453 = vadd.f32 %v2451, %v2452
      %vm2454 = vcmask 1040384
      %v2455 = vsel %vm2454, %v2416, %v2453
      %2456 = vst [vmem:[%s467] sm:$0x3] %v2455
      %s2457 = smul.u32 8, %s24
      %p2458 = scmp.lt.s32.totalorder %s23, 1
      %s2459 = scalar_select %p2458, %s23, 1
      %p2460 = scmp.lt.s32.totalorder %s2457, 15
      %s2461 = scalar_select %p2460, %s2457, 15
      %s2462 = smul.addr %s2461, 2
      %s2463 = smul.addr %s2459, 32
      %s2464 = sadd.s32 %s2462, %s2463
      %s2465 = smul.addr %s2464, 4
      %s2466 = scalar_lea.vmem %s6, %s2465
      %p2467 = scmp.lt.s32.totalorder %s23, 1
      %s2468 = scalar_select %p2467, %s23, 1
      %p2469 = scmp.lt.s32.totalorder %s24, 1
      %s2470 = scalar_select %p2469, %s24, 1
      %s2471 = smul.addr %s2468, 2
      %s2472 = sadd.s32 %s2470, %s2471
      %s2473 = smul.addr %s2472, 2
      %s2474 = scalar_lea.vmem %s7, %s2473
      // Predicated region
      $region45: #{bottleneck_forward_nhwc.5} parent=43 // pred_check
        %p2475 = pneg %p214
      $region46: #{bottleneck_forward_nhwc.5} parent=43 // pred_check_branch
        %2477 = sbr.rel (%p2475) target = $region48
      $region47: #{bottleneck_forward_nhwc.5} parent=43 // pred_region
        %s2478 = smul.u32 8, %s24
      $region48: #{bottleneck_forward_nhwc.5} parent=43 // pred_fallthru
        _
      // Predicated region
      $region49: #{bottleneck_forward_nhwc.5} parent=43 // pred_check
        %p2479 = pneg %p242
      $region50: #{bottleneck_forward_nhwc.5} parent=43 // pred_check_branch
        %2481 = sbr.rel (%p2479) target = $region52
      $region51: #{bottleneck_forward_nhwc.5} parent=43 // pred_region
        _
      $region52: #{bottleneck_forward_nhwc.5} parent=43 // pred_fallthru
        _
    $region44: #{bottleneck_forward_nhwc.5} parent=5 // pred_fallthru
      _
    %p2482 = scmp.le.s32.totalorder 2, %s14
    // Predicated region
    $region53: #{bottleneck_forward_nhwc.5} parent=5 // pred_check
      %p2483 = pneg %p2482
    $region54: #{bottleneck_forward_nhwc.5} parent=5 // pred_check_branch
      %2485 = sbr.rel (%p2483) target = $region56
    $region55: #{bottleneck_forward_nhwc.5} parent=5 // pred_region
      %s2486 = ssub.s32 %s14, 2
      // Predicated region
      $region57: #{bottleneck_forward_nhwc.5} parent=55 // pred_check
        %p2487 = pneg %p220
      $region58: #{bottleneck_forward_nhwc.5} parent=55 // pred_check_branch
        %2489 = sbr.rel (%p2487) target = $region60
      $region59: #{bottleneck_forward_nhwc.5} parent=55 // pred_region
        %s2490 = smul.u32 8, %s26
        %p2491 = scmp.lt.s32.totalorder %s25, 1
        %s2492 = scalar_select %p2491, %s25, 1
        %p2493 = scmp.lt.s32.totalorder %s2490, 15
        %s2494 = scalar_select %p2493, %s2490, 15
        %s2495 = smul.addr %s2494, 2
        %s2496 = smul.addr %s2492, 32
        %s2497 = sadd.s32 %s2495, %s2496
        %s2498 = smul.addr %s2497, 4
        %s2499 = scalar_lea.vmem %s6, %s2498
      $region60: #{bottleneck_forward_nhwc.5} parent=55 // pred_fallthru
        _
      // Predicated region
      $region61: #{bottleneck_forward_nhwc.5} parent=55 // pred_check
        %p2500 = pneg %p248
      $region62: #{bottleneck_forward_nhwc.5} parent=55 // pred_check_branch
        %2502 = sbr.rel (%p2500) target = $region64
      $region63: #{bottleneck_forward_nhwc.5} parent=55 // pred_region
        %p2503 = scmp.lt.s32.totalorder %s25, 1
        %s2504 = scalar_select %p2503, %s25, 1
        %p2505 = scmp.lt.s32.totalorder %s26, 1
        %s2506 = scalar_select %p2505, %s26, 1
        %s2507 = smul.addr %s2504, 2
        %s2508 = sadd.s32 %s2506, %s2507
        %s2509 = smul.addr %s2508, 2
        %s2510 = scalar_lea.vmem %s7, %s2509
      $region64: #{bottleneck_forward_nhwc.5} parent=55 // pred_fallthru
        _
    $region56: #{bottleneck_forward_nhwc.5} parent=5 // pred_fallthru
      _
  $region6: #{bottleneck_forward_nhwc.5} parent=0 // loop_footer
    %s18 = sadd.s32 1, %s14
  $region7: #{bottleneck_forward_nhwc.5} parent=0 // loop_footer_branch
    %13 = sbr.rel target = $region3
  $region8: #{bottleneck_forward_nhwc.5} parent=0 // loop_exit
    _

// kernel: bottleneck_forward_nhwc.6
$region0: #{bottleneck_forward_nhwc.6}
  #allocation0 [shape = 'u32[]', space=smem, size = 0x4, offset = 0x4, fixed_abs, tag = 'smem constant byte address 0x4 - core index']
  #allocation1 [shape = 'u32[144,128]{1,0:T(1,128)}', space=vmem, size = 0x12000, scoped, tag = 'internal scratch']
  %s0 = inlined_call_operand.vmem [shape: bf16[512,128], index: 0, kind: input, shape index: {}]
  %s1 = inlined_call_operand.vmem [shape: f32[1,128], index: 1, kind: input, shape index: {}]
  %s2 = inlined_call_operand.vmem [shape: f32[1,128], index: 2, kind: input, shape index: {}]
  %s3 = inlined_call_operand.vmem [shape: bf16[128,32], index: 3, kind: input, shape index: {}]
  %s4 = inlined_call_operand.vmem [shape: bf16[512,32], index: 4, kind: output, shape index: {0}]
  %s5 = inlined_call_operand.vmem [shape: f32[1,2,32], index: 5, kind: output, shape index: {1}]
  %6 = xla_tuple %s4, %s5
  %s7 = sld [smem:[#allocation0]]
  $region34: #{bottleneck_forward_nhwc.6} parent=0
    _
  %s9 = ssub.s32 1, %s7
  %s10 = scalar_select 0, %s9, %s7
  // Predicated region
  $region2: #{bottleneck_forward_nhwc.6} parent=0 // pred_check
    _
  $region3: #{bottleneck_forward_nhwc.6} parent=0 // pred_check_branch
    %12 = sbr.rel (0) target = $region5
  $region4: #{bottleneck_forward_nhwc.6} parent=0 // pred_region
    _
  $region5: #{bottleneck_forward_nhwc.6} parent=0 // pred_fallthru
    _
  // Predicated region
  $region6: #{bottleneck_forward_nhwc.6} parent=0 // pred_check
    _
  $region7: #{bottleneck_forward_nhwc.6} parent=0 // pred_check_branch
    %14 = sbr.rel (0) target = $region9
  $region8: #{bottleneck_forward_nhwc.6} parent=0 // pred_region
    _
  $region9: #{bottleneck_forward_nhwc.6} parent=0 // pred_fallthru
    _
  // Predicated region
  $region10: #{bottleneck_forward_nhwc.6} parent=0 // pred_check
    _
  $region11: #{bottleneck_forward_nhwc.6} parent=0 // pred_check_branch
    %16 = sbr.rel (0) target = $region13
  $region12: #{bottleneck_forward_nhwc.6} parent=0 // pred_region
    _
  $region13: #{bottleneck_forward_nhwc.6} parent=0 // pred_fallthru
    _
  // Predicated region
  $region14: #{bottleneck_forward_nhwc.6} parent=0 // pred_check
    _
  $region15: #{bottleneck_forward_nhwc.6} parent=0 // pred_check_branch
    %18 = sbr.rel (0) target = $region17
  $region16: #{bottleneck_forward_nhwc.6} parent=0 // pred_region
    _
  $region17: #{bottleneck_forward_nhwc.6} parent=0 // pred_fallthru
    _
  %v20 = vld [vmem:[%s0] sm:$0xf]
  %v21 = vld [vmem:[%s0 + $0x4] sm:$0xf]
  %v22 = vld [vmem:[%s0 + $0x8] sm:$0xf]
  %v23 = vld [vmem:[%s0 + $0xc] sm:$0xf]
  %v24 = vld [vmem:[%s0 + $0x10] sm:$0xf]
  %v25 = vld [vmem:[%s0 + $0x14] sm:$0xf]
  %v26 = vld [vmem:[%s0 + $0x18] sm:$0xf]
  %v27 = vld [vmem:[%s0 + $0x1c] sm:$0xf]
  %v28 = vld [vmem:[%s0 + $0x20] sm:$0xf]
  %v29 = vld [vmem:[%s0 + $0x24] sm:$0xf]
  %v30 = vld [vmem:[%s0 + $0x28] sm:$0xf]
  %v31 = vld [vmem:[%s0 + $0x2c] sm:$0xf]
  %v32 = vld [vmem:[%s0 + $0x30] sm:$0xf]
  %v33 = vld [vmem:[%s0 + $0x34] sm:$0xf]
  %v34 = vld [vmem:[%s0 + $0x38] sm:$0xf]
  %v35 = vld [vmem:[%s0 + $0x3c] sm:$0xf]
  %v36 = vld [vmem:[%s0 + $0x40] sm:$0xf]
  %v37 = vld [vmem:[%s0 + $0x44] sm:$0xf]
  %v38 = vld [vmem:[%s0 + $0x48] sm:$0xf]
  %v39 = vld [vmem:[%s0 + $0x4c] sm:$0xf]
  %v40 = vld [vmem:[%s0 + $0x50] sm:$0xf]
  %v41 = vld [vmem:[%s0 + $0x54] sm:$0xf]
  %v42 = vld [vmem:[%s0 + $0x58] sm:$0xf]
  %v43 = vld [vmem:[%s0 + $0x5c] sm:$0xf]
  %v44 = vld [vmem:[%s0 + $0x60] sm:$0xf]
  %v45 = vld [vmem:[%s0 + $0x64] sm:$0xf]
  %v46 = vld [vmem:[%s0 + $0x68] sm:$0xf]
  %v47 = vld [vmem:[%s0 + $0x6c] sm:$0xf]
  %v48 = vld [vmem:[%s0 + $0x70] sm:$0xf]
  %v49 = vld [vmem:[%s0 + $0x74] sm:$0xf]
  %v50 = vld [vmem:[%s0 + $0x78] sm:$0xf]
  %v51 = vld [vmem:[%s0 + $0x7c] sm:$0xf]
  %v52 = vld [vmem:[%s0 + $0x80] sm:$0xf]
  %v53 = vld [vmem:[%s0 + $0x84] sm:$0xf]
  %v54 = vld [vmem:[%s0 + $0x88] sm:$0xf]
  %v55 = vld [vmem:[%s0 + $0x8c] sm:$0xf]
  %v56 = vld [vmem:[%s0 + $0x90] sm:$0xf]
  %v57 = vld [vmem:[%s0 + $0x94] sm:$0xf]
  %v58 = vld [vmem:[%s0 + $0x98] sm:$0xf]
  %v59 = vld [vmem:[%s0 + $0x9c] sm:$0xf]
  %v60 = vld [vmem:[%s0 + $0xa0] sm:$0xf]
  %v61 = vld [vmem:[%s0 + $0xa4] sm:$0xf]
  %v62 = vld [vmem:[%s0 + $0xa8] sm:$0xf]
  %v63 = vld [vmem:[%s0 + $0xac] sm:$0xf]
  %v64 = vld [vmem:[%s0 + $0xb0] sm:$0xf]
  %v65 = vld [vmem:[%s0 + $0xb4] sm:$0xf]
  %v66 = vld [vmem:[%s0 + $0xb8] sm:$0xf]
  %v67 = vld [vmem:[%s0 + $0xbc] sm:$0xf]
  %v68 = vld [vmem:[%s0 + $0xc0] sm:$0xf]
  %v69 = vld [vmem:[%s0 + $0xc4] sm:$0xf]
  %v70 = vld [vmem:[%s0 + $0xc8] sm:$0xf]
  %v71 = vld [vmem:[%s0 + $0xcc] sm:$0xf]
  %v72 = vld [vmem:[%s0 + $0xd0] sm:$0xf]
  %v73 = vld [vmem:[%s0 + $0xd4] sm:$0xf]
  %v74 = vld [vmem:[%s0 + $0xd8] sm:$0xf]
  %v75 = vld [vmem:[%s0 + $0xdc] sm:$0xf]
  %v76 = vld [vmem:[%s0 + $0xe0] sm:$0xf]
  %v77 = vld [vmem:[%s0 + $0xe4] sm:$0xf]
  %v78 = vld [vmem:[%s0 + $0xe8] sm:$0xf]
  %v79 = vld [vmem:[%s0 + $0xec] sm:$0xf]
  %v80 = vld [vmem:[%s0 + $0xf0] sm:$0xf]
  %v81 = vld [vmem:[%s0 + $0xf4] sm:$0xf]
  %v82 = vld [vmem:[%s0 + $0xf8] sm:$0xf]
  %v83 = vld [vmem:[%s0 + $0xfc] sm:$0xf]
  %v84 = vunpack.c.l.bf16 %v20
  %v85 = vunpack.c.l.bf16 %v21
  %v86 = vunpack.c.l.bf16 %v22
  %v87 = vunpack.c.l.bf16 %v23
  %v88 = vunpack.c.l.bf16 %v24
  %v89 = vunpack.c.l.bf16 %v25
  %v90 = vunpack.c.l.bf16 %v26
  %v91 = vunpack.c.l.bf16 %v27
  %v92 = vunpack.c.l.bf16 %v28
  %v93 = vunpack.c.l.bf16 %v29
  %v94 = vunpack.c.l.bf16 %v30
  %v95 = vunpack.c.l.bf16 %v31
  %v96 = vunpack.c.l.bf16 %v32
  %v97 = vunpack.c.l.bf16 %v33
  %v98 = vunpack.c.l.bf16 %v34
  %v99 = vunpack.c.l.bf16 %v35
  %v100 = vunpack.c.l.bf16 %v36
  %v101 = vunpack.c.l.bf16 %v37
  %v102 = vunpack.c.l.bf16 %v38
  %v103 = vunpack.c.l.bf16 %v39
  %v104 = vunpack.c.l.bf16 %v40
  %v105 = vunpack.c.l.bf16 %v41
  %v106 = vunpack.c.l.bf16 %v42
  %v107 = vunpack.c.l.bf16 %v43
  %v108 = vunpack.c.l.bf16 %v44
  %v109 = vunpack.c.l.bf16 %v45
  %v110 = vunpack.c.l.bf16 %v46
  %v111 = vunpack.c.l.bf16 %v47
  %v112 = vunpack.c.l.bf16 %v48
  %v113 = vunpack.c.l.bf16 %v49
  %v114 = vunpack.c.l.bf16 %v50
  %v115 = vunpack.c.l.bf16 %v51
  %v116 = vunpack.c.l.bf16 %v52
  %v117 = vunpack.c.l.bf16 %v53
  %v118 = vunpack.c.l.bf16 %v54
  %v119 = vunpack.c.l.bf16 %v55
  %v120 = vunpack.c.l.bf16 %v56
  %v121 = vunpack.c.l.bf16 %v57
  %v122 = vunpack.c.l.bf16 %v58
  %v123 = vunpack.c.l.bf16 %v59
  %v124 = vunpack.c.l.bf16 %v60
  %v125 = vunpack.c.l.bf16 %v61
  %v126 = vunpack.c.l.bf16 %v62
  %v127 = vunpack.c.l.bf16 %v63
  %v128 = vunpack.c.l.bf16 %v64
  %v129 = vunpack.c.l.bf16 %v65
  %v130 = vunpack.c.l.bf16 %v66
  %v131 = vunpack.c.l.bf16 %v67
  %v132 = vunpack.c.l.bf16 %v68
  %v133 = vunpack.c.l.bf16 %v69
  %v134 = vunpack.c.l.bf16 %v70
  %v135 = vunpack.c.l.bf16 %v71
  %v136 = vunpack.c.l.bf16 %v72
  %v137 = vunpack.c.l.bf16 %v73
  %v138 = vunpack.c.l.bf16 %v74
  %v139 = vunpack.c.l.bf16 %v75
  %v140 = vunpack.c.l.bf16 %v76
  %v141 = vunpack.c.l.bf16 %v77
  %v142 = vunpack.c.l.bf16 %v78
  %v143 = vunpack.c.l.bf16 %v79
  %v144 = vunpack.c.l.bf16 %v80
  %v145 = vunpack.c.l.bf16 %v81
  %v146 = vunpack.c.l.bf16 %v82
  %v147 = vunpack.c.l.bf16 %v83
  %v148 = vld [vmem:[%s1] sm:$0x1]
  %v150 = vlaneseq
  %v151 = vshrl.u32 %v150, 7
  %v152 = vsub.s32 0, %v151
  %v153 = vrot.slane %v148, %v152
  %v155 = vmul.f32 %v84, %v153
  %v156 = vmul.f32 %v85, %v153
  %v157 = vmul.f32 %v86, %v153
  %v158 = vmul.f32 %v87, %v153
  %v159 = vmul.f32 %v88, %v153
  %v160 = vmul.f32 %v89, %v153
  %v161 = vmul.f32 %v90, %v153
  %v162 = vmul.f32 %v91, %v153
  %v163 = vmul.f32 %v92, %v153
  %v164 = vmul.f32 %v93, %v153
  %v165 = vmul.f32 %v94, %v153
  %v166 = vmul.f32 %v95, %v153
  %v167 = vmul.f32 %v96, %v153
  %v168 = vmul.f32 %v97, %v153
  %v169 = vmul.f32 %v98, %v153
  %v170 = vmul.f32 %v99, %v153
  %v171 = vmul.f32 %v100, %v153
  %v172 = vmul.f32 %v101, %v153
  %v173 = vmul.f32 %v102, %v153
  %v174 = vmul.f32 %v103, %v153
  %v175 = vmul.f32 %v104, %v153
  %v176 = vmul.f32 %v105, %v153
  %v177 = vmul.f32 %v106, %v153
  %v178 = vmul.f32 %v107, %v153
  %v179 = vmul.f32 %v108, %v153
  %v180 = vmul.f32 %v109, %v153
  %v181 = vmul.f32 %v110, %v153
  %v182 = vmul.f32 %v111, %v153
  %v183 = vmul.f32 %v112, %v153
  %v184 = vmul.f32 %v113, %v153
  %v185 = vmul.f32 %v114, %v153
  %v186 = vmul.f32 %v115, %v153
  %v187 = vmul.f32 %v116, %v153
  %v188 = vmul.f32 %v117, %v153
  %v189 = vmul.f32 %v118, %v153
  %v190 = vmul.f32 %v119, %v153
  %v191 = vmul.f32 %v120, %v153
  %v192 = vmul.f32 %v121, %v153
  %v193 = vmul.f32 %v122, %v153
  %v194 = vmul.f32 %v123, %v153
  %v195 = vmul.f32 %v124, %v153
  %v196 = vmul.f32 %v125, %v153
  %v197 = vmul.f32 %v126, %v153
  %v198 = vmul.f32 %v127, %v153
  %v199 = vmul.f32 %v128, %v153
  %v200 = vmul.f32 %v129, %v153
  %v201 = vmul.f32 %v130, %v153
  %v202 = vmul.f32 %v131, %v153
  %v203 = vmul.f32 %v132, %v153
  %v204 = vmul.f32 %v133, %v153
  %v205 = vmul.f32 %v134, %v153
  %v206 = vmul.f32 %v135, %v153
  %v207 = vmul.f32 %v136, %v153
  %v208 = vmul.f32 %v137, %v153
  %v209 = vmul.f32 %v138, %v153
  %v210 = vmul.f32 %v139, %v153
  %v211 = vmul.f32 %v140, %v153
  %v212 = vmul.f32 %v141, %v153
  %v213 = vmul.f32 %v142, %v153
  %v214 = vmul.f32 %v143, %v153
  %v215 = vmul.f32 %v144, %v153
  %v216 = vmul.f32 %v145, %v153
  %v217 = vmul.f32 %v146, %v153
  %v218 = vmul.f32 %v147, %v153
  %v219 = vld [vmem:[%s2] sm:$0x1]
  %v221 = vlaneseq
  %v222 = vshrl.u32 %v221, 7
  %v223 = vsub.s32 0, %v222
  %v224 = vrot.slane %v219, %v223
  %v226 = vadd.f32 %v155, %v224
  %v227 = vadd.f32 %v156, %v224
  %v228 = vadd.f32 %v157, %v224
  %v229 = vadd.f32 %v158, %v224
  %v230 = vadd.f32 %v159, %v224
  %v231 = vadd.f32 %v160, %v224
  %v232 = vadd.f32 %v161, %v224
  %v233 = vadd.f32 %v162, %v224
  %v234 = vadd.f32 %v163, %v224
  %v235 = vadd.f32 %v164, %v224
  %v236 = vadd.f32 %v165, %v224
  %v237 = vadd.f32 %v166, %v224
  %v238 = vadd.f32 %v167, %v224
  %v239 = vadd.f32 %v168, %v224
  %v240 = vadd.f32 %v169, %v224
  %v241 = vadd.f32 %v170, %v224
  %v242 = vadd.f32 %v171, %v224
  %v243 = vadd.f32 %v172, %v224
  %v244 = vadd.f32 %v173, %v224
  %v245 = vadd.f32 %v174, %v224
  %v246 = vadd.f32 %v175, %v224
  %v247 = vadd.f32 %v176, %v224
  %v248 = vadd.f32 %v177, %v224
  %v249 = vadd.f32 %v178, %v224
  %v250 = vadd.f32 %v179, %v224
  %v251 = vadd.f32 %v180, %v224
  %v252 = vadd.f32 %v181, %v224
  %v253 = vadd.f32 %v182, %v224
  %v254 = vadd.f32 %v183, %v224
  %v255 = vadd.f32 %v184, %v224
  %v256 = vadd.f32 %v185, %v224
  %v257 = vadd.f32 %v186, %v224
  %v258 = vadd.f32 %v187, %v224
  %v259 = vadd.f32 %v188, %v224
  %v260 = vadd.f32 %v189, %v224
  %v261 = vadd.f32 %v190, %v224
  %v262 = vadd.f32 %v191, %v224
  %v263 = vadd.f32 %v192, %v224
  %v264 = vadd.f32 %v193, %v224
  %v265 = vadd.f32 %v194, %v224
  %v266 = vadd.f32 %v195, %v224
  %v267 = vadd.f32 %v196, %v224
  %v268 = vadd.f32 %v197, %v224
  %v269 = vadd.f32 %v198, %v224
  %v270 = vadd.f32 %v199, %v224
  %v271 = vadd.f32 %v200, %v224
  %v272 = vadd.f32 %v201, %v224
  %v273 = vadd.f32 %v202, %v224
  %v274 = vadd.f32 %v203, %v224
  %v275 = vadd.f32 %v204, %v224
  %v276 = vadd.f32 %v205, %v224
  %v277 = vadd.f32 %v206, %v224
  %v278 = vadd.f32 %v207, %v224
  %v279 = vadd.f32 %v208, %v224
  %v280 = vadd.f32 %v209, %v224
  %v281 = vadd.f32 %v210, %v224
  %v282 = vadd.f32 %v211, %v224
  %v283 = vadd.f32 %v212, %v224
  %v284 = vadd.f32 %v213, %v224
  %v285 = vadd.f32 %v214, %v224
  %v286 = vadd.f32 %v215, %v224
  %v287 = vadd.f32 %v216, %v224
  %v288 = vadd.f32 %v217, %v224
  %v289 = vadd.f32 %v218, %v224
  %v290 = vmax.f32 %v226, 0.0
  %v291 = vmax.f32 %v227, 0.0
  %v292 = vmax.f32 %v228, 0.0
  %v293 = vmax.f32 %v229, 0.0
  %v294 = vmax.f32 %v230, 0.0
  %v295 = vmax.f32 %v231, 0.0
  %v296 = vmax.f32 %v232, 0.0
  %v297 = vmax.f32 %v233, 0.0
  %v298 = vmax.f32 %v234, 0.0
  %v299 = vmax.f32 %v235, 0.0
  %v300 = vmax.f32 %v236, 0.0
  %v301 = vmax.f32 %v237, 0.0
  %v302 = vmax.f32 %v238, 0.0
  %v303 = vmax.f32 %v239, 0.0
  %v304 = vmax.f32 %v240, 0.0
  %v305 = vmax.f32 %v241, 0.0
  %v306 = vmax.f32 %v242, 0.0
  %v307 = vmax.f32 %v243, 0.0
  %v308 = vmax.f32 %v244, 0.0
  %v309 = vmax.f32 %v245, 0.0
  %v310 = vmax.f32 %v246, 0.0
  %v311 = vmax.f32 %v247, 0.0
  %v312 = vmax.f32 %v248, 0.0
  %v313 = vmax.f32 %v249, 0.0
  %v314 = vmax.f32 %v250, 0.0
  %v315 = vmax.f32 %v251, 0.0
  %v316 = vmax.f32 %v252, 0.0
  %v317 = vmax.f32 %v253, 0.0
  %v318 = vmax.f32 %v254, 0.0
  %v319 = vmax.f32 %v255, 0.0
  %v320 = vmax.f32 %v256, 0.0
  %v321 = vmax.f32 %v257, 0.0
  %v322 = vmax.f32 %v258, 0.0
  %v323 = vmax.f32 %v259, 0.0
  %v324 = vmax.f32 %v260, 0.0
  %v325 = vmax.f32 %v261, 0.0
  %v326 = vmax.f32 %v262, 0.0
  %v327 = vmax.f32 %v263, 0.0
  %v328 = vmax.f32 %v264, 0.0
  %v329 = vmax.f32 %v265, 0.0
  %v330 = vmax.f32 %v266, 0.0
  %v331 = vmax.f32 %v267, 0.0
  %v332 = vmax.f32 %v268, 0.0
  %v333 = vmax.f32 %v269, 0.0
  %v334 = vmax.f32 %v270, 0.0
  %v335 = vmax.f32 %v271, 0.0
  %v336 = vmax.f32 %v272, 0.0
  %v337 = vmax.f32 %v273, 0.0
  %v338 = vmax.f32 %v274, 0.0
  %v339 = vmax.f32 %v275, 0.0
  %v340 = vmax.f32 %v276, 0.0
  %v341 = vmax.f32 %v277, 0.0
  %v342 = vmax.f32 %v278, 0.0
  %v343 = vmax.f32 %v279, 0.0
  %v344 = vmax.f32 %v280, 0.0
  %v345 = vmax.f32 %v281, 0.0
  %v346 = vmax.f32 %v282, 0.0
  %v347 = vmax.f32 %v283, 0.0
  %v348 = vmax.f32 %v284, 0.0
  %v349 = vmax.f32 %v285, 0.0
  %v350 = vmax.f32 %v286, 0.0
  %v351 = vmax.f32 %v287, 0.0
  %v352 = vmax.f32 %v288, 0.0
  %v353 = vmax.f32 %v289, 0.0
  %v354 = vpack.c.bf16 %v291, %v290
  %v355 = vpack.c.bf16 %v293, %v292
  %v356 = vpack.c.bf16 %v295, %v294
  %v357 = vpack.c.bf16 %v297, %v296
  %v358 = vpack.c.bf16 %v299, %v298
  %v359 = vpack.c.bf16 %v301, %v300
  %v360 = vpack.c.bf16 %v303, %v302
  %v361 = vpack.c.bf16 %v305, %v304
  %v362 = vpack.c.bf16 %v307, %v306
  %v363 = vpack.c.bf16 %v309, %v308
  %v364 = vpack.c.bf16 %v311, %v310
  %v365 = vpack.c.bf16 %v313, %v312
  %v366 = vpack.c.bf16 %v315, %v314
  %v367 = vpack.c.bf16 %v317, %v316
  %v368 = vpack.c.bf16 %v319, %v318
  %v369 = vpack.c.bf16 %v321, %v320
  %v370 = vpack.c.bf16 %v323, %v322
  %v371 = vpack.c.bf16 %v325, %v324
  %v372 = vpack.c.bf16 %v327, %v326
  %v373 = vpack.c.bf16 %v329, %v328
  %v374 = vpack.c.bf16 %v331, %v330
  %v375 = vpack.c.bf16 %v333, %v332
  %v376 = vpack.c.bf16 %v335, %v334
  %v377 = vpack.c.bf16 %v337, %v336
  %v378 = vpack.c.bf16 %v339, %v338
  %v379 = vpack.c.bf16 %v341, %v340
  %v380 = vpack.c.bf16 %v343, %v342
  %v381 = vpack.c.bf16 %v345, %v344
  %v382 = vpack.c.bf16 %v347, %v346
  %v383 = vpack.c.bf16 %v349, %v348
  %v384 = vpack.c.bf16 %v351, %v350
  %v385 = vpack.c.bf16 %v353, %v352
  %v386 = vld [vmem:[%s3] sm:$0xf]
  %v387 = vld [vmem:[%s3 + $0x4] sm:$0xf]
  %v388 = vld [vmem:[%s3 + $0x8] sm:$0xf]
  %v389 = vld [vmem:[%s3 + $0xc] sm:$0xf]
  %v390 = vld [vmem:[%s3 + $0x10] sm:$0xf]
  %v391 = vld [vmem:[%s3 + $0x14] sm:$0xf]
  %v392 = vld [vmem:[%s3 + $0x18] sm:$0xf]
  %v393 = vld [vmem:[%s3 + $0x1c] sm:$0xf]
  %v394 = vld [vmem:[%s3 + $0x20] sm:$0xf]
  %v395 = vld [vmem:[%s3 + $0x24] sm:$0xf]
  %v396 = vld [vmem:[%s3 + $0x28] sm:$0xf]
  %v397 = vld [vmem:[%s3 + $0x2c] sm:$0xf]
  %v398 = vld [vmem:[%s3 + $0x30] sm:$0xf]
  %v399 = vld [vmem:[%s3 + $0x34] sm:$0xf]
  %v400 = vld [vmem:[%s3 + $0x38] sm:$0xf]
  %v401 = vld [vmem:[%s3 + $0x3c] sm:$0xf]
  %v418 = vunpack.c.l.b16 %v386
  %v419 = vunpack.c.l.b16 %v387
  %v420 = vunpack.c.l.b16 %v388
  %v421 = vunpack.c.l.b16 %v389
  %v422 = vunpack.c.l.b16 %v390
  %v423 = vunpack.c.l.b16 %v391
  %v424 = vunpack.c.l.b16 %v392
  %v425 = vunpack.c.l.b16 %v393
  %v426 = vunpack.c.l.b16 %v394
  %v427 = vunpack.c.l.b16 %v395
  %v428 = vunpack.c.l.b16 %v396
  %v429 = vunpack.c.l.b16 %v397
  %v430 = vunpack.c.l.b16 %v398
  %v431 = vunpack.c.l.b16 %v399
  %v432 = vunpack.c.l.b16 %v400
  %v433 = vunpack.c.l.b16 %v401
  %v434 = vpack.c.b16 %v419, %v418
  %v435 = vpack.c.b16 %v421, %v420
  %v436 = vpack.c.b16 %v423, %v422
  %v437 = vpack.c.b16 %v425, %v424
  %v438 = vpack.c.b16 %v427, %v426
  %v439 = vpack.c.b16 %v429, %v428
  %v440 = vpack.c.b16 %v431, %v430
  %v441 = vpack.c.b16 %v433, %v432
  %450 = vmatprep.subr.bf16.mxu0 0
  %451 = vmatpush1.bf16.msra.mxu0 %v434
  %452 = vmatprep.subr.bf16.mxu0 0
  %453 = vmatpush1.bf16.msra.mxu0 %v435
  %454 = vmatprep.subr.bf16.mxu0 0
  %455 = vmatpush1.bf16.msra.mxu0 %v436
  %456 = vmatprep.subr.bf16.mxu0 0
  %457 = vmatpush1.bf16.msra.mxu0 %v437
  %458 = vmatprep.subr.bf16.mxu0 0
  %459 = vmatpush1.bf16.msra.mxu0 %v438
  %460 = vmatprep.subr.bf16.mxu0 0
  %461 = vmatpush1.bf16.msra.mxu0 %v439
  %462 = vmatprep.subr.bf16.mxu0 0
  %463 = vmatpush1.bf16.msra.mxu0 %v440
  %464 = vmatprep.subr.bf16.mxu0 0
  %465 = vmatpush1.bf16.msra.mxu0 %v441
  %466 = vmatprep.subr.bf16.mxu0 0
  %467 = vmatpush1.bf16.msra.mxu0 0
  %468 = vmatprep.subr.bf16.mxu0 0
  %469 = vmatpush1.bf16.msra.mxu0 0
  %470 = vmatprep.subr.bf16.mxu0 0
  %471 = vmatpush1.bf16.msra.mxu0 0
  %472 = vmatprep.subr.bf16.mxu0 0
  %473 = vmatpush1.bf16.msra.mxu0 0
  %474 = vmatprep.subr.bf16.mxu0 0
  %475 = vmatpush1.bf16.msra.mxu0 0
  %476 = vmatprep.subr.bf16.mxu0 0
  %477 = vmatpush1.bf16.msra.mxu0 0
  %478 = vmatprep.subr.bf16.mxu0 0
  %479 = vmatpush1.bf16.msra.mxu0 0
  %480 = vmatprep.subr.bf16.mxu0 0
  %481 = vmatpush1.bf16.msra.mxu0 0
  %482 = vmatprep.mubr.bf16.mxu0 0
  %483 = vmatmul.mubr.bf16.gmra.mrb[0].mxu0 %v354
  %v484 = vpop.f32.mrb[0].mxu0
  %v485 = vadd.f32 0.0, %v484
  %v486 = vpop.f32.mrb[0].mxu0
  %v487 = vpop.f32.mrb[0].mxu0
  %v488 = vadd.f32 0.0, %v487
  %v489 = vpop.f32.mrb[0].mxu0
  %490 = vmatprep.mubr.bf16.mxu0 0
  %491 = vmatmul.mubr.bf16.gmra.mrb[0].mxu0 %v355
  %v492 = vpop.f32.mrb[0].mxu0
  %v493 = vadd.f32 0.0, %v492
  %v494 = vpop.f32.mrb[0].mxu0
  %v495 = vpop.f32.mrb[0].mxu0
  %v496 = vadd.f32 0.0, %v495
  %v497 = vpop.f32.mrb[0].mxu0
  %498 = vmatprep.mubr.bf16.mxu0 0
  %499 = vmatmul.mubr.bf16.gmra.mrb[0].mxu0 %v356
  %v500 = vpop.f32.mrb[0].mxu0
  %v501 = vadd.f32 0.0, %v500
  %v502 = vpop.f32.mrb[0].mxu0
  %v503 = vpop.f32.mrb[0].mxu0
  %v504 = vadd.f32 0.0, %v503
  %v505 = vpop.f32.mrb[0].mxu0
  %506 = vmatprep.mubr.bf16.mxu0 0
  %507 = vmatmul.mubr.bf16.gmra.mrb[0].mxu0 %v357
  %v508 = vpop.f32.mrb[0].mxu0
  %v509 = vadd.f32 0.0, %v508
  %v510 = vpop.f32.mrb[0].mxu0
  %v511 = vpop.f32.mrb[0].mxu0
  %v512 = vadd.f32 0.0, %v511
  %v513 = vpop.f32.mrb[0].mxu0
  %514 = vmatprep.mubr.bf16.mxu0 0
  %515 = vmatmul.mubr.bf16.gmra.mrb[0].mxu0 %v358
  %v516 = vpop.f32.mrb[0].mxu0
  %v517 = vadd.f32 0.0, %v516
  %v518 = vpop.f32.mrb[0].mxu0
  %v519 = vpop.f32.mrb[0].mxu0
  %v520 = vadd.f32 0.0, %v519
  %v521 = vpop.f32.mrb[0].mxu0
  %522 = vmatprep.mubr.bf16.mxu0 0
  %523 = vmatmul.mubr.bf16.gmra.mrb[0].mxu0 %v359
  %v524 = vpop.f32.mrb[0].mxu0
  %v525 = vadd.f32 0.0, %v524
  %v526 = vpop.f32.mrb[0].mxu0
  %v527 = vpop.f32.mrb[0].mxu0
  %v528 = vadd.f32 0.0, %v527
  %v529 = vpop.f32.mrb[0].mxu0
  %530 = vmatprep.mubr.bf16.mxu0 0
  %531 = vmatmul.mubr.bf16.gmra.mrb[0].mxu0 %v360
  %v532 = vpop.f32.mrb[0].mxu0
  %v533 = vadd.f32 0.0, %v532
  %v534 = vpop.f32.mrb[0].mxu0
  %v535 = vpop.f32.mrb[0].mxu0
  %v536 = vadd.f32 0.0, %v535
  %v537 = vpop.f32.mrb[0].mxu0
  %538 = vmatprep.mubr.bf16.mxu0 0
  %539 = vmatmul.mubr.bf16.gmra.mrb[0].mxu0 %v361
  %v540 = vpop.f32.mrb[0].mxu0
  %v541 = vadd.f32 0.0, %v540
  %v542 = vpop.f32.mrb[0].mxu0
  %v543 = vpop.f32.mrb[0].mxu0
  %v544 = vadd.f32 0.0, %v543
  %v545 = vpop.f32.mrb[0].mxu0
  %546 = vmatprep.mubr.bf16.mxu0 0
  %547 = vmatmul.mubr.bf16.gmra.mrb[0].mxu0 %v362
  %v548 = vpop.f32.mrb[0].mxu0
  %v549 = vadd.f32 0.0, %v548
  %v550 = vpop.f32.mrb[0].mxu0
  %v551 = vpop.f32.mrb[0].mxu0
  %v552 = vadd.f32 0.0, %v551
  %v553 = vpop.f32.mrb[0].mxu0
  %554 = vmatprep.mubr.bf16.mxu0 0
  %555 = vmatmul.mubr.bf16.gmra.mrb[0].mxu0 %v363
  %v556 = vpop.f32.mrb[0].mxu0
  %v557 = vadd.f32 0.0, %v556
  %v558 = vpop.f32.mrb[0].mxu0
  %v559 = vpop.f32.mrb[0].mxu0
  %v560 = vadd.f32 0.0, %v559
  %v561 = vpop.f32.mrb[0].mxu0
  %562 = vmatprep.mubr.bf16.mxu0 0
  %563 = vmatmul.mubr.bf16.gmra.mrb[0].mxu0 %v364
  %v564 = vpop.f32.mrb[0].mxu0
  %v565 = vadd.f32 0.0, %v564
  %v566 = vpop.f32.mrb[0].mxu0
  %v567 = vpop.f32.mrb[0].mxu0
  %v568 = vadd.f32 0.0, %v567
  %v569 = vpop.f32.mrb[0].mxu0
  %570 = vmatprep.mubr.bf16.mxu0 0
  %571 = vmatmul.mubr.bf16.gmra.mrb[0].mxu0 %v365
  %v572 = vpop.f32.mrb[0].mxu0
  %v573 = vadd.f32 0.0, %v572
  %v574 = vpop.f32.mrb[0].mxu0
  %v575 = vpop.f32.mrb[0].mxu0
  %v576 = vadd.f32 0.0, %v575
  %v577 = vpop.f32.mrb[0].mxu0
  %578 = vmatprep.mubr.bf16.mxu0 0
  %579 = vmatmul.mubr.bf16.gmra.mrb[0].mxu0 %v366
  %v580 = vpop.f32.mrb[0].mxu0
  %v581 = vadd.f32 0.0, %v580
  %v582 = vpop.f32.mrb[0].mxu0
  %v583 = vpop.f32.mrb[0].mxu0
  %v584 = vadd.f32 0.0, %v583
  %v585 = vpop.f32.mrb[0].mxu0
  %586 = vmatprep.mubr.bf16.mxu0 0
  %587 = vmatmul.mubr.bf16.gmra.mrb[0].mxu0 %v367
  %v588 = vpop.f32.mrb[0].mxu0
  %v589 = vadd.f32 0.0, %v588
  %v590 = vpop.f32.mrb[0].mxu0
  %v591 = vpop.f32.mrb[0].mxu0
  %v592 = vadd.f32 0.0, %v591
  %v593 = vpop.f32.mrb[0].mxu0
  %594 = vmatprep.mubr.bf16.mxu0 0
  %595 = vmatmul.mubr.bf16.gmra.mrb[0].mxu0 %v368
  %v596 = vpop.f32.mrb[0].mxu0
  %v597 = vadd.f32 0.0, %v596
  %v598 = vpop.f32.mrb[0].mxu0
  %v599 = vpop.f32.mrb[0].mxu0
  %v600 = vadd.f32 0.0, %v599
  %v601 = vpop.f32.mrb[0].mxu0
  %602 = vmatprep.mubr.bf16.mxu0 0
  %603 = vmatmul.mubr.bf16.gmra.mrb[0].mxu0 %v369
  %v604 = vpop.f32.mrb[0].mxu0
  %v605 = vadd.f32 0.0, %v604
  %v606 = vpop.f32.mrb[0].mxu0
  %v607 = vpop.f32.mrb[0].mxu0
  %v608 = vadd.f32 0.0, %v607
  %v609 = vpop.f32.mrb[0].mxu0
  %610 = vmatprep.mubr.bf16.mxu0 0
  %611 = vmatmul.mubr.bf16.gmra.mrb[0].mxu0 %v370
  %v612 = vpop.f32.mrb[0].mxu0
  %v613 = vadd.f32 0.0, %v612
  %v614 = vpop.f32.mrb[0].mxu0
  %v615 = vpop.f32.mrb[0].mxu0
  %v616 = vadd.f32 0.0, %v615
  %v617 = vpop.f32.mrb[0].mxu0
  %618 = vmatprep.mubr.bf16.mxu0 0
  %619 = vmatmul.mubr.bf16.gmra.mrb[0].mxu0 %v371
  %v620 = vpop.f32.mrb[0].mxu0
  %v621 = vadd.f32 0.0, %v620
  %v622 = vpop.f32.mrb[0].mxu0
  %v623 = vpop.f32.mrb[0].mxu0
  %v624 = vadd.f32 0.0, %v623
  %v625 = vpop.f32.mrb[0].mxu0
  %626 = vmatprep.mubr.bf16.mxu0 0
  %627 = vmatmul.mubr.bf16.gmra.mrb[0].mxu0 %v372
  %v628 = vpop.f32.mrb[0].mxu0
  %v629 = vadd.f32 0.0, %v628
  %v630 = vpop.f32.mrb[0].mxu0
  %v631 = vpop.f32.mrb[0].mxu0
  %v632 = vadd.f32 0.0, %v631
  %v633 = vpop.f32.mrb[0].mxu0
  %634 = vmatprep.mubr.bf16.mxu0 0
  %635 = vmatmul.mubr.bf16.gmra.mrb[0].mxu0 %v373
  %v636 = vpop.f32.mrb[0].mxu0
  %v637 = vadd.f32 0.0, %v636
  %v638 = vpop.f32.mrb[0].mxu0
  %v639 = vpop.f32.mrb[0].mxu0
  %v640 = vadd.f32 0.0, %v639
  %v641 = vpop.f32.mrb[0].mxu0
  %642 = vmatprep.mubr.bf16.mxu0 0
  %643 = vmatmul.mubr.bf16.gmra.mrb[0].mxu0 %v374
  %v644 = vpop.f32.mrb[0].mxu0
  %v645 = vadd.f32 0.0, %v644
  %v646 = vpop.f32.mrb[0].mxu0
  %v647 = vpop.f32.mrb[0].mxu0
  %v648 = vadd.f32 0.0, %v647
  %v649 = vpop.f32.mrb[0].mxu0
  %650 = vmatprep.mubr.bf16.mxu0 0
  %651 = vmatmul.mubr.bf16.gmra.mrb[0].mxu0 %v375
  %v652 = vpop.f32.mrb[0].mxu0
  %v653 = vadd.f32 0.0, %v652
  %v654 = vpop.f32.mrb[0].mxu0
  %v655 = vpop.f32.mrb[0].mxu0
  %v656 = vadd.f32 0.0, %v655
  %v657 = vpop.f32.mrb[0].mxu0
  %658 = vmatprep.mubr.bf16.mxu0 0
  %659 = vmatmul.mubr.bf16.gmra.mrb[0].mxu0 %v376
  %v660 = vpop.f32.mrb[0].mxu0
  %v661 = vadd.f32 0.0, %v660
  %v662 = vpop.f32.mrb[0].mxu0
  %v663 = vpop.f32.mrb[0].mxu0
  %v664 = vadd.f32 0.0, %v663
  %v665 = vpop.f32.mrb[0].mxu0
  %666 = vmatprep.mubr.bf16.mxu0 0
  %667 = vmatmul.mubr.bf16.gmra.mrb[0].mxu0 %v377
  %v668 = vpop.f32.mrb[0].mxu0
  %v669 = vadd.f32 0.0, %v668
  %v670 = vpop.f32.mrb[0].mxu0
  %v671 = vpop.f32.mrb[0].mxu0
  %v672 = vadd.f32 0.0, %v671
  %v673 = vpop.f32.mrb[0].mxu0
  %674 = vmatprep.mubr.bf16.mxu0 0
  %675 = vmatmul.mubr.bf16.gmra.mrb[0].mxu0 %v378
  %v676 = vpop.f32.mrb[0].mxu0
  %v677 = vadd.f32 0.0, %v676
  %v678 = vpop.f32.mrb[0].mxu0
  %v679 = vpop.f32.mrb[0].mxu0
  %v680 = vadd.f32 0.0, %v679
  %v681 = vpop.f32.mrb[0].mxu0
  %682 = vmatprep.mubr.bf16.mxu0 0
  %683 = vmatmul.mubr.bf16.gmra.mrb[0].mxu0 %v379
  %v684 = vpop.f32.mrb[0].mxu0
  %v685 = vadd.f32 0.0, %v684
  %v686 = vpop.f32.mrb[0].mxu0
  %v687 = vpop.f32.mrb[0].mxu0
  %v688 = vadd.f32 0.0, %v687
  %v689 = vpop.f32.mrb[0].mxu0
  %690 = vmatprep.mubr.bf16.mxu0 0
  %691 = vmatmul.mubr.bf16.gmra.mrb[0].mxu0 %v380
  %v692 = vpop.f32.mrb[0].mxu0
  %v693 = vadd.f32 0.0, %v692
  %v694 = vpop.f32.mrb[0].mxu0
  %v695 = vpop.f32.mrb[0].mxu0
  %v696 = vadd.f32 0.0, %v695
  %v697 = vpop.f32.mrb[0].mxu0
  %698 = vmatprep.mubr.bf16.mxu0 0
  %699 = vmatmul.mubr.bf16.gmra.mrb[0].mxu0 %v381
  %v700 = vpop.f32.mrb[0].mxu0
  %v701 = vadd.f32 0.0, %v700
  %v702 = vpop.f32.mrb[0].mxu0
  %v703 = vpop.f32.mrb[0].mxu0
  %v704 = vadd.f32 0.0, %v703
  %v705 = vpop.f32.mrb[0].mxu0
  %706 = vmatprep.mubr.bf16.mxu0 0
  %707 = vmatmul.mubr.bf16.gmra.mrb[0].mxu0 %v382
  %v708 = vpop.f32.mrb[0].mxu0
  %v709 = vadd.f32 0.0, %v708
  %v710 = vpop.f32.mrb[0].mxu0
  %v711 = vpop.f32.mrb[0].mxu0
  %v712 = vadd.f32 0.0, %v711
  %v713 = vpop.f32.mrb[0].mxu0
  %714 = vmatprep.mubr.bf16.mxu0 0
  %715 = vmatmul.mubr.bf16.gmra.mrb[0].mxu0 %v383
  %v716 = vpop.f32.mrb[0].mxu0
  %v717 = vadd.f32 0.0, %v716
  %v718 = vpop.f32.mrb[0].mxu0
  %v719 = vpop.f32.mrb[0].mxu0
  %v720 = vadd.f32 0.0, %v719
  %v721 = vpop.f32.mrb[0].mxu0
  %722 = vmatprep.mubr.bf16.mxu0 0
  %723 = vmatmul.mubr.bf16.gmra.mrb[0].mxu0 %v384
  %v724 = vpop.f32.mrb[0].mxu0
  %v725 = vadd.f32 0.0, %v724
  %v726 = vpop.f32.mrb[0].mxu0
  %v727 = vpop.f32.mrb[0].mxu0
  %v728 = vadd.f32 0.0, %v727
  %v729 = vpop.f32.mrb[0].mxu0
  %730 = vmatprep.mubr.bf16.mxu0 0
  %731 = vmatmul.mubr.bf16.gmra.mrb[0].mxu0 %v385
  %v732 = vpop.f32.mrb[0].mxu0
  %v733 = vadd.f32 0.0, %v732
  %v734 = vpop.f32.mrb[0].mxu0
  %v735 = vpop.f32.mrb[0].mxu0
  %v736 = vadd.f32 0.0, %v735
  %v737 = vpop.f32.mrb[0].mxu0
  %738 = vdwg.mxu0
  %v739 = vpack.c.bf16 %v488, %v485
  %v740 = vpack.c.bf16 %v496, %v493
  %v741 = vpack.c.bf16 %v504, %v501
  %v742 = vpack.c.bf16 %v512, %v509
  %v743 = vpack.c.bf16 %v520, %v517
  %v744 = vpack.c.bf16 %v528, %v525
  %v745 = vpack.c.bf16 %v536, %v533
  %v746 = vpack.c.bf16 %v544, %v541
  %v747 = vpack.c.bf16 %v552, %v549
  %v748 = vpack.c.bf16 %v560, %v557
  %v749 = vpack.c.bf16 %v568, %v565
  %v750 = vpack.c.bf16 %v576, %v573
  %v751 = vpack.c.bf16 %v584, %v581
  %v752 = vpack.c.bf16 %v592, %v589
  %v753 = vpack.c.bf16 %v600, %v597
  %v754 = vpack.c.bf16 %v608, %v605
  %v755 = vpack.c.bf16 %v616, %v613
  %v756 = vpack.c.bf16 %v624, %v621
  %v757 = vpack.c.bf16 %v632, %v629
  %v758 = vpack.c.bf16 %v640, %v637
  %v759 = vpack.c.bf16 %v648, %v645
  %v760 = vpack.c.bf16 %v656, %v653
  %v761 = vpack.c.bf16 %v664, %v661
  %v762 = vpack.c.bf16 %v672, %v669
  %v763 = vpack.c.bf16 %v680, %v677
  %v764 = vpack.c.bf16 %v688, %v685
  %v765 = vpack.c.bf16 %v696, %v693
  %v766 = vpack.c.bf16 %v704, %v701
  %v767 = vpack.c.bf16 %v712, %v709
  %v768 = vpack.c.bf16 %v720, %v717
  %v769 = vpack.c.bf16 %v728, %v725
  %v770 = vpack.c.bf16 %v736, %v733
  %v803 = vunpack.c.l.b16 %v739
  %v804 = vunpack.c.h.b16 %v739
  %v805 = vunpack.c.l.b16 %v740
  %v806 = vunpack.c.h.b16 %v740
  %v807 = vunpack.c.l.b16 %v741
  %v808 = vunpack.c.h.b16 %v741
  %v809 = vunpack.c.l.b16 %v742
  %v810 = vunpack.c.h.b16 %v742
  %v811 = vunpack.c.l.b16 %v743
  %v812 = vunpack.c.h.b16 %v743
  %v813 = vunpack.c.l.b16 %v744
  %v814 = vunpack.c.h.b16 %v744
  %v815 = vunpack.c.l.b16 %v745
  %v816 = vunpack.c.h.b16 %v745
  %v817 = vunpack.c.l.b16 %v746
  %v818 = vunpack.c.h.b16 %v746
  %v819 = vunpack.c.l.b16 %v747
  %v820 = vunpack.c.h.b16 %v747
  %v821 = vunpack.c.l.b16 %v748
  %v822 = vunpack.c.h.b16 %v748
  %v823 = vunpack.c.l.b16 %v749
  %v824 = vunpack.c.h.b16 %v749
  %v825 = vunpack.c.l.b16 %v750
  %v826 = vunpack.c.h.b16 %v750
  %v827 = vunpack.c.l.b16 %v751
  %v828 = vunpack.c.h.b16 %v751
  %v829 = vunpack.c.l.b16 %v752
  %v830 = vunpack.c.h.b16 %v752
  %v831 = vunpack.c.l.b16 %v753
  %v832 = vunpack.c.h.b16 %v753
  %v833 = vunpack.c.l.b16 %v754
  %v834 = vunpack.c.h.b16 %v754
  %v835 = vunpack.c.l.b16 %v755
  %v836 = vunpack.c.h.b16 %v755
  %v837 = vunpack.c.l.b16 %v756
  %v838 = vunpack.c.h.b16 %v756
  %v839 = vunpack.c.l.b16 %v757
  %v840 = vunpack.c.h.b16 %v757
  %v841 = vunpack.c.l.b16 %v758
  %v842 = vunpack.c.h.b16 %v758
  %v843 = vunpack.c.l.b16 %v759
  %v844 = vunpack.c.h.b16 %v759
  %v845 = vunpack.c.l.b16 %v760
  %v846 = vunpack.c.h.b16 %v760
  %v847 = vunpack.c.l.b16 %v761
  %v848 = vunpack.c.h.b16 %v761
  %v849 = vunpack.c.l.b16 %v762
  %v850 = vunpack.c.h.b16 %v762
  %v851 = vunpack.c.l.b16 %v763
  %v852 = vunpack.c.h.b16 %v763
  %v853 = vunpack.c.l.b16 %v764
  %v854 = vunpack.c.h.b16 %v764
  %v855 = vunpack.c.l.b16 %v765
  %v856 = vunpack.c.h.b16 %v765
  %v857 = vunpack.c.l.b16 %v766
  %v858 = vunpack.c.h.b16 %v766
  %v859 = vunpack.c.l.b16 %v767
  %v860 = vunpack.c.h.b16 %v767
  %v861 = vunpack.c.l.b16 %v768
  %v862 = vunpack.c.h.b16 %v768
  %v863 = vunpack.c.l.b16 %v769
  %v864 = vunpack.c.h.b16 %v769
  %v865 = vunpack.c.l.b16 %v770
  %v866 = vunpack.c.h.b16 %v770
  %v867 = vpack.c.b16 %v803, %v803
  %v868 = vpack.c.b16 %v804, %v804
  %v869 = vpack.c.b16 %v805, %v805
  %v870 = vpack.c.b16 %v806, %v806
  %v871 = vpack.c.b16 %v807, %v807
  %v872 = vpack.c.b16 %v808, %v808
  %v873 = vpack.c.b16 %v809, %v809
  %v874 = vpack.c.b16 %v810, %v810
  %v875 = vpack.c.b16 %v811, %v811
  %v876 = vpack.c.b16 %v812, %v812
  %v877 = vpack.c.b16 %v813, %v813
  %v878 = vpack.c.b16 %v814, %v814
  %v879 = vpack.c.b16 %v815, %v815
  %v880 = vpack.c.b16 %v816, %v816
  %v881 = vpack.c.b16 %v817, %v817
  %v882 = vpack.c.b16 %v818, %v818
  %v883 = vpack.c.b16 %v819, %v819
  %v884 = vpack.c.b16 %v820, %v820
  %v885 = vpack.c.b16 %v821, %v821
  %v886 = vpack.c.b16 %v822, %v822
  %v887 = vpack.c.b16 %v823, %v823
  %v888 = vpack.c.b16 %v824, %v824
  %v889 = vpack.c.b16 %v825, %v825
  %v890 = vpack.c.b16 %v826, %v826
  %v891 = vpack.c.b16 %v827, %v827
  %v892 = vpack.c.b16 %v828, %v828
  %v893 = vpack.c.b16 %v829, %v829
  %v894 = vpack.c.b16 %v830, %v830
  %v895 = vpack.c.b16 %v831, %v831
  %v896 = vpack.c.b16 %v832, %v832
  %v897 = vpack.c.b16 %v833, %v833
  %v898 = vpack.c.b16 %v834, %v834
  %v899 = vpack.c.b16 %v835, %v835
  %v900 = vpack.c.b16 %v836, %v836
  %v901 = vpack.c.b16 %v837, %v837
  %v902 = vpack.c.b16 %v838, %v838
  %v903 = vpack.c.b16 %v839, %v839
  %v904 = vpack.c.b16 %v840, %v840
  %v905 = vpack.c.b16 %v841, %v841
  %v906 = vpack.c.b16 %v842, %v842
  %v907 = vpack.c.b16 %v843, %v843
  %v908 = vpack.c.b16 %v844, %v844
  %v909 = vpack.c.b16 %v845, %v845
  %v910 = vpack.c.b16 %v846, %v846
  %v911 = vpack.c.b16 %v847, %v847
  %v912 = vpack.c.b16 %v848, %v848
  %v913 = vpack.c.b16 %v849, %v849
  %v914 = vpack.c.b16 %v850, %v850
  %v915 = vpack.c.b16 %v851, %v851
  %v916 = vpack.c.b16 %v852, %v852
  %v917 = vpack.c.b16 %v853, %v853
  %v918 = vpack.c.b16 %v854, %v854
  %v919 = vpack.c.b16 %v855, %v855
  %v920 = vpack.c.b16 %v856, %v856
  %v921 = vpack.c.b16 %v857, %v857
  %v922 = vpack.c.b16 %v858, %v858
  %v923 = vpack.c.b16 %v859, %v859
  %v924 = vpack.c.b16 %v860, %v860
  %v925 = vpack.c.b16 %v861, %v861
  %v926 = vpack.c.b16 %v862, %v862
  %v927 = vpack.c.b16 %v863, %v863
  %v928 = vpack.c.b16 %v864, %v864
  %v929 = vpack.c.b16 %v865, %v865
  %v930 = vpack.c.b16 %v866, %v866
  %vm995 = vcmask 257024
  %996 = vst.msk [vmem:[%s4] sm:$0xf] %vm995, %v867
  %997 = vst.msk [vmem:[%s4 + $0x4] sm:$0xf] %vm995, %v868
  %998 = vst.msk [vmem:[%s4 + $0x8] sm:$0xf] %vm995, %v869
  %999 = vst.msk [vmem:[%s4 + $0xc] sm:$0xf] %vm995, %v870
  %1000 = vst.msk [vmem:[%s4 + $0x10] sm:$0xf] %vm995, %v871
  %1001 = vst.msk [vmem:[%s4 + $0x14] sm:$0xf] %vm995, %v872
  %1002 = vst.msk [vmem:[%s4 + $0x18] sm:$0xf] %vm995, %v873
  %1003 = vst.msk [vmem:[%s4 + $0x1c] sm:$0xf] %vm995, %v874
  %1004 = vst.msk [vmem:[%s4 + $0x20] sm:$0xf] %vm995, %v875
  %1005 = vst.msk [vmem:[%s4 + $0x24] sm:$0xf] %vm995, %v876
  %1006 = vst.msk [vmem:[%s4 + $0x28] sm:$0xf] %vm995, %v877
  %1007 = vst.msk [vmem:[%s4 + $0x2c] sm:$0xf] %vm995, %v878
  %1008 = vst.msk [vmem:[%s4 + $0x30] sm:$0xf] %vm995, %v879
  %1009 = vst.msk [vmem:[%s4 + $0x34] sm:$0xf] %vm995, %v880
  %1010 = vst.msk [vmem:[%s4 + $0x38] sm:$0xf] %vm995, %v881
  %1011 = vst.msk [vmem:[%s4 + $0x3c] sm:$0xf] %vm995, %v882
  %1012 = vst.msk [vmem:[%s4 + $0x40] sm:$0xf] %vm995, %v883
  %1013 = vst.msk [vmem:[%s4 + $0x44] sm:$0xf] %vm995, %v884
  %1014 = vst.msk [vmem:[%s4 + $0x48] sm:$0xf] %vm995, %v885
  %1015 = vst.msk [vmem:[%s4 + $0x4c] sm:$0xf] %vm995, %v886
  %1016 = vst.msk [vmem:[%s4 + $0x50] sm:$0xf] %vm995, %v887
  %1017 = vst.msk [vmem:[%s4 + $0x54] sm:$0xf] %vm995, %v888
  %1018 = vst.msk [vmem:[%s4 + $0x58] sm:$0xf] %vm995, %v889
  %1019 = vst.msk [vmem:[%s4 + $0x5c] sm:$0xf] %vm995, %v890
  %1020 = vst.msk [vmem:[%s4 + $0x60] sm:$0xf] %vm995, %v891
  %1021 = vst.msk [vmem:[%s4 + $0x64] sm:$0xf] %vm995, %v892
  %1022 = vst.msk [vmem:[%s4 + $0x68] sm:$0xf] %vm995, %v893
  %1023 = vst.msk [vmem:[%s4 + $0x6c] sm:$0xf] %vm995, %v894
  %1024 = vst.msk [vmem:[%s4 + $0x70] sm:$0xf] %vm995, %v895
  %1025 = vst.msk [vmem:[%s4 + $0x74] sm:$0xf] %vm995, %v896
  %1026 = vst.msk [vmem:[%s4 + $0x78] sm:$0xf] %vm995, %v897
  %1027 = vst.msk [vmem:[%s4 + $0x7c] sm:$0xf] %vm995, %v898
  %1028 = vst.msk [vmem:[%s4 + $0x80] sm:$0xf] %vm995, %v899
  %1029 = vst.msk [vmem:[%s4 + $0x84] sm:$0xf] %vm995, %v900
  %1030 = vst.msk [vmem:[%s4 + $0x88] sm:$0xf] %vm995, %v901
  %1031 = vst.msk [vmem:[%s4 + $0x8c] sm:$0xf] %vm995, %v902
  %1032 = vst.msk [vmem:[%s4 + $0x90] sm:$0xf] %vm995, %v903
  %1033 = vst.msk [vmem:[%s4 + $0x94] sm:$0xf] %vm995, %v904
  %1034 = vst.msk [vmem:[%s4 + $0x98] sm:$0xf] %vm995, %v905
  %1035 = vst.msk [vmem:[%s4 + $0x9c] sm:$0xf] %vm995, %v906
  %1036 = vst.msk [vmem:[%s4 + $0xa0] sm:$0xf] %vm995, %v907
  %1037 = vst.msk [vmem:[%s4 + $0xa4] sm:$0xf] %vm995, %v908
  %1038 = vst.msk [vmem:[%s4 + $0xa8] sm:$0xf] %vm995, %v909
  %1039 = vst.msk [vmem:[%s4 + $0xac] sm:$0xf] %vm995, %v910
  %1040 = vst.msk [vmem:[%s4 + $0xb0] sm:$0xf] %vm995, %v911
  %1041 = vst.msk [vmem:[%s4 + $0xb4] sm:$0xf] %vm995, %v912
  %1042 = vst.msk [vmem:[%s4 + $0xb8] sm:$0xf] %vm995, %v913
  %1043 = vst.msk [vmem:[%s4 + $0xbc] sm:$0xf] %vm995, %v914
  %1044 = vst.msk [vmem:[%s4 + $0xc0] sm:$0xf] %vm995, %v915
  %1045 = vst.msk [vmem:[%s4 + $0xc4] sm:$0xf] %vm995, %v916
  %1046 = vst.msk [vmem:[%s4 + $0xc8] sm:$0xf] %vm995, %v917
  %1047 = vst.msk [vmem:[%s4 + $0xcc] sm:$0xf] %vm995, %v918
  %1048 = vst.msk [vmem:[%s4 + $0xd0] sm:$0xf] %vm995, %v919
  %1049 = vst.msk [vmem:[%s4 + $0xd4] sm:$0xf] %vm995, %v920
  %1050 = vst.msk [vmem:[%s4 + $0xd8] sm:$0xf] %vm995, %v921
  %1051 = vst.msk [vmem:[%s4 + $0xdc] sm:$0xf] %vm995, %v922
  %1052 = vst.msk [vmem:[%s4 + $0xe0] sm:$0xf] %vm995, %v923
  %1053 = vst.msk [vmem:[%s4 + $0xe4] sm:$0xf] %vm995, %v924
  %1054 = vst.msk [vmem:[%s4 + $0xe8] sm:$0xf] %vm995, %v925
  %1055 = vst.msk [vmem:[%s4 + $0xec] sm:$0xf] %vm995, %v926
  %1056 = vst.msk [vmem:[%s4 + $0xf0] sm:$0xf] %vm995, %v927
  %1057 = vst.msk [vmem:[%s4 + $0xf4] sm:$0xf] %vm995, %v928
  %1058 = vst.msk [vmem:[%s4 + $0xf8] sm:$0xf] %vm995, %v929
  %1059 = vst.msk [vmem:[%s4 + $0xfc] sm:$0xf] %vm995, %v930
  %vm1060 = vcmask 261120
  %v1061 = vsel %vm1060, %v485, 0.0
  %v1062 = vsel %vm1060, %v488, 0.0
  %v1063 = vadd.f32 %v1061, %v1062
  %v1064 = vsel %vm1060, %v493, 0.0
  %v1065 = vadd.f32 %v1063, %v1064
  %v1066 = vsel %vm1060, %v496, 0.0
  %v1067 = vadd.f32 %v1065, %v1066
  %v1068 = vsel %vm1060, %v501, 0.0
  %v1069 = vadd.f32 %v1067, %v1068
  %v1070 = vsel %vm1060, %v504, 0.0
  %v1071 = vadd.f32 %v1069, %v1070
  %v1072 = vsel %vm1060, %v509, 0.0
  %v1073 = vadd.f32 %v1071, %v1072
  %v1074 = vsel %vm1060, %v512, 0.0
  %v1075 = vadd.f32 %v1073, %v1074
  %v1076 = vsel %vm1060, %v517, 0.0
  %v1077 = vadd.f32 %v1075, %v1076
  %v1078 = vsel %vm1060, %v520, 0.0
  %v1079 = vadd.f32 %v1077, %v1078
  %v1080 = vsel %vm1060, %v525, 0.0
  %v1081 = vadd.f32 %v1079, %v1080
  %v1082 = vsel %vm1060, %v528, 0.0
  %v1083 = vadd.f32 %v1081, %v1082
  %v1084 = vsel %vm1060, %v533, 0.0
  %v1085 = vadd.f32 %v1083, %v1084
  %v1086 = vsel %vm1060, %v536, 0.0
  %v1087 = vadd.f32 %v1085, %v1086
  %v1088 = vsel %vm1060, %v541, 0.0
  %v1089 = vadd.f32 %v1087, %v1088
  %v1090 = vsel %vm1060, %v544, 0.0
  %v1091 = vadd.f32 %v1089, %v1090
  %v1092 = vsel %vm1060, %v549, 0.0
  %v1093 = vadd.f32 %v1091, %v1092
  %v1094 = vsel %vm1060, %v552, 0.0
  %v1095 = vadd.f32 %v1093, %v1094
  %v1096 = vsel %vm1060, %v557, 0.0
  %v1097 = vadd.f32 %v1095, %v1096
  %v1098 = vsel %vm1060, %v560, 0.0
  %v1099 = vadd.f32 %v1097, %v1098
  %v1100 = vsel %vm1060, %v565, 0.0
  %v1101 = vadd.f32 %v1099, %v1100
  %v1102 = vsel %vm1060, %v568, 0.0
  %v1103 = vadd.f32 %v1101, %v1102
  %v1104 = vsel %vm1060, %v573, 0.0
  %v1105 = vadd.f32 %v1103, %v1104
  %v1106 = vsel %vm1060, %v576, 0.0
  %v1107 = vadd.f32 %v1105, %v1106
  %v1108 = vsel %vm1060, %v581, 0.0
  %v1109 = vadd.f32 %v1107, %v1108
  %v1110 = vsel %vm1060, %v584, 0.0
  %v1111 = vadd.f32 %v1109, %v1110
  %v1112 = vsel %vm1060, %v589, 0.0
  %v1113 = vadd.f32 %v1111, %v1112
  %v1114 = vsel %vm1060, %v592, 0.0
  %v1115 = vadd.f32 %v1113, %v1114
  %v1116 = vsel %vm1060, %v597, 0.0
  %v1117 = vadd.f32 %v1115, %v1116
  %v1118 = vsel %vm1060, %v600, 0.0
  %v1119 = vadd.f32 %v1117, %v1118
  %v1120 = vsel %vm1060, %v605, 0.0
  %v1121 = vadd.f32 %v1119, %v1120
  %v1122 = vsel %vm1060, %v608, 0.0
  %v1123 = vadd.f32 %v1121, %v1122
  %v1124 = vsel %vm1060, %v613, 0.0
  %v1125 = vadd.f32 %v1123, %v1124
  %v1126 = vsel %vm1060, %v616, 0.0
  %v1127 = vadd.f32 %v1125, %v1126
  %v1128 = vsel %vm1060, %v621, 0.0
  %v1129 = vadd.f32 %v1127, %v1128
  %v1130 = vsel %vm1060, %v624, 0.0
  %v1131 = vadd.f32 %v1129, %v1130
  %v1132 = vsel %vm1060, %v629, 0.0
  %v1133 = vadd.f32 %v1131, %v1132
  %v1134 = vsel %vm1060, %v632, 0.0
  %v1135 = vadd.f32 %v1133, %v1134
  %v1136 = vsel %vm1060, %v637, 0.0
  %v1137 = vadd.f32 %v1135, %v1136
  %v1138 = vsel %vm1060, %v640, 0.0
  %v1139 = vadd.f32 %v1137, %v1138
  %v1140 = vsel %vm1060, %v645, 0.0
  %v1141 = vadd.f32 %v1139, %v1140
  %v1142 = vsel %vm1060, %v648, 0.0
  %v1143 = vadd.f32 %v1141, %v1142
  %v1144 = vsel %vm1060, %v653, 0.0
  %v1145 = vadd.f32 %v1143, %v1144
  %v1146 = vsel %vm1060, %v656, 0.0
  %v1147 = vadd.f32 %v1145, %v1146
  %v1148 = vsel %vm1060, %v661, 0.0
  %v1149 = vadd.f32 %v1147, %v1148
  %v1150 = vsel %vm1060, %v664, 0.0
  %v1151 = vadd.f32 %v1149, %v1150
  %v1152 = vsel %vm1060, %v669, 0.0
  %v1153 = vadd.f32 %v1151, %v1152
  %v1154 = vsel %vm1060, %v672, 0.0
  %v1155 = vadd.f32 %v1153, %v1154
  %v1156 = vsel %vm1060, %v677, 0.0
  %v1157 = vadd.f32 %v1155, %v1156
  %v1158 = vsel %vm1060, %v680, 0.0
  %v1159 = vadd.f32 %v1157, %v1158
  %v1160 = vsel %vm1060, %v685, 0.0
  %v1161 = vadd.f32 %v1159, %v1160
  %v1162 = vsel %vm1060, %v688, 0.0
  %v1163 = vadd.f32 %v1161, %v1162
  %v1164 = vsel %vm1060, %v693, 0.0
  %v1165 = vadd.f32 %v1163, %v1164
  %v1166 = vsel %vm1060, %v696, 0.0
  %v1167 = vadd.f32 %v1165, %v1166
  %v1168 = vsel %vm1060, %v701, 0.0
  %v1169 = vadd.f32 %v1167, %v1168
  %v1170 = vsel %vm1060, %v704, 0.0
  %v1171 = vadd.f32 %v1169, %v1170
  %v1172 = vsel %vm1060, %v709, 0.0
  %v1173 = vadd.f32 %v1171, %v1172
  %v1174 = vsel %vm1060, %v712, 0.0
  %v1175 = vadd.f32 %v1173, %v1174
  %v1176 = vsel %vm1060, %v717, 0.0
  %v1177 = vadd.f32 %v1175, %v1176
  %v1178 = vsel %vm1060, %v720, 0.0
  %v1179 = vadd.f32 %v1177, %v1178
  %v1180 = vsel %vm1060, %v725, 0.0
  %v1181 = vadd.f32 %v1179, %v1180
  %v1182 = vsel %vm1060, %v728, 0.0
  %v1183 = vadd.f32 %v1181, %v1182
  %v1184 = vsel %vm1060, %v733, 0.0
  %v1185 = vadd.f32 %v1183, %v1184
  %v1186 = vsel %vm1060, %v736, 0.0
  %v1187 = vadd.f32 %v1185, %v1186
  %v1188 = vrot.slane %v1187, 4
  %v1189 = vadd.f32 %v1187, %v1188
  %v1190 = vrot.slane %v1189, 2
  %v1191 = vadd.f32 %v1189, %v1190
  %v1192 = vrot.slane %v1191, 1
  %v1193 = vadd.f32 %v1191, %v1192
  %v1194 = vmul.f32 %v485, %v485
  %v1195 = vmul.f32 %v488, %v488
  %v1196 = vmul.f32 %v493, %v493
  %v1197 = vmul.f32 %v496, %v496
  %v1198 = vmul.f32 %v501, %v501
  %v1199 = vmul.f32 %v504, %v504
  %v1200 = vmul.f32 %v509, %v509
  %v1201 = vmul.f32 %v512, %v512
  %v1202 = vmul.f32 %v517, %v517
  %v1203 = vmul.f32 %v520, %v520
  %v1204 = vmul.f32 %v525, %v525
  %v1205 = vmul.f32 %v528, %v528
  %v1206 = vmul.f32 %v533, %v533
  %v1207 = vmul.f32 %v536, %v536
  %v1208 = vmul.f32 %v541, %v541
  %v1209 = vmul.f32 %v544, %v544
  %v1210 = vmul.f32 %v549, %v549
  %v1211 = vmul.f32 %v552, %v552
  %v1212 = vmul.f32 %v557, %v557
  %v1213 = vmul.f32 %v560, %v560
  %v1214 = vmul.f32 %v565, %v565
  %v1215 = vmul.f32 %v568, %v568
  %v1216 = vmul.f32 %v573, %v573
  %v1217 = vmul.f32 %v576, %v576
  %v1218 = vmul.f32 %v581, %v581
  %v1219 = vmul.f32 %v584, %v584
  %v1220 = vmul.f32 %v589, %v589
  %v1221 = vmul.f32 %v592, %v592
  %v1222 = vmul.f32 %v597, %v597
  %v1223 = vmul.f32 %v600, %v600
  %v1224 = vmul.f32 %v605, %v605
  %v1225 = vmul.f32 %v608, %v608
  %v1226 = vmul.f32 %v613, %v613
  %v1227 = vmul.f32 %v616, %v616
  %v1228 = vmul.f32 %v621, %v621
  %v1229 = vmul.f32 %v624, %v624
  %v1230 = vmul.f32 %v629, %v629
  %v1231 = vmul.f32 %v632, %v632
  %v1232 = vmul.f32 %v637, %v637
  %v1233 = vmul.f32 %v640, %v640
  %v1234 = vmul.f32 %v645, %v645
  %v1235 = vmul.f32 %v648, %v648
  %v1236 = vmul.f32 %v653, %v653
  %v1237 = vmul.f32 %v656, %v656
  %v1238 = vmul.f32 %v661, %v661
  %v1239 = vmul.f32 %v664, %v664
  %v1240 = vmul.f32 %v669, %v669
  %v1241 = vmul.f32 %v672, %v672
  %v1242 = vmul.f32 %v677, %v677
  %v1243 = vmul.f32 %v680, %v680
  %v1244 = vmul.f32 %v685, %v685
  %v1245 = vmul.f32 %v688, %v688
  %v1246 = vmul.f32 %v693, %v693
  %v1247 = vmul.f32 %v696, %v696
  %v1248 = vmul.f32 %v701, %v701
  %v1249 = vmul.f32 %v704, %v704
  %v1250 = vmul.f32 %v709, %v709
  %v1251 = vmul.f32 %v712, %v712
  %v1252 = vmul.f32 %v717, %v717
  %v1253 = vmul.f32 %v720, %v720
  %v1254 = vmul.f32 %v725, %v725
  %v1255 = vmul.f32 %v728, %v728
  %v1256 = vmul.f32 %v733, %v733
  %v1257 = vmul.f32 %v736, %v736
  %v1258 = vsel %vm1060, %v1194, 0.0
  %v1259 = vsel %vm1060, %v1195, 0.0
  %v1260 = vadd.f32 %v1258, %v1259
  %v1261 = vsel %vm1060, %v1196, 0.0
  %v1262 = vadd.f32 %v1260, %v1261
  %v1263 = vsel %vm1060, %v1197, 0.0
  %v1264 = vadd.f32 %v1262, %v1263
  %v1265 = vsel %vm1060, %v1198, 0.0
  %v1266 = vadd.f32 %v1264, %v1265
  %v1267 = vsel %vm1060, %v1199, 0.0
  %v1268 = vadd.f32 %v1266, %v1267
  %v1269 = vsel %vm1060, %v1200, 0.0
  %v1270 = vadd.f32 %v1268, %v1269
  %v1271 = vsel %vm1060, %v1201, 0.0
  %v1272 = vadd.f32 %v1270, %v1271
  %v1273 = vsel %vm1060, %v1202, 0.0
  %v1274 = vadd.f32 %v1272, %v1273
  %v1275 = vsel %vm1060, %v1203, 0.0
  %v1276 = vadd.f32 %v1274, %v1275
  %v1277 = vsel %vm1060, %v1204, 0.0
  %v1278 = vadd.f32 %v1276, %v1277
  %v1279 = vsel %vm1060, %v1205, 0.0
  %v1280 = vadd.f32 %v1278, %v1279
  %v1281 = vsel %vm1060, %v1206, 0.0
  %v1282 = vadd.f32 %v1280, %v1281
  %v1283 = vsel %vm1060, %v1207, 0.0
  %v1284 = vadd.f32 %v1282, %v1283
  %v1285 = vsel %vm1060, %v1208, 0.0
  %v1286 = vadd.f32 %v1284, %v1285
  %v1287 = vsel %vm1060, %v1209, 0.0
  %v1288 = vadd.f32 %v1286, %v1287
  %v1289 = vsel %vm1060, %v1210, 0.0
  %v1290 = vadd.f32 %v1288, %v1289
  %v1291 = vsel %vm1060, %v1211, 0.0
  %v1292 = vadd.f32 %v1290, %v1291
  %v1293 = vsel %vm1060, %v1212, 0.0
  %v1294 = vadd.f32 %v1292, %v1293
  %v1295 = vsel %vm1060, %v1213, 0.0
  %v1296 = vadd.f32 %v1294, %v1295
  %v1297 = vsel %vm1060, %v1214, 0.0
  %v1298 = vadd.f32 %v1296, %v1297
  %v1299 = vsel %vm1060, %v1215, 0.0
  %v1300 = vadd.f32 %v1298, %v1299
  %v1301 = vsel %vm1060, %v1216, 0.0
  %v1302 = vadd.f32 %v1300, %v1301
  %v1303 = vsel %vm1060, %v1217, 0.0
  %v1304 = vadd.f32 %v1302, %v1303
  %v1305 = vsel %vm1060, %v1218, 0.0
  %v1306 = vadd.f32 %v1304, %v1305
  %v1307 = vsel %vm1060, %v1219, 0.0
  %v1308 = vadd.f32 %v1306, %v1307
  %v1309 = vsel %vm1060, %v1220, 0.0
  %v1310 = vadd.f32 %v1308, %v1309
  %v1311 = vsel %vm1060, %v1221, 0.0
  %v1312 = vadd.f32 %v1310, %v1311
  %v1313 = vsel %vm1060, %v1222, 0.0
  %v1314 = vadd.f32 %v1312, %v1313
  %v1315 = vsel %vm1060, %v1223, 0.0
  %v1316 = vadd.f32 %v1314, %v1315
  %v1317 = vsel %vm1060, %v1224, 0.0
  %v1318 = vadd.f32 %v1316, %v1317
  %v1319 = vsel %vm1060, %v1225, 0.0
  %v1320 = vadd.f32 %v1318, %v1319
  %v1321 = vsel %vm1060, %v1226, 0.0
  %v1322 = vadd.f32 %v1320, %v1321
  %v1323 = vsel %vm1060, %v1227, 0.0
  %v1324 = vadd.f32 %v1322, %v1323
  %v1325 = vsel %vm1060, %v1228, 0.0
  %v1326 = vadd.f32 %v1324, %v1325
  %v1327 = vsel %vm1060, %v1229, 0.0
  %v1328 = vadd.f32 %v1326, %v1327
  %v1329 = vsel %vm1060, %v1230, 0.0
  %v1330 = vadd.f32 %v1328, %v1329
  %v1331 = vsel %vm1060, %v1231, 0.0
  %v1332 = vadd.f32 %v1330, %v1331
  %v1333 = vsel %vm1060, %v1232, 0.0
  %v1334 = vadd.f32 %v1332, %v1333
  %v1335 = vsel %vm1060, %v1233, 0.0
  %v1336 = vadd.f32 %v1334, %v1335
  %v1337 = vsel %vm1060, %v1234, 0.0
  %v1338 = vadd.f32 %v1336, %v1337
  %v1339 = vsel %vm1060, %v1235, 0.0
  %v1340 = vadd.f32 %v1338, %v1339
  %v1341 = vsel %vm1060, %v1236, 0.0
  %v1342 = vadd.f32 %v1340, %v1341
  %v1343 = vsel %vm1060, %v1237, 0.0
  %v1344 = vadd.f32 %v1342, %v1343
  %v1345 = vsel %vm1060, %v1238, 0.0
  %v1346 = vadd.f32 %v1344, %v1345
  %v1347 = vsel %vm1060, %v1239, 0.0
  %v1348 = vadd.f32 %v1346, %v1347
  %v1349 = vsel %vm1060, %v1240, 0.0
  %v1350 = vadd.f32 %v1348, %v1349
  %v1351 = vsel %vm1060, %v1241, 0.0
  %v1352 = vadd.f32 %v1350, %v1351
  %v1353 = vsel %vm1060, %v1242, 0.0
  %v1354 = vadd.f32 %v1352, %v1353
  %v1355 = vsel %vm1060, %v1243, 0.0
  %v1356 = vadd.f32 %v1354, %v1355
  %v1357 = vsel %vm1060, %v1244, 0.0
  %v1358 = vadd.f32 %v1356, %v1357
  %v1359 = vsel %vm1060, %v1245, 0.0
  %v1360 = vadd.f32 %v1358, %v1359
  %v1361 = vsel %vm1060, %v1246, 0.0
  %v1362 = vadd.f32 %v1360, %v1361
  %v1363 = vsel %vm1060, %v1247, 0.0
  %v1364 = vadd.f32 %v1362, %v1363
  %v1365 = vsel %vm1060, %v1248, 0.0
  %v1366 = vadd.f32 %v1364, %v1365
  %v1367 = vsel %vm1060, %v1249, 0.0
  %v1368 = vadd.f32 %v1366, %v1367
  %v1369 = vsel %vm1060, %v1250, 0.0
  %v1370 = vadd.f32 %v1368, %v1369
  %v1371 = vsel %vm1060, %v1251, 0.0
  %v1372 = vadd.f32 %v1370, %v1371
  %v1373 = vsel %vm1060, %v1252, 0.0
  %v1374 = vadd.f32 %v1372, %v1373
  %v1375 = vsel %vm1060, %v1253, 0.0
  %v1376 = vadd.f32 %v1374, %v1375
  %v1377 = vsel %vm1060, %v1254, 0.0
  %v1378 = vadd.f32 %v1376, %v1377
  %v1379 = vsel %vm1060, %v1255, 0.0
  %v1380 = vadd.f32 %v1378, %v1379
  %v1381 = vsel %vm1060, %v1256, 0.0
  %v1382 = vadd.f32 %v1380, %v1381
  %v1383 = vsel %vm1060, %v1257, 0.0
  %v1384 = vadd.f32 %v1382, %v1383
  %v1385 = vrot.slane %v1384, 4
  %v1386 = vadd.f32 %v1384, %v1385
  %v1387 = vrot.slane %v1386, 2
  %v1388 = vadd.f32 %v1386, %v1387
  %v1389 = vrot.slane %v1388, 1
  %v1390 = vadd.f32 %v1388, %v1389
  %vm1391 = vcmask 1040384
  %v1392 = vsel %vm1391, %v1193, %v1390
  %vm1393 = vcmask 254976
  %1394 = vst.msk [vmem:[%s5] sm:$0x3] %vm1393, %v1392
  // Predicated region
  $region18: #{bottleneck_forward_nhwc.6} parent=0 // pred_check
    _
  $region19: #{bottleneck_forward_nhwc.6} parent=0 // pred_check_branch
    %1396 = sbr.rel (0) target = $region21
  $region20: #{bottleneck_forward_nhwc.6} parent=0 // pred_region
    _
  $region21: #{bottleneck_forward_nhwc.6} parent=0 // pred_fallthru
    _
  // Predicated region
  $region22: #{bottleneck_forward_nhwc.6} parent=0 // pred_check
    _
  $region23: #{bottleneck_forward_nhwc.6} parent=0 // pred_check_branch
    %1398 = sbr.rel (0) target = $region25
  $region24: #{bottleneck_forward_nhwc.6} parent=0 // pred_region
    _
  $region25: #{bottleneck_forward_nhwc.6} parent=0 // pred_fallthru
    _
  // Predicated region
  $region26: #{bottleneck_forward_nhwc.6} parent=0 // pred_check
    _
  $region27: #{bottleneck_forward_nhwc.6} parent=0 // pred_check_branch
    %1400 = sbr.rel (0) target = $region29
  $region28: #{bottleneck_forward_nhwc.6} parent=0 // pred_region
    _
  $region29: #{bottleneck_forward_nhwc.6} parent=0 // pred_fallthru
    _
  // Predicated region
  $region30: #{bottleneck_forward_nhwc.6} parent=0 // pred_check
    _
  $region31: #{bottleneck_forward_nhwc.6} parent=0 // pred_check_branch
    %1402 = sbr.rel (0) target = $region33
  $region32: #{bottleneck_forward_nhwc.6} parent=0 // pred_region
    _
  $region33: #{bottleneck_forward_nhwc.6} parent=0 // pred_fallthru
    _

</llo_original>
